<compile_context>
chip_gen: v6e
topology: v6e:2x2x1
jax: 0.10.0
libtpu: 0.0.40
codegen_flags: <defaults>
</compile_context>

<pallas_src>
import functools
import math

import jax
import jax.numpy as jnp
from jax.experimental import pallas as pl
from jax.experimental.pallas import tpu as pltpu


_MXU_MIN_CIN = 64   # below this the MXU would run at tiny utilisation -> VPU FMA


# -----------------------------------------------------------------------------
# generation-aware VMEM budgets
# -----------------------------------------------------------------------------
def _device_budgets():
    """Return (scoped vmem_limit_bytes, per-step residency budget)."""
    cap = 128 * 1024 * 1024
    try:
        info = pltpu.get_tpu_info()
        cap = int(getattr(info, "vmem_capacity_bytes", cap)) or cap
    except Exception:
        pass
    if cap <= 64 * 1024 * 1024:
        # v7x-class: 64 MiB physical per TensorCore — leave compiler headroom.
        return 40 * 1024 * 1024, 24 * 1024 * 1024
    # v5e / v6e: 128 MiB physical — keep maps resident (single HBM read) longer.
    return 100 * 1024 * 1024, 72 * 1024 * 1024


# -----------------------------------------------------------------------------
# math helpers (shared by kernels and the pure-JAX reference)
# -----------------------------------------------------------------------------
def _gelu(x):
    # exact (erf-based) GELU, matching torch.nn.functional.gelu default
    return 0.5 * x * (1.0 + jax.lax.erf(x * 0.7071067811865476))


def _gaussian_kl(mu1, mu2, ls1, ls2):
    # gaussian_analytical_kl in the better-conditioned exp(2*(ls1-ls2)) form
    return -0.5 + ls2 - ls1 + 0.5 * (
        jnp.exp(2.0 * (ls1 - ls2)) + (mu1 - mu2) ** 2 * jnp.exp(-2.0 * ls2))


def _gaussian_kl_ref(mu1, mu2, ls1, ls2):
    # original VDVAE formula (algebraically identical; only used by the reference)
    return -0.5 + ls2 - ls1 + 0.5 * (jnp.exp(ls1) ** 2 + (mu1 - mu2) ** 2) / (jnp.exp(ls2) ** 2)


# -----------------------------------------------------------------------------
# weight packing: 13 (w, b) pairs -> ONE (Nw, Cin_max+1, Cout_max) f32 array
# -----------------------------------------------------------------------------
_ENC_IDX = (0, 1, 2, 3)
_PRI_IDX = (4, 5, 6, 7)
_ZP_IDX = 8
_RES_IDX = (9, 10, 11, 12)


def _pack_weights(params):
    layers = list(params["enc"]) + list(params["prior"]) + [params["zp"]] + list(params["res"])
    cin_max = max(w.shape[0] for w, _ in layers)
    cout_max = max(w.shape[1] for w, _ in layers)
    packed = jnp.zeros((len(layers), cin_max + 1, cout_max), jnp.float32)
    dims = []
    for i, (w, b) in enumerate(layers):
        cin, cout = w.shape
        packed = packed.at[i, :cin, :cout].set(w)
        packed = packed.at[i, cin, :cout].set(b[0])     # bias lives in row `cin`
        dims.append((cin, cout))
    return packed, tuple(dims)


def _unpack_layer(w_all, idx, dims):
    cin, cout = dims[idx]
    blk = w_all[idx]                                    # (cin_max+1, cout_max), static slice
    return blk[:cin, :cout], blk[cin:cin + 1, :cout]


# -----------------------------------------------------------------------------
# in-kernel 1x1 convolutions (channels-first)
# -----------------------------------------------------------------------------
def _vec_conv1x1(x, w, b):
    """x (Bt, Cin), w (Cin, Cout), b (1, Cout) -> (Bt, Cout)."""
    cin, cout = w.shape
    if cin >= _MXU_MIN_CIN:
        return jnp.dot(x, w, preferred_element_type=jnp.float32) + b
    acc = jnp.zeros((x.shape[0], cout), jnp.float32)
    for c in range(cin):
        acc = acc + x[:, c:c + 1] * w[c][None, :]
    return acc + b


def _map_conv1x1(x, w, b):
    """x (Bt, Cin, M), w (Cin, Cout), b (1, Cout) -> (Bt, Cout, M)."""
    cin, cout = w.shape
    if cin >= _MXU_MIN_CIN:
        out = jnp.einsum("bcm,co->bom", x, w, preferred_element_type=jnp.float32)
        return out + b[:, :, None]
    # TODO(synk): for small C these sublane broadcasts burn VALU slots; a
    # circulant/pltpu.roll (XLU) formulation would co-issue with the FMAs.
    acc = jnp.zeros((x.shape[0], cout, x.shape[2]), jnp.float32)
    for c in range(cin):
        acc = acc + x[:, c:c + 1, :] * w[c][None, :, None]
    return acc + b[:, :, None]


def _vec_block(x, w_all, dims, idxs):
    h = x
    for i in idxs:
        w, b = _unpack_layer(w_all, i, dims)
        h = _vec_conv1x1(_gelu(h), w, b)
    return h


def _res_block(xin, w_all, dims, idxs):
    h = xin
    for i in idxs:
        w, b = _unpack_layer(w_all, i, dims)
        h = _map_conv1x1(_gelu(h), w, b)
    return xin + h                                      # residual add


def _sample_and_kl(fvec, pvec, eps, w_all, dims, zd):
    """enc/prior stacks on pooled vectors, sample, analytical KLs, z_proj."""
    enc = _vec_block(fvec, w_all, dims, _ENC_IDX)
    pri = _vec_block(pvec, w_all, dims, _PRI_IDX)
    qm, qv = enc[:, :zd], enc[:, zd:2 * zd]
    pm, pv = pri[:, :zd], pri[:, zd:2 * zd]
    xpp = pri[:, 2 * zd:]
    z = jnp.exp(qv) * eps + qm                          # draw_gaussian_diag_samples
    zpw, zpb = _unpack_layer(w_all, _ZP_IDX, dims)
    xs = xpp + _vec_conv1x1(z, zpw, zpb)                # x + z_proj(z)
    kl = _gaussian_kl(qm, pm, qv, pv)
    klq = _gaussian_kl(qm, 0.0, qv, 0.0)                # kl_regularization(qm, qv)  ("prob")
    klp = _gaussian_kl(pm, 0.0, pv, 0.0)                # kl_regularization(pm, pv)  ("prior")
    small = jnp.concatenate([z, kl, klq, klp], axis=-1)  # one lane-dense row per batch elem
    return xs, small


# -----------------------------------------------------------------------------
# Kernel A: fused forward, gridded over batch (block (1, C, HW))
# -----------------------------------------------------------------------------
def _fused_kernel(full_ref, part_ref, eps_ref, w_ref, x_ref, small_ref, *, dims, zd):
    full = full_ref[...]                                # (1, C, HW), resident
    fvec = jnp.mean(full, axis=2)                       # global avg pool == lane reduce
    pvec = jnp.mean(part_ref[...], axis=2)
    eps = eps_ref[...][:, 0, :]                         # (1, zd)
    w_all = w_ref[...]

    xs, small = _sample_and_kl(fvec, pvec, eps, w_all, dims, zd)
    small_ref[...] = small[:, None, :]

    # nearest-upsample(1x1) + full_acts, then residual 4x 1x1-conv block
    xin = full + xs[:, :, None]
    x_ref[...] = _res_block(xin, w_all, dims, _RES_IDX)


# -----------------------------------------------------------------------------
# Kernel B1 (fallback): global-avg-pool tiled over (batch, HW) + vec/sample/KL
# -----------------------------------------------------------------------------
def _poolvec_kernel(full_ref, part_ref, eps_ref, w_ref,
                    xs_ref, small_ref, fsum_ref, psum_ref, *, dims, zd, hw):
    j = pl.program_id(1)

    @pl.when(j == 0)
    def _():
        fsum_ref[...] = jnp.zeros_like(fsum_ref)
        psum_ref[...] = jnp.zeros_like(psum_ref)

    fsum_ref[...] += jnp.sum(full_ref[...], axis=2)     # (1, C)
    psum_ref[...] += jnp.sum(part_ref[...], axis=2)

    @pl.when(j == pl.num_programs(1) - 1)
    def _():
        inv = 1.0 / hw                                  # true HW (zero padding is harmless)
        fvec = fsum_ref[...] * inv
        pvec = psum_ref[...] * inv
        eps = eps_ref[...][:, 0, :]
        xs, small = _sample_and_kl(fvec, pvec, eps, w_ref[...], dims, zd)
        xs_ref[...] = xs[:, None, :]
        small_ref[...] = small[:, None, :]


# -----------------------------------------------------------------------------
# Kernel B2 (fallback): x = upsample(x_small) + full_acts, residual block
# -----------------------------------------------------------------------------
def _resnet_kernel(full_ref, xs_ref, w_ref, out_ref, *, dims):
    xs = xs_ref[...][:, 0, :]                           # (1, C) pooled row for this batch
    xin = full_ref[...] + xs[:, :, None]                # (1, C, TM)
    out_ref[...] = _res_block(xin, w_ref[...], dims, _RES_IDX)


# -----------------------------------------------------------------------------
# tiling helper (fallback path) — block is (1, C, tm)
# -----------------------------------------------------------------------------
def _pick_tile(hw_pad, c, budget_bytes):
    """Largest multiple-of-128 divisor of hw_pad whose per-step footprint fits."""
    # per-HW-element f32 bytes for one (1, C, tm) step:
    #   double-buffered full-in + double-buffered out + ~4 live residual-block temps
    per_elem = 4 * (2 * c + 2 * c + 4 * c)
    fixed = 1 * 1024 * 1024                             # packed weights, scratch, small blocks
    cap = max(128, ((budget_bytes - fixed) // per_elem) // 128 * 128)
    tm = min(hw_pad, cap)
    while hw_pad % tm != 0:
        tm -= 128
    return tm


# -----------------------------------------------------------------------------
# Parameter construction (deterministic, synthetic)
# -----------------------------------------------------------------------------
def _conv1x1_params(key, cin, cout, zero=False, w_scale=1.0):
    if zero:  # zero_last: VDVAE zeroes weight (and bias) of c4
        return (jnp.zeros((cin, cout), jnp.float32), jnp.zeros((1, cout), jnp.float32))
    kw, kb = jax.random.split(key)
    bound = 1.0 / math.sqrt(cin)
    w = jax.random.uniform(kw, (cin, cout), jnp.float32, -bound, bound) * w_scale
    b = jax.random.uniform(kb, (1, cout), jnp.float32, -bound, bound)
    return w, b


def make_bottleneck_params(key, in_channels, out_channels, z_dim, n_blocks):
    keys = iter(jax.random.split(key, 16))

    # TODO(synk): BlockID's c2/c3 may be 3x3 convs (use_3x3=True) for enc/prior, but
    # they act on 1x1 pooled maps where only the center tap contributes -> realized as 1x1.
    def block(cin, cmid, cout_, zero_last=False, c4_scale=1.0):
        return [
            _conv1x1_params(next(keys), cin, cmid),
            _conv1x1_params(next(keys), cmid, cmid),
            _conv1x1_params(next(keys), cmid, cmid),
            _conv1x1_params(next(keys), cmid, cout_, zero=zero_last, w_scale=c4_scale),
        ]

    sc = math.sqrt(1.0 / n_blocks)
    return {
        "enc": block(in_channels, out_channels, 2 * z_dim),
        "prior": block(in_channels, out_channels, 2 * z_dim + out_channels, zero_last=True),
        "zp": _conv1x1_params(next(keys), z_dim, out_channels, w_scale=sc),
        "res": block(out_channels, out_channels, out_channels, c4_scale=sc),
    }


# -----------------------------------------------------------------------------
# Forward wrapper
# -----------------------------------------------------------------------------
def bottleneck_forward(full_acts, part_acts, params, eps, *, force_tiled=False):
    B, C, H, W = full_acts.shape
    HW = H * W
    zd = eps.shape[1]
    cout = params["zp"][0].shape[1]
    assert C == cout, "residual / interpolate-add requires in_channels == out_channels"

    # channels-first flattening is a pure reshape — no NCHW<->NHWC transposes anywhere
    full = full_acts.reshape(B, C, HW)
    part = part_acts.reshape(B, C, HW)
    eps3 = eps.reshape(B, 1, zd)

    packed_w, dims = _pack_weights(params)
    vmem_limit, residency_budget = _device_budgets()

    small_shape = jax.ShapeDtypeStruct((B, 1, 4 * zd), jnp.float32)

    # per-grid-step residency of the fused path (blocks are per-batch (1, C, HW)):
    # double-buffered full/part/out blocks + live temporaries of the unrolled res block
    fused_bytes = 4 * C * HW * 12 + 1 * 1024 * 1024

    if not force_tiled and fused_bytes <= residency_budget:
        # --- single fused kernel, batch-gridded: full/part read from HBM exactly once ---
        x_flat, small = pl.pallas_call(
            functools.partial(_fused_kernel, dims=dims, zd=zd),
            grid=(B,),
            in_specs=[pl.BlockSpec((1, C, HW), lambda b: (b, 0, 0)),
                      pl.BlockSpec((1, C, HW), lambda b: (b, 0, 0)),
                      pl.BlockSpec((1, 1, zd), lambda b: (b, 0, 0)),
                      pl.BlockSpec(packed_w.shape, lambda b: (0, 0, 0))],
            out_specs=(pl.BlockSpec((1, C, HW), lambda b: (b, 0, 0)),
                       pl.BlockSpec((1, 1, 4 * zd), lambda b: (b, 0, 0))),
            out_shape=(jax.ShapeDtypeStruct((B, C, HW), jnp.float32), small_shape),
            compiler_params=pltpu.CompilerParams(
                dimension_semantics=("parallel",),
                vmem_limit_bytes=vmem_limit),
        )(full, part, eps3, packed_w)
    else:
        # pad HW to a multiple of 128 so the fallback always tiles lane-densely
        hw_pad = ((HW + 127) // 128) * 128
        if hw_pad != HW:
            pad = [(0, 0), (0, 0), (0, hw_pad - HW)]
            full_p, part_p = jnp.pad(full, pad), jnp.pad(part, pad)
        else:
            full_p, part_p = full, part
        tm = _pick_tile(hw_pad, C, residency_budget)

        # --- (a) fused pool (HW-tiled reduction, batch-parallel) + vec/sample/KL ---
        xs_small, small = pl.pallas_call(
            functools.partial(_poolvec_kernel, dims=dims, zd=zd, hw=HW),
            grid=(B, hw_pad // tm),
            in_specs=[pl.BlockSpec((1, C, tm), lambda b, j: (b, 0, j)),
                      pl.BlockSpec((1, C, tm), lambda b, j: (b, 0, j)),
                      pl.BlockSpec((1, 1, zd), lambda b, j: (b, 0, 0)),
                      pl.BlockSpec(packed_w.shape, lambda b, j: (0, 0, 0))],
            out_specs=(pl.BlockSpec((1, 1, C), lambda b, j: (b, 0, 0)),
                       pl.BlockSpec((1, 1, 4 * zd), lambda b, j: (b, 0, 0))),
            out_shape=(jax.ShapeDtypeStruct((B, 1, C), jnp.float32), small_shape),
            scratch_shapes=[pltpu.VMEM((1, C), jnp.float32),
                            pltpu.VMEM((1, C), jnp.float32)],
            compiler_params=pltpu.CompilerParams(
                dimension_semantics=("parallel", "arbitrary"),
                vmem_limit_bytes=vmem_limit),
        )(full_p, part_p, eps3, packed_w)

        # --- (b) upsample-add + residual block on (1, C, tm) lane-dense tiles ---
        x_pad = pl.pallas_call(
            functools.partial(_resnet_kernel, dims=dims),
            grid=(B, hw_pad // tm),
            in_specs=[pl.BlockSpec((1, C, tm), lambda b, j: (b, 0, j)),
                      pl.BlockSpec((1, 1, C), lambda b, j: (b, 0, 0)),
                      pl.BlockSpec(packed_w.shape, lambda b, j: (0, 0, 0))],
            out_specs=pl.BlockSpec((1, C, tm), lambda b, j: (b, 0, j)),
            out_shape=jax.ShapeDtypeStruct((B, C, hw_pad), jnp.float32),
            compiler_params=pltpu.CompilerParams(
                dimension_semantics=("parallel", "parallel"),
                vmem_limit_bytes=vmem_limit),
        )(full_p, xs_small, packed_w)
        x_flat = x_pad[:, :, :HW]

    x = x_flat.reshape(B, C, H, W)
    sm = small[:, 0, :]
    z, kl = sm[:, :zd], sm[:, zd:2 * zd]
    klq, klp = sm[:, 2 * zd:3 * zd], sm[:, 3 * zd:]
    to4 = lambda v: v[:, :, None, None]
    # NOTE: PyTorch forward() unpacks sample()'s (kl_reg_prior, kl_reg_prob) into locals
    # named (kl_reg_prob, kl_reg_prior) — net effect: forward returns (z, x, kl, prior, prob).
    return to4(z), x, to4(kl), to4(klp), to4(klq)


# -----------------------------------------------------------------------------
# Pure-JAX reference (same math, independent formulation)
# -----------------------------------------------------------------------------
def reference_forward(full_acts, part_acts, params, eps):
    full_nhwc = jnp.transpose(full_acts, (0, 2, 3, 1))
    fvec = jnp.mean(full_nhwc, axis=(1, 2))
    pvec = jnp.mean(jnp.transpose(part_acts, (0, 2, 3, 1)), axis=(1, 2))

    def block4(x, wb):
        h = x
        for w, b in wb:
            h = _gelu(h) @ w + b
        return h

    enc = block4(fvec, params["enc"])
    pri = block4(pvec, params["prior"])
    zd = eps.shape[1]
    qm, qv = enc[:, :zd], enc[:, zd:2 * zd]
    pm, pv = pri[:, :zd], pri[:, zd:2 * zd]
    xpp = pri[:, 2 * zd:]
    z = jnp.exp(qv) * eps + qm
    zpw, zpb = params["zp"]
    xs = xpp + z @ zpw + zpb
    kl = _gaussian_kl_ref(qm, pm, qv, pv)
    kl_q = _gaussian_kl_ref(qm, jnp.zeros_like(qm), qv, jnp.zeros_like(qv))
    kl_p = _gaussian_kl_ref(pm, jnp.zeros_like(pm), pv, jnp.zeros_like(pv))

    xin = full_nhwc + xs[:, None, None, :]
    x = xin + block4(xin, params["res"])
    x = jnp.transpose(x, (0, 3, 1, 2))
    to4 = lambda v: v[:, :, None, None]
    return to4(z), x, to4(kl), to4(kl_p), to4(kl_q)


if __name__ == "__main__":
    B, C, W = 2, 8, 16            # in_channels == out_channels (required by the residual add)
    z_dim, n_blocks = 4, 4

    key = jax.random.PRNGKey(0)
    k_full, k_part, k_eps, k_par = jax.random.split(key, 4)
    full_acts = jax.random.normal(k_full, (B, C, W, W), jnp.float32)
    part_acts = jax.random.normal(k_part, (B, C, W, W), jnp.float32)
    eps = jax.random.normal(k_eps, (B, z_dim), jnp.float32)   # reparameterization noise
    params = make_bottleneck_params(k_par, C, C, z_dim, n_blocks)

    refs = reference_forward(full_acts, part_acts, params, eps)

    # exercise both the batch-gridded fused path and the tiled two-pass fallback path
    for force_tiled in (False, True):
        outs = jax.block_until_ready(
            bottleneck_forward(full_acts, part_acts, params, eps, force_tiled=force_tiled))
        for o, r in zip(outs, refs):
            assert o.shape == r.shape, (o.shape, r.shape)
            assert jnp.allclose(o, r, rtol=1e-3, atol=1e-3), f"mismatch (force_tiled={force_tiled})"

    print("KERNEL_OK")
</pallas_src>

<mosaic_0001>
module attributes {stable_mosaic.version = 11 : i64} {
  func.func @_fused_kernel(%arg0: i32, %arg1: memref<1x8x256xf32, #tpu.memory_space<vmem>>, %arg2: memref<1x8x256xf32, #tpu.memory_space<vmem>>, %arg3: memref<1x1x4xf32, #tpu.memory_space<vmem>>, %arg4: memref<13x9x16xf32, #tpu.memory_space<vmem>>, %arg5: memref<1x8x256xf32, #tpu.memory_space<vmem>>, %arg6: memref<1x1x16xf32, #tpu.memory_space<vmem>>) attributes {dimension_semantics = [#tpu.dimension_semantics<parallel>], iteration_bounds = array<i64: 2>, scalar_prefetch = 0 : i64, scratch_operands = 0 : i64, tpu.core_type = #tpu.core_type<tc>, window_params = [{transform_indices = @transform_0, window_bounds = array<i64: 1, 8, 256>}, {transform_indices = @transform_1, window_bounds = array<i64: 1, 8, 256>}, {transform_indices = @transform_2, window_bounds = array<i64: 1, 1, 4>}, {pipeline_mode = #tpu.pipeline_mode<synchronous>, transform_indices = @transform_3, window_bounds = array<i64: 13, 9, 16>}, {transform_indices = @transform_4, window_bounds = array<i64: 1, 8, 256>}, {transform_indices = @transform_5, window_bounds = array<i64: 1, 1, 16>}]} {
    %c0 = arith.constant 0 : index
    %c0_0 = arith.constant 0 : index
    %c0_1 = arith.constant 0 : index
    %0 = vector.load %arg1[%c0, %c0_0, %c0_1] : memref<1x8x256xf32, #tpu.memory_space<vmem>>, vector<1x8x256xf32>
    %cst = arith.constant dense<0.000000e+00> : vector<1x8xf32>
    %1 = vector.multi_reduction <add>, %0, %cst [2] : vector<1x8x256xf32> to vector<1x8xf32>
    %cst_2 = arith.constant 2.560000e+02 : f32
    %2 = vector.broadcast %cst_2 : f32 to vector<1x8xf32>
    %3 = arith.divf %1, %2 : vector<1x8xf32>
    %c0_3 = arith.constant 0 : index
    %c0_4 = arith.constant 0 : index
    %c0_5 = arith.constant 0 : index
    %4 = vector.load %arg2[%c0_3, %c0_4, %c0_5] : memref<1x8x256xf32, #tpu.memory_space<vmem>>, vector<1x8x256xf32>
    %cst_6 = arith.constant dense<0.000000e+00> : vector<1x8xf32>
    %5 = vector.multi_reduction <add>, %4, %cst_6 [2] : vector<1x8x256xf32> to vector<1x8xf32>
    %cst_7 = arith.constant 2.560000e+02 : f32
    %6 = vector.broadcast %cst_7 : f32 to vector<1x8xf32>
    %7 = arith.divf %5, %6 : vector<1x8xf32>
    %c0_8 = arith.constant 0 : index
    %c0_9 = arith.constant 0 : index
    %c0_10 = arith.constant 0 : index
    %8 = vector.load %arg3[%c0_8, %c0_9, %c0_10] : memref<1x1x4xf32, #tpu.memory_space<vmem>>, vector<1x1x4xf32>
    %9 = vector.shape_cast %8 : vector<1x1x4xf32> to vector<1x4xf32>
    %c0_11 = arith.constant 0 : index
    %c0_12 = arith.constant 0 : index
    %c0_13 = arith.constant 0 : index
    %10 = vector.load %arg4[%c0_11, %c0_12, %c0_13] : memref<13x9x16xf32, #tpu.memory_space<vmem>>, vector<13x9x16xf32>
    %11 = vector.extract_strided_slice %10 {offsets = [0, 0, 0], sizes = [1, 9, 16], strides = [1, 1, 1]} : vector<13x9x16xf32> to vector<1x9x16xf32>
    %12 = vector.shape_cast %11 : vector<1x9x16xf32> to vector<9x16xf32>
    %13 = vector.extract_strided_slice %12 {offsets = [0, 0], sizes = [8, 8], strides = [1, 1]} : vector<9x16xf32> to vector<8x8xf32>
    %14 = vector.extract_strided_slice %12 {offsets = [8, 0], sizes = [1, 8], strides = [1, 1]} : vector<9x16xf32> to vector<1x8xf32>
    %cst_14 = arith.constant 5.000000e-01 : f32
    %15 = vector.broadcast %cst_14 : f32 to vector<1x8xf32>
    %16 = arith.mulf %15, %3 : vector<1x8xf32>
    %cst_15 = arith.constant 0.707106769 : f32
    %17 = vector.broadcast %cst_15 : f32 to vector<1x8xf32>
    %18 = arith.mulf %3, %17 : vector<1x8xf32>
    %19 = math.erf %18 : vector<1x8xf32>
    %cst_16 = arith.constant 1.000000e+00 : f32
    %20 = vector.broadcast %cst_16 : f32 to vector<1x8xf32>
    %21 = arith.addf %20, %19 : vector<1x8xf32>
    %22 = arith.mulf %16, %21 : vector<1x8xf32>
    %cst_17 = arith.constant 0.000000e+00 : f32
    %23 = vector.broadcast %cst_17 : f32 to vector<1x8xf32>
    %24 = vector.extract_strided_slice %22 {offsets = [0, 0], sizes = [1, 1], strides = [1, 1]} : vector<1x8xf32> to vector<1x1xf32>
    %25 = vector.extract_strided_slice %13 {offsets = [0, 0], sizes = [1, 8], strides = [1, 1]} : vector<8x8xf32> to vector<1x8xf32>
    %26 = vector.shape_cast %25 : vector<1x8xf32> to vector<8xf32>
    %27 = vector.shape_cast %26 : vector<8xf32> to vector<1x8xf32>
    %28 = vector.broadcast %24 : vector<1x1xf32> to vector<1x8xf32>
    %29 = arith.mulf %28, %27 : vector<1x8xf32>
    %30 = arith.addf %23, %29 : vector<1x8xf32>
    %31 = vector.extract_strided_slice %22 {offsets = [0, 1], sizes = [1, 1], strides = [1, 1]} : vector<1x8xf32> to vector<1x1xf32>
    %32 = vector.extract_strided_slice %13 {offsets = [1, 0], sizes = [1, 8], strides = [1, 1]} : vector<8x8xf32> to vector<1x8xf32>
    %33 = vector.shape_cast %32 : vector<1x8xf32> to vector<8xf32>
    %34 = vector.shape_cast %33 : vector<8xf32> to vector<1x8xf32>
    %35 = vector.broadcast %31 : vector<1x1xf32> to vector<1x8xf32>
    %36 = arith.mulf %35, %34 : vector<1x8xf32>
    %37 = arith.addf %30, %36 : vector<1x8xf32>
    %38 = vector.extract_strided_slice %22 {offsets = [0, 2], sizes = [1, 1], strides = [1, 1]} : vector<1x8xf32> to vector<1x1xf32>
    %39 = vector.extract_strided_slice %13 {offsets = [2, 0], sizes = [1, 8], strides = [1, 1]} : vector<8x8xf32> to vector<1x8xf32>
    %40 = vector.shape_cast %39 : vector<1x8xf32> to vector<8xf32>
    %41 = vector.shape_cast %40 : vector<8xf32> to vector<1x8xf32>
    %42 = vector.broadcast %38 : vector<1x1xf32> to vector<1x8xf32>
    %43 = arith.mulf %42, %41 : vector<1x8xf32>
    %44 = arith.addf %37, %43 : vector<1x8xf32>
    %45 = vector.extract_strided_slice %22 {offsets = [0, 3], sizes = [1, 1], strides = [1, 1]} : vector<1x8xf32> to vector<1x1xf32>
    %46 = vector.extract_strided_slice %13 {offsets = [3, 0], sizes = [1, 8], strides = [1, 1]} : vector<8x8xf32> to vector<1x8xf32>
    %47 = vector.shape_cast %46 : vector<1x8xf32> to vector<8xf32>
    %48 = vector.shape_cast %47 : vector<8xf32> to vector<1x8xf32>
    %49 = vector.broadcast %45 : vector<1x1xf32> to vector<1x8xf32>
    %50 = arith.mulf %49, %48 : vector<1x8xf32>
    %51 = arith.addf %44, %50 : vector<1x8xf32>
    %52 = vector.extract_strided_slice %22 {offsets = [0, 4], sizes = [1, 1], strides = [1, 1]} : vector<1x8xf32> to vector<1x1xf32>
    %53 = vector.extract_strided_slice %13 {offsets = [4, 0], sizes = [1, 8], strides = [1, 1]} : vector<8x8xf32> to vector<1x8xf32>
    %54 = vector.shape_cast %53 : vector<1x8xf32> to vector<8xf32>
    %55 = vector.shape_cast %54 : vector<8xf32> to vector<1x8xf32>
    %56 = vector.broadcast %52 : vector<1x1xf32> to vector<1x8xf32>
    %57 = arith.mulf %56, %55 : vector<1x8xf32>
    %58 = arith.addf %51, %57 : vector<1x8xf32>
    %59 = vector.extract_strided_slice %22 {offsets = [0, 5], sizes = [1, 1], strides = [1, 1]} : vector<1x8xf32> to vector<1x1xf32>
    %60 = vector.extract_strided_slice %13 {offsets = [5, 0], sizes = [1, 8], strides = [1, 1]} : vector<8x8xf32> to vector<1x8xf32>
    %61 = vector.shape_cast %60 : vector<1x8xf32> to vector<8xf32>
    %62 = vector.shape_cast %61 : vector<8xf32> to vector<1x8xf32>
    %63 = vector.broadcast %59 : vector<1x1xf32> to vector<1x8xf32>
    %64 = arith.mulf %63, %62 : vector<1x8xf32>
    %65 = arith.addf %58, %64 : vector<1x8xf32>
    %66 = vector.extract_strided_slice %22 {offsets = [0, 6], sizes = [1, 1], strides = [1, 1]} : vector<1x8xf32> to vector<1x1xf32>
    %67 = vector.extract_strided_slice %13 {offsets = [6, 0], sizes = [1, 8], strides = [1, 1]} : vector<8x8xf32> to vector<1x8xf32>
    %68 = vector.shape_cast %67 : vector<1x8xf32> to vector<8xf32>
    %69 = vector.shape_cast %68 : vector<8xf32> to vector<1x8xf32>
    %70 = vector.broadcast %66 : vector<1x1xf32> to vector<1x8xf32>
    %71 = arith.mulf %70, %69 : vector<1x8xf32>
    %72 = arith.addf %65, %71 : vector<1x8xf32>
    %73 = vector.extract_strided_slice %22 {offsets = [0, 7], sizes = [1, 1], strides = [1, 1]} : vector<1x8xf32> to vector<1x1xf32>
    %74 = vector.extract_strided_slice %13 {offsets = [7, 0], sizes = [1, 8], strides = [1, 1]} : vector<8x8xf32> to vector<1x8xf32>
    %75 = vector.shape_cast %74 : vector<1x8xf32> to vector<8xf32>
    %76 = vector.shape_cast %75 : vector<8xf32> to vector<1x8xf32>
    %77 = vector.broadcast %73 : vector<1x1xf32> to vector<1x8xf32>
    %78 = arith.mulf %77, %76 : vector<1x8xf32>
    %79 = arith.addf %72, %78 : vector<1x8xf32>
    %80 = arith.addf %79, %14 : vector<1x8xf32>
    %81 = vector.extract_strided_slice %10 {offsets = [1, 0, 0], sizes = [1, 9, 16], strides = [1, 1, 1]} : vector<13x9x16xf32> to vector<1x9x16xf32>
    %82 = vector.shape_cast %81 : vector<1x9x16xf32> to vector<9x16xf32>
    %83 = vector.extract_strided_slice %82 {offsets = [0, 0], sizes = [8, 8], strides = [1, 1]} : vector<9x16xf32> to vector<8x8xf32>
    %84 = vector.extract_strided_slice %82 {offsets = [8, 0], sizes = [1, 8], strides = [1, 1]} : vector<9x16xf32> to vector<1x8xf32>
    %cst_18 = arith.constant 5.000000e-01 : f32
    %85 = vector.broadcast %cst_18 : f32 to vector<1x8xf32>
    %86 = arith.mulf %85, %80 : vector<1x8xf32>
    %cst_19 = arith.constant 0.707106769 : f32
    %87 = vector.broadcast %cst_19 : f32 to vector<1x8xf32>
    %88 = arith.mulf %80, %87 : vector<1x8xf32>
    %89 = math.erf %88 : vector<1x8xf32>
    %cst_20 = arith.constant 1.000000e+00 : f32
    %90 = vector.broadcast %cst_20 : f32 to vector<1x8xf32>
    %91 = arith.addf %90, %89 : vector<1x8xf32>
    %92 = arith.mulf %86, %91 : vector<1x8xf32>
    %cst_21 = arith.constant 0.000000e+00 : f32
    %93 = vector.broadcast %cst_21 : f32 to vector<1x8xf32>
    %94 = vector.extract_strided_slice %92 {offsets = [0, 0], sizes = [1, 1], strides = [1, 1]} : vector<1x8xf32> to vector<1x1xf32>
    %95 = vector.extract_strided_slice %83 {offsets = [0, 0], sizes = [1, 8], strides = [1, 1]} : vector<8x8xf32> to vector<1x8xf32>
    %96 = vector.shape_cast %95 : vector<1x8xf32> to vector<8xf32>
    %97 = vector.shape_cast %96 : vector<8xf32> to vector<1x8xf32>
    %98 = vector.broadcast %94 : vector<1x1xf32> to vector<1x8xf32>
    %99 = arith.mulf %98, %97 : vector<1x8xf32>
    %100 = arith.addf %93, %99 : vector<1x8xf32>
    %101 = vector.extract_strided_slice %92 {offsets = [0, 1], sizes = [1, 1], strides = [1, 1]} : vector<1x8xf32> to vector<1x1xf32>
    %102 = vector.extract_strided_slice %83 {offsets = [1, 0], sizes = [1, 8], strides = [1, 1]} : vector<8x8xf32> to vector<1x8xf32>
    %103 = vector.shape_cast %102 : vector<1x8xf32> to vector<8xf32>
    %104 = vector.shape_cast %103 : vector<8xf32> to vector<1x8xf32>
    %105 = vector.broadcast %101 : vector<1x1xf32> to vector<1x8xf32>
    %106 = arith.mulf %105, %104 : vector<1x8xf32>
    %107 = arith.addf %100, %106 : vector<1x8xf32>
    %108 = vector.extract_strided_slice %92 {offsets = [0, 2], sizes = [1, 1], strides = [1, 1]} : vector<1x8xf32> to vector<1x1xf32>
    %109 = vector.extract_strided_slice %83 {offsets = [2, 0], sizes = [1, 8], strides = [1, 1]} : vector<8x8xf32> to vector<1x8xf32>
    %110 = vector.shape_cast %109 : vector<1x8xf32> to vector<8xf32>
    %111 = vector.shape_cast %110 : vector<8xf32> to vector<1x8xf32>
    %112 = vector.broadcast %108 : vector<1x1xf32> to vector<1x8xf32>
    %113 = arith.mulf %112, %111 : vector<1x8xf32>
    %114 = arith.addf %107, %113 : vector<1x8xf32>
    %115 = vector.extract_strided_slice %92 {offsets = [0, 3], sizes = [1, 1], strides = [1, 1]} : vector<1x8xf32> to vector<1x1xf32>
    %116 = vector.extract_strided_slice %83 {offsets = [3, 0], sizes = [1, 8], strides = [1, 1]} : vector<8x8xf32> to vector<1x8xf32>
    %117 = vector.shape_cast %116 : vector<1x8xf32> to vector<8xf32>
    %118 = vector.shape_cast %117 : vector<8xf32> to vector<1x8xf32>
    %119 = vector.broadcast %115 : vector<1x1xf32> to vector<1x8xf32>
    %120 = arith.mulf %119, %118 : vector<1x8xf32>
    %121 = arith.addf %114, %120 : vector<1x8xf32>
    %122 = vector.extract_strided_slice %92 {offsets = [0, 4], sizes = [1, 1], strides = [1, 1]} : vector<1x8xf32> to vector<1x1xf32>
    %123 = vector.extract_strided_slice %83 {offsets = [4, 0], sizes = [1, 8], strides = [1, 1]} : vector<8x8xf32> to vector<1x8xf32>
    %124 = vector.shape_cast %123 : vector<1x8xf32> to vector<8xf32>
    %125 = vector.shape_cast %124 : vector<8xf32> to vector<1x8xf32>
    %126 = vector.broadcast %122 : vector<1x1xf32> to vector<1x8xf32>
    %127 = arith.mulf %126, %125 : vector<1x8xf32>
    %128 = arith.addf %121, %127 : vector<1x8xf32>
    %129 = vector.extract_strided_slice %92 {offsets = [0, 5], sizes = [1, 1], strides = [1, 1]} : vector<1x8xf32> to vector<1x1xf32>
    %130 = vector.extract_strided_slice %83 {offsets = [5, 0], sizes = [1, 8], strides = [1, 1]} : vector<8x8xf32> to vector<1x8xf32>
    %131 = vector.shape_cast %130 : vector<1x8xf32> to vector<8xf32>
    %132 = vector.shape_cast %131 : vector<8xf32> to vector<1x8xf32>
    %133 = vector.broadcast %129 : vector<1x1xf32> to vector<1x8xf32>
    %134 = arith.mulf %133, %132 : vector<1x8xf32>
    %135 = arith.addf %128, %134 : vector<1x8xf32>
    %136 = vector.extract_strided_slice %92 {offsets = [0, 6], sizes = [1, 1], strides = [1, 1]} : vector<1x8xf32> to vector<1x1xf32>
    %137 = vector.extract_strided_slice %83 {offsets = [6, 0], sizes = [1, 8], strides = [1, 1]} : vector<8x8xf32> to vector<1x8xf32>
    %138 = vector.shape_cast %137 : vector<1x8xf32> to vector<8xf32>
    %139 = vector.shape_cast %138 : vector<8xf32> to vector<1x8xf32>
    %140 = vector.broadcast %136 : vector<1x1xf32> to vector<1x8xf32>
    %141 = arith.mulf %140, %139 : vector<1x8xf32>
    %142 = arith.addf %135, %141 : vector<1x8xf32>
    %143 = vector.extract_strided_slice %92 {offsets = [0, 7], sizes = [1, 1], strides = [1, 1]} : vector<1x8xf32> to vector<1x1xf32>
    %144 = vector.extract_strided_slice %83 {offsets = [7, 0], sizes = [1, 8], strides = [1, 1]} : vector<8x8xf32> to vector<1x8xf32>
    %145 = vector.shape_cast %144 : vector<1x8xf32> to vector<8xf32>
    %146 = vector.shape_cast %145 : vector<8xf32> to vector<1x8xf32>
    %147 = vector.broadcast %143 : vector<1x1xf32> to vector<1x8xf32>
    %148 = arith.mulf %147, %146 : vector<1x8xf32>
    %149 = arith.addf %142, %148 : vector<1x8xf32>
    %150 = arith.addf %149, %84 : vector<1x8xf32>
    %151 = vector.extract_strided_slice %10 {offsets = [2, 0, 0], sizes = [1, 9, 16], strides = [1, 1, 1]} : vector<13x9x16xf32> to vector<1x9x16xf32>
    %152 = vector.shape_cast %151 : vector<1x9x16xf32> to vector<9x16xf32>
    %153 = vector.extract_strided_slice %152 {offsets = [0, 0], sizes = [8, 8], strides = [1, 1]} : vector<9x16xf32> to vector<8x8xf32>
    %154 = vector.extract_strided_slice %152 {offsets = [8, 0], sizes = [1, 8], strides = [1, 1]} : vector<9x16xf32> to vector<1x8xf32>
    %cst_22 = arith.constant 5.000000e-01 : f32
    %155 = vector.broadcast %cst_22 : f32 to vector<1x8xf32>
    %156 = arith.mulf %155, %150 : vector<1x8xf32>
    %cst_23 = arith.constant 0.707106769 : f32
    %157 = vector.broadcast %cst_23 : f32 to vector<1x8xf32>
    %158 = arith.mulf %150, %157 : vector<1x8xf32>
    %159 = math.erf %158 : vector<1x8xf32>
    %cst_24 = arith.constant 1.000000e+00 : f32
    %160 = vector.broadcast %cst_24 : f32 to vector<1x8xf32>
    %161 = arith.addf %160, %159 : vector<1x8xf32>
    %162 = arith.mulf %156, %161 : vector<1x8xf32>
    %cst_25 = arith.constant 0.000000e+00 : f32
    %163 = vector.broadcast %cst_25 : f32 to vector<1x8xf32>
    %164 = vector.extract_strided_slice %162 {offsets = [0, 0], sizes = [1, 1], strides = [1, 1]} : vector<1x8xf32> to vector<1x1xf32>
    %165 = vector.extract_strided_slice %153 {offsets = [0, 0], sizes = [1, 8], strides = [1, 1]} : vector<8x8xf32> to vector<1x8xf32>
    %166 = vector.shape_cast %165 : vector<1x8xf32> to vector<8xf32>
    %167 = vector.shape_cast %166 : vector<8xf32> to vector<1x8xf32>
    %168 = vector.broadcast %164 : vector<1x1xf32> to vector<1x8xf32>
    %169 = arith.mulf %168, %167 : vector<1x8xf32>
    %170 = arith.addf %163, %169 : vector<1x8xf32>
    %171 = vector.extract_strided_slice %162 {offsets = [0, 1], sizes = [1, 1], strides = [1, 1]} : vector<1x8xf32> to vector<1x1xf32>
    %172 = vector.extract_strided_slice %153 {offsets = [1, 0], sizes = [1, 8], strides = [1, 1]} : vector<8x8xf32> to vector<1x8xf32>
    %173 = vector.shape_cast %172 : vector<1x8xf32> to vector<8xf32>
    %174 = vector.shape_cast %173 : vector<8xf32> to vector<1x8xf32>
    %175 = vector.broadcast %171 : vector<1x1xf32> to vector<1x8xf32>
    %176 = arith.mulf %175, %174 : vector<1x8xf32>
    %177 = arith.addf %170, %176 : vector<1x8xf32>
    %178 = vector.extract_strided_slice %162 {offsets = [0, 2], sizes = [1, 1], strides = [1, 1]} : vector<1x8xf32> to vector<1x1xf32>
    %179 = vector.extract_strided_slice %153 {offsets = [2, 0], sizes = [1, 8], strides = [1, 1]} : vector<8x8xf32> to vector<1x8xf32>
    %180 = vector.shape_cast %179 : vector<1x8xf32> to vector<8xf32>
    %181 = vector.shape_cast %180 : vector<8xf32> to vector<1x8xf32>
    %182 = vector.broadcast %178 : vector<1x1xf32> to vector<1x8xf32>
    %183 = arith.mulf %182, %181 : vector<1x8xf32>
    %184 = arith.addf %177, %183 : vector<1x8xf32>
    %185 = vector.extract_strided_slice %162 {offsets = [0, 3], sizes = [1, 1], strides = [1, 1]} : vector<1x8xf32> to vector<1x1xf32>
    %186 = vector.extract_strided_slice %153 {offsets = [3, 0], sizes = [1, 8], strides = [1, 1]} : vector<8x8xf32> to vector<1x8xf32>
    %187 = vector.shape_cast %186 : vector<1x8xf32> to vector<8xf32>
    %188 = vector.shape_cast %187 : vector<8xf32> to vector<1x8xf32>
    %189 = vector.broadcast %185 : vector<1x1xf32> to vector<1x8xf32>
    %190 = arith.mulf %189, %188 : vector<1x8xf32>
    %191 = arith.addf %184, %190 : vector<1x8xf32>
    %192 = vector.extract_strided_slice %162 {offsets = [0, 4], sizes = [1, 1], strides = [1, 1]} : vector<1x8xf32> to vector<1x1xf32>
    %193 = vector.extract_strided_slice %153 {offsets = [4, 0], sizes = [1, 8], strides = [1, 1]} : vector<8x8xf32> to vector<1x8xf32>
    %194 = vector.shape_cast %193 : vector<1x8xf32> to vector<8xf32>
    %195 = vector.shape_cast %194 : vector<8xf32> to vector<1x8xf32>
    %196 = vector.broadcast %192 : vector<1x1xf32> to vector<1x8xf32>
    %197 = arith.mulf %196, %195 : vector<1x8xf32>
    %198 = arith.addf %191, %197 : vector<1x8xf32>
    %199 = vector.extract_strided_slice %162 {offsets = [0, 5], sizes = [1, 1], strides = [1, 1]} : vector<1x8xf32> to vector<1x1xf32>
    %200 = vector.extract_strided_slice %153 {offsets = [5, 0], sizes = [1, 8], strides = [1, 1]} : vector<8x8xf32> to vector<1x8xf32>
    %201 = vector.shape_cast %200 : vector<1x8xf32> to vector<8xf32>
    %202 = vector.shape_cast %201 : vector<8xf32> to vector<1x8xf32>
    %203 = vector.broadcast %199 : vector<1x1xf32> to vector<1x8xf32>
    %204 = arith.mulf %203, %202 : vector<1x8xf32>
    %205 = arith.addf %198, %204 : vector<1x8xf32>
    %206 = vector.extract_strided_slice %162 {offsets = [0, 6], sizes = [1, 1], strides = [1, 1]} : vector<1x8xf32> to vector<1x1xf32>
    %207 = vector.extract_strided_slice %153 {offsets = [6, 0], sizes = [1, 8], strides = [1, 1]} : vector<8x8xf32> to vector<1x8xf32>
    %208 = vector.shape_cast %207 : vector<1x8xf32> to vector<8xf32>
    %209 = vector.shape_cast %208 : vector<8xf32> to vector<1x8xf32>
    %210 = vector.broadcast %206 : vector<1x1xf32> to vector<1x8xf32>
    %211 = arith.mulf %210, %209 : vector<1x8xf32>
    %212 = arith.addf %205, %211 : vector<1x8xf32>
    %213 = vector.extract_strided_slice %162 {offsets = [0, 7], sizes = [1, 1], strides = [1, 1]} : vector<1x8xf32> to vector<1x1xf32>
    %214 = vector.extract_strided_slice %153 {offsets = [7, 0], sizes = [1, 8], strides = [1, 1]} : vector<8x8xf32> to vector<1x8xf32>
    %215 = vector.shape_cast %214 : vector<1x8xf32> to vector<8xf32>
    %216 = vector.shape_cast %215 : vector<8xf32> to vector<1x8xf32>
    %217 = vector.broadcast %213 : vector<1x1xf32> to vector<1x8xf32>
    %218 = arith.mulf %217, %216 : vector<1x8xf32>
    %219 = arith.addf %212, %218 : vector<1x8xf32>
    %220 = arith.addf %219, %154 : vector<1x8xf32>
    %221 = vector.extract_strided_slice %10 {offsets = [3, 0, 0], sizes = [1, 9, 16], strides = [1, 1, 1]} : vector<13x9x16xf32> to vector<1x9x16xf32>
    %222 = vector.shape_cast %221 : vector<1x9x16xf32> to vector<9x16xf32>
    %223 = vector.extract_strided_slice %222 {offsets = [0, 0], sizes = [8, 8], strides = [1, 1]} : vector<9x16xf32> to vector<8x8xf32>
    %224 = vector.extract_strided_slice %222 {offsets = [8, 0], sizes = [1, 8], strides = [1, 1]} : vector<9x16xf32> to vector<1x8xf32>
    %cst_26 = arith.constant 5.000000e-01 : f32
    %225 = vector.broadcast %cst_26 : f32 to vector<1x8xf32>
    %226 = arith.mulf %225, %220 : vector<1x8xf32>
    %cst_27 = arith.constant 0.707106769 : f32
    %227 = vector.broadcast %cst_27 : f32 to vector<1x8xf32>
    %228 = arith.mulf %220, %227 : vector<1x8xf32>
    %229 = math.erf %228 : vector<1x8xf32>
    %cst_28 = arith.constant 1.000000e+00 : f32
    %230 = vector.broadcast %cst_28 : f32 to vector<1x8xf32>
    %231 = arith.addf %230, %229 : vector<1x8xf32>
    %232 = arith.mulf %226, %231 : vector<1x8xf32>
    %cst_29 = arith.constant 0.000000e+00 : f32
    %233 = vector.broadcast %cst_29 : f32 to vector<1x8xf32>
    %234 = vector.extract_strided_slice %232 {offsets = [0, 0], sizes = [1, 1], strides = [1, 1]} : vector<1x8xf32> to vector<1x1xf32>
    %235 = vector.extract_strided_slice %223 {offsets = [0, 0], sizes = [1, 8], strides = [1, 1]} : vector<8x8xf32> to vector<1x8xf32>
    %236 = vector.shape_cast %235 : vector<1x8xf32> to vector<8xf32>
    %237 = vector.shape_cast %236 : vector<8xf32> to vector<1x8xf32>
    %238 = vector.broadcast %234 : vector<1x1xf32> to vector<1x8xf32>
    %239 = arith.mulf %238, %237 : vector<1x8xf32>
    %240 = arith.addf %233, %239 : vector<1x8xf32>
    %241 = vector.extract_strided_slice %232 {offsets = [0, 1], sizes = [1, 1], strides = [1, 1]} : vector<1x8xf32> to vector<1x1xf32>
    %242 = vector.extract_strided_slice %223 {offsets = [1, 0], sizes = [1, 8], strides = [1, 1]} : vector<8x8xf32> to vector<1x8xf32>
    %243 = vector.shape_cast %242 : vector<1x8xf32> to vector<8xf32>
    %244 = vector.shape_cast %243 : vector<8xf32> to vector<1x8xf32>
    %245 = vector.broadcast %241 : vector<1x1xf32> to vector<1x8xf32>
    %246 = arith.mulf %245, %244 : vector<1x8xf32>
    %247 = arith.addf %240, %246 : vector<1x8xf32>
    %248 = vector.extract_strided_slice %232 {offsets = [0, 2], sizes = [1, 1], strides = [1, 1]} : vector<1x8xf32> to vector<1x1xf32>
    %249 = vector.extract_strided_slice %223 {offsets = [2, 0], sizes = [1, 8], strides = [1, 1]} : vector<8x8xf32> to vector<1x8xf32>
    %250 = vector.shape_cast %249 : vector<1x8xf32> to vector<8xf32>
    %251 = vector.shape_cast %250 : vector<8xf32> to vector<1x8xf32>
    %252 = vector.broadcast %248 : vector<1x1xf32> to vector<1x8xf32>
    %253 = arith.mulf %252, %251 : vector<1x8xf32>
    %254 = arith.addf %247, %253 : vector<1x8xf32>
    %255 = vector.extract_strided_slice %232 {offsets = [0, 3], sizes = [1, 1], strides = [1, 1]} : vector<1x8xf32> to vector<1x1xf32>
    %256 = vector.extract_strided_slice %223 {offsets = [3, 0], sizes = [1, 8], strides = [1, 1]} : vector<8x8xf32> to vector<1x8xf32>
    %257 = vector.shape_cast %256 : vector<1x8xf32> to vector<8xf32>
    %258 = vector.shape_cast %257 : vector<8xf32> to vector<1x8xf32>
    %259 = vector.broadcast %255 : vector<1x1xf32> to vector<1x8xf32>
    %260 = arith.mulf %259, %258 : vector<1x8xf32>
    %261 = arith.addf %254, %260 : vector<1x8xf32>
    %262 = vector.extract_strided_slice %232 {offsets = [0, 4], sizes = [1, 1], strides = [1, 1]} : vector<1x8xf32> to vector<1x1xf32>
    %263 = vector.extract_strided_slice %223 {offsets = [4, 0], sizes = [1, 8], strides = [1, 1]} : vector<8x8xf32> to vector<1x8xf32>
    %264 = vector.shape_cast %263 : vector<1x8xf32> to vector<8xf32>
    %265 = vector.shape_cast %264 : vector<8xf32> to vector<1x8xf32>
    %266 = vector.broadcast %262 : vector<1x1xf32> to vector<1x8xf32>
    %267 = arith.mulf %266, %265 : vector<1x8xf32>
    %268 = arith.addf %261, %267 : vector<1x8xf32>
    %269 = vector.extract_strided_slice %232 {offsets = [0, 5], sizes = [1, 1], strides = [1, 1]} : vector<1x8xf32> to vector<1x1xf32>
    %270 = vector.extract_strided_slice %223 {offsets = [5, 0], sizes = [1, 8], strides = [1, 1]} : vector<8x8xf32> to vector<1x8xf32>
    %271 = vector.shape_cast %270 : vector<1x8xf32> to vector<8xf32>
    %272 = vector.shape_cast %271 : vector<8xf32> to vector<1x8xf32>
    %273 = vector.broadcast %269 : vector<1x1xf32> to vector<1x8xf32>
    %274 = arith.mulf %273, %272 : vector<1x8xf32>
    %275 = arith.addf %268, %274 : vector<1x8xf32>
    %276 = vector.extract_strided_slice %232 {offsets = [0, 6], sizes = [1, 1], strides = [1, 1]} : vector<1x8xf32> to vector<1x1xf32>
    %277 = vector.extract_strided_slice %223 {offsets = [6, 0], sizes = [1, 8], strides = [1, 1]} : vector<8x8xf32> to vector<1x8xf32>
    %278 = vector.shape_cast %277 : vector<1x8xf32> to vector<8xf32>
    %279 = vector.shape_cast %278 : vector<8xf32> to vector<1x8xf32>
    %280 = vector.broadcast %276 : vector<1x1xf32> to vector<1x8xf32>
    %281 = arith.mulf %280, %279 : vector<1x8xf32>
    %282 = arith.addf %275, %281 : vector<1x8xf32>
    %283 = vector.extract_strided_slice %232 {offsets = [0, 7], sizes = [1, 1], strides = [1, 1]} : vector<1x8xf32> to vector<1x1xf32>
    %284 = vector.extract_strided_slice %223 {offsets = [7, 0], sizes = [1, 8], strides = [1, 1]} : vector<8x8xf32> to vector<1x8xf32>
    %285 = vector.shape_cast %284 : vector<1x8xf32> to vector<8xf32>
    %286 = vector.shape_cast %285 : vector<8xf32> to vector<1x8xf32>
    %287 = vector.broadcast %283 : vector<1x1xf32> to vector<1x8xf32>
    %288 = arith.mulf %287, %286 : vector<1x8xf32>
    %289 = arith.addf %282, %288 : vector<1x8xf32>
    %290 = arith.addf %289, %224 : vector<1x8xf32>
    %291 = vector.extract_strided_slice %10 {offsets = [4, 0, 0], sizes = [1, 9, 16], strides = [1, 1, 1]} : vector<13x9x16xf32> to vector<1x9x16xf32>
    %292 = vector.shape_cast %291 : vector<1x9x16xf32> to vector<9x16xf32>
    %293 = vector.extract_strided_slice %292 {offsets = [0, 0], sizes = [8, 8], strides = [1, 1]} : vector<9x16xf32> to vector<8x8xf32>
    %294 = vector.extract_strided_slice %292 {offsets = [8, 0], sizes = [1, 8], strides = [1, 1]} : vector<9x16xf32> to vector<1x8xf32>
    %cst_30 = arith.constant 5.000000e-01 : f32
    %295 = vector.broadcast %cst_30 : f32 to vector<1x8xf32>
    %296 = arith.mulf %295, %7 : vector<1x8xf32>
    %cst_31 = arith.constant 0.707106769 : f32
    %297 = vector.broadcast %cst_31 : f32 to vector<1x8xf32>
    %298 = arith.mulf %7, %297 : vector<1x8xf32>
    %299 = math.erf %298 : vector<1x8xf32>
    %cst_32 = arith.constant 1.000000e+00 : f32
    %300 = vector.broadcast %cst_32 : f32 to vector<1x8xf32>
    %301 = arith.addf %300, %299 : vector<1x8xf32>
    %302 = arith.mulf %296, %301 : vector<1x8xf32>
    %cst_33 = arith.constant 0.000000e+00 : f32
    %303 = vector.broadcast %cst_33 : f32 to vector<1x8xf32>
    %304 = vector.extract_strided_slice %302 {offsets = [0, 0], sizes = [1, 1], strides = [1, 1]} : vector<1x8xf32> to vector<1x1xf32>
    %305 = vector.extract_strided_slice %293 {offsets = [0, 0], sizes = [1, 8], strides = [1, 1]} : vector<8x8xf32> to vector<1x8xf32>
    %306 = vector.shape_cast %305 : vector<1x8xf32> to vector<8xf32>
    %307 = vector.shape_cast %306 : vector<8xf32> to vector<1x8xf32>
    %308 = vector.broadcast %304 : vector<1x1xf32> to vector<1x8xf32>
    %309 = arith.mulf %308, %307 : vector<1x8xf32>
    %310 = arith.addf %303, %309 : vector<1x8xf32>
    %311 = vector.extract_strided_slice %302 {offsets = [0, 1], sizes = [1, 1], strides = [1, 1]} : vector<1x8xf32> to vector<1x1xf32>
    %312 = vector.extract_strided_slice %293 {offsets = [1, 0], sizes = [1, 8], strides = [1, 1]} : vector<8x8xf32> to vector<1x8xf32>
    %313 = vector.shape_cast %312 : vector<1x8xf32> to vector<8xf32>
    %314 = vector.shape_cast %313 : vector<8xf32> to vector<1x8xf32>
    %315 = vector.broadcast %311 : vector<1x1xf32> to vector<1x8xf32>
    %316 = arith.mulf %315, %314 : vector<1x8xf32>
    %317 = arith.addf %310, %316 : vector<1x8xf32>
    %318 = vector.extract_strided_slice %302 {offsets = [0, 2], sizes = [1, 1], strides = [1, 1]} : vector<1x8xf32> to vector<1x1xf32>
    %319 = vector.extract_strided_slice %293 {offsets = [2, 0], sizes = [1, 8], strides = [1, 1]} : vector<8x8xf32> to vector<1x8xf32>
    %320 = vector.shape_cast %319 : vector<1x8xf32> to vector<8xf32>
    %321 = vector.shape_cast %320 : vector<8xf32> to vector<1x8xf32>
    %322 = vector.broadcast %318 : vector<1x1xf32> to vector<1x8xf32>
    %323 = arith.mulf %322, %321 : vector<1x8xf32>
    %324 = arith.addf %317, %323 : vector<1x8xf32>
    %325 = vector.extract_strided_slice %302 {offsets = [0, 3], sizes = [1, 1], strides = [1, 1]} : vector<1x8xf32> to vector<1x1xf32>
    %326 = vector.extract_strided_slice %293 {offsets = [3, 0], sizes = [1, 8], strides = [1, 1]} : vector<8x8xf32> to vector<1x8xf32>
    %327 = vector.shape_cast %326 : vector<1x8xf32> to vector<8xf32>
    %328 = vector.shape_cast %327 : vector<8xf32> to vector<1x8xf32>
    %329 = vector.broadcast %325 : vector<1x1xf32> to vector<1x8xf32>
    %330 = arith.mulf %329, %328 : vector<1x8xf32>
    %331 = arith.addf %324, %330 : vector<1x8xf32>
    %332 = vector.extract_strided_slice %302 {offsets = [0, 4], sizes = [1, 1], strides = [1, 1]} : vector<1x8xf32> to vector<1x1xf32>
    %333 = vector.extract_strided_slice %293 {offsets = [4, 0], sizes = [1, 8], strides = [1, 1]} : vector<8x8xf32> to vector<1x8xf32>
    %334 = vector.shape_cast %333 : vector<1x8xf32> to vector<8xf32>
    %335 = vector.shape_cast %334 : vector<8xf32> to vector<1x8xf32>
    %336 = vector.broadcast %332 : vector<1x1xf32> to vector<1x8xf32>
    %337 = arith.mulf %336, %335 : vector<1x8xf32>
    %338 = arith.addf %331, %337 : vector<1x8xf32>
    %339 = vector.extract_strided_slice %302 {offsets = [0, 5], sizes = [1, 1], strides = [1, 1]} : vector<1x8xf32> to vector<1x1xf32>
    %340 = vector.extract_strided_slice %293 {offsets = [5, 0], sizes = [1, 8], strides = [1, 1]} : vector<8x8xf32> to vector<1x8xf32>
    %341 = vector.shape_cast %340 : vector<1x8xf32> to vector<8xf32>
    %342 = vector.shape_cast %341 : vector<8xf32> to vector<1x8xf32>
    %343 = vector.broadcast %339 : vector<1x1xf32> to vector<1x8xf32>
    %344 = arith.mulf %343, %342 : vector<1x8xf32>
    %345 = arith.addf %338, %344 : vector<1x8xf32>
    %346 = vector.extract_strided_slice %302 {offsets = [0, 6], sizes = [1, 1], strides = [1, 1]} : vector<1x8xf32> to vector<1x1xf32>
    %347 = vector.extract_strided_slice %293 {offsets = [6, 0], sizes = [1, 8], strides = [1, 1]} : vector<8x8xf32> to vector<1x8xf32>
    %348 = vector.shape_cast %347 : vector<1x8xf32> to vector<8xf32>
    %349 = vector.shape_cast %348 : vector<8xf32> to vector<1x8xf32>
    %350 = vector.broadcast %346 : vector<1x1xf32> to vector<1x8xf32>
    %351 = arith.mulf %350, %349 : vector<1x8xf32>
    %352 = arith.addf %345, %351 : vector<1x8xf32>
    %353 = vector.extract_strided_slice %302 {offsets = [0, 7], sizes = [1, 1], strides = [1, 1]} : vector<1x8xf32> to vector<1x1xf32>
    %354 = vector.extract_strided_slice %293 {offsets = [7, 0], sizes = [1, 8], strides = [1, 1]} : vector<8x8xf32> to vector<1x8xf32>
    %355 = vector.shape_cast %354 : vector<1x8xf32> to vector<8xf32>
    %356 = vector.shape_cast %355 : vector<8xf32> to vector<1x8xf32>
    %357 = vector.broadcast %353 : vector<1x1xf32> to vector<1x8xf32>
    %358 = arith.mulf %357, %356 : vector<1x8xf32>
    %359 = arith.addf %352, %358 : vector<1x8xf32>
    %360 = arith.addf %359, %294 : vector<1x8xf32>
    %361 = vector.extract_strided_slice %10 {offsets = [5, 0, 0], sizes = [1, 9, 16], strides = [1, 1, 1]} : vector<13x9x16xf32> to vector<1x9x16xf32>
    %362 = vector.shape_cast %361 : vector<1x9x16xf32> to vector<9x16xf32>
    %363 = vector.extract_strided_slice %362 {offsets = [0, 0], sizes = [8, 8], strides = [1, 1]} : vector<9x16xf32> to vector<8x8xf32>
    %364 = vector.extract_strided_slice %362 {offsets = [8, 0], sizes = [1, 8], strides = [1, 1]} : vector<9x16xf32> to vector<1x8xf32>
    %cst_34 = arith.constant 5.000000e-01 : f32
    %365 = vector.broadcast %cst_34 : f32 to vector<1x8xf32>
    %366 = arith.mulf %365, %360 : vector<1x8xf32>
    %cst_35 = arith.constant 0.707106769 : f32
    %367 = vector.broadcast %cst_35 : f32 to vector<1x8xf32>
    %368 = arith.mulf %360, %367 : vector<1x8xf32>
    %369 = math.erf %368 : vector<1x8xf32>
    %cst_36 = arith.constant 1.000000e+00 : f32
    %370 = vector.broadcast %cst_36 : f32 to vector<1x8xf32>
    %371 = arith.addf %370, %369 : vector<1x8xf32>
    %372 = arith.mulf %366, %371 : vector<1x8xf32>
    %cst_37 = arith.constant 0.000000e+00 : f32
    %373 = vector.broadcast %cst_37 : f32 to vector<1x8xf32>
    %374 = vector.extract_strided_slice %372 {offsets = [0, 0], sizes = [1, 1], strides = [1, 1]} : vector<1x8xf32> to vector<1x1xf32>
    %375 = vector.extract_strided_slice %363 {offsets = [0, 0], sizes = [1, 8], strides = [1, 1]} : vector<8x8xf32> to vector<1x8xf32>
    %376 = vector.shape_cast %375 : vector<1x8xf32> to vector<8xf32>
    %377 = vector.shape_cast %376 : vector<8xf32> to vector<1x8xf32>
    %378 = vector.broadcast %374 : vector<1x1xf32> to vector<1x8xf32>
    %379 = arith.mulf %378, %377 : vector<1x8xf32>
    %380 = arith.addf %373, %379 : vector<1x8xf32>
    %381 = vector.extract_strided_slice %372 {offsets = [0, 1], sizes = [1, 1], strides = [1, 1]} : vector<1x8xf32> to vector<1x1xf32>
    %382 = vector.extract_strided_slice %363 {offsets = [1, 0], sizes = [1, 8], strides = [1, 1]} : vector<8x8xf32> to vector<1x8xf32>
    %383 = vector.shape_cast %382 : vector<1x8xf32> to vector<8xf32>
    %384 = vector.shape_cast %383 : vector<8xf32> to vector<1x8xf32>
    %385 = vector.broadcast %381 : vector<1x1xf32> to vector<1x8xf32>
    %386 = arith.mulf %385, %384 : vector<1x8xf32>
    %387 = arith.addf %380, %386 : vector<1x8xf32>
    %388 = vector.extract_strided_slice %372 {offsets = [0, 2], sizes = [1, 1], strides = [1, 1]} : vector<1x8xf32> to vector<1x1xf32>
    %389 = vector.extract_strided_slice %363 {offsets = [2, 0], sizes = [1, 8], strides = [1, 1]} : vector<8x8xf32> to vector<1x8xf32>
    %390 = vector.shape_cast %389 : vector<1x8xf32> to vector<8xf32>
    %391 = vector.shape_cast %390 : vector<8xf32> to vector<1x8xf32>
    %392 = vector.broadcast %388 : vector<1x1xf32> to vector<1x8xf32>
    %393 = arith.mulf %392, %391 : vector<1x8xf32>
    %394 = arith.addf %387, %393 : vector<1x8xf32>
    %395 = vector.extract_strided_slice %372 {offsets = [0, 3], sizes = [1, 1], strides = [1, 1]} : vector<1x8xf32> to vector<1x1xf32>
    %396 = vector.extract_strided_slice %363 {offsets = [3, 0], sizes = [1, 8], strides = [1, 1]} : vector<8x8xf32> to vector<1x8xf32>
    %397 = vector.shape_cast %396 : vector<1x8xf32> to vector<8xf32>
    %398 = vector.shape_cast %397 : vector<8xf32> to vector<1x8xf32>
    %399 = vector.broadcast %395 : vector<1x1xf32> to vector<1x8xf32>
    %400 = arith.mulf %399, %398 : vector<1x8xf32>
    %401 = arith.addf %394, %400 : vector<1x8xf32>
    %402 = vector.extract_strided_slice %372 {offsets = [0, 4], sizes = [1, 1], strides = [1, 1]} : vector<1x8xf32> to vector<1x1xf32>
    %403 = vector.extract_strided_slice %363 {offsets = [4, 0], sizes = [1, 8], strides = [1, 1]} : vector<8x8xf32> to vector<1x8xf32>
    %404 = vector.shape_cast %403 : vector<1x8xf32> to vector<8xf32>
    %405 = vector.shape_cast %404 : vector<8xf32> to vector<1x8xf32>
    %406 = vector.broadcast %402 : vector<1x1xf32> to vector<1x8xf32>
    %407 = arith.mulf %406, %405 : vector<1x8xf32>
    %408 = arith.addf %401, %407 : vector<1x8xf32>
    %409 = vector.extract_strided_slice %372 {offsets = [0, 5], sizes = [1, 1], strides = [1, 1]} : vector<1x8xf32> to vector<1x1xf32>
    %410 = vector.extract_strided_slice %363 {offsets = [5, 0], sizes = [1, 8], strides = [1, 1]} : vector<8x8xf32> to vector<1x8xf32>
    %411 = vector.shape_cast %410 : vector<1x8xf32> to vector<8xf32>
    %412 = vector.shape_cast %411 : vector<8xf32> to vector<1x8xf32>
    %413 = vector.broadcast %409 : vector<1x1xf32> to vector<1x8xf32>
    %414 = arith.mulf %413, %412 : vector<1x8xf32>
    %415 = arith.addf %408, %414 : vector<1x8xf32>
    %416 = vector.extract_strided_slice %372 {offsets = [0, 6], sizes = [1, 1], strides = [1, 1]} : vector<1x8xf32> to vector<1x1xf32>
    %417 = vector.extract_strided_slice %363 {offsets = [6, 0], sizes = [1, 8], strides = [1, 1]} : vector<8x8xf32> to vector<1x8xf32>
    %418 = vector.shape_cast %417 : vector<1x8xf32> to vector<8xf32>
    %419 = vector.shape_cast %418 : vector<8xf32> to vector<1x8xf32>
    %420 = vector.broadcast %416 : vector<1x1xf32> to vector<1x8xf32>
    %421 = arith.mulf %420, %419 : vector<1x8xf32>
    %422 = arith.addf %415, %421 : vector<1x8xf32>
    %423 = vector.extract_strided_slice %372 {offsets = [0, 7], sizes = [1, 1], strides = [1, 1]} : vector<1x8xf32> to vector<1x1xf32>
    %424 = vector.extract_strided_slice %363 {offsets = [7, 0], sizes = [1, 8], strides = [1, 1]} : vector<8x8xf32> to vector<1x8xf32>
    %425 = vector.shape_cast %424 : vector<1x8xf32> to vector<8xf32>
    %426 = vector.shape_cast %425 : vector<8xf32> to vector<1x8xf32>
    %427 = vector.broadcast %423 : vector<1x1xf32> to vector<1x8xf32>
    %428 = arith.mulf %427, %426 : vector<1x8xf32>
    %429 = arith.addf %422, %428 : vector<1x8xf32>
    %430 = arith.addf %429, %364 : vector<1x8xf32>
    %431 = vector.extract_strided_slice %10 {offsets = [6, 0, 0], sizes = [1, 9, 16], strides = [1, 1, 1]} : vector<13x9x16xf32> to vector<1x9x16xf32>
    %432 = vector.shape_cast %431 : vector<1x9x16xf32> to vector<9x16xf32>
    %433 = vector.extract_strided_slice %432 {offsets = [0, 0], sizes = [8, 8], strides = [1, 1]} : vector<9x16xf32> to vector<8x8xf32>
    %434 = vector.extract_strided_slice %432 {offsets = [8, 0], sizes = [1, 8], strides = [1, 1]} : vector<9x16xf32> to vector<1x8xf32>
    %cst_38 = arith.constant 5.000000e-01 : f32
    %435 = vector.broadcast %cst_38 : f32 to vector<1x8xf32>
    %436 = arith.mulf %435, %430 : vector<1x8xf32>
    %cst_39 = arith.constant 0.707106769 : f32
    %437 = vector.broadcast %cst_39 : f32 to vector<1x8xf32>
    %438 = arith.mulf %430, %437 : vector<1x8xf32>
    %439 = math.erf %438 : vector<1x8xf32>
    %cst_40 = arith.constant 1.000000e+00 : f32
    %440 = vector.broadcast %cst_40 : f32 to vector<1x8xf32>
    %441 = arith.addf %440, %439 : vector<1x8xf32>
    %442 = arith.mulf %436, %441 : vector<1x8xf32>
    %cst_41 = arith.constant 0.000000e+00 : f32
    %443 = vector.broadcast %cst_41 : f32 to vector<1x8xf32>
    %444 = vector.extract_strided_slice %442 {offsets = [0, 0], sizes = [1, 1], strides = [1, 1]} : vector<1x8xf32> to vector<1x1xf32>
    %445 = vector.extract_strided_slice %433 {offsets = [0, 0], sizes = [1, 8], strides = [1, 1]} : vector<8x8xf32> to vector<1x8xf32>
    %446 = vector.shape_cast %445 : vector<1x8xf32> to vector<8xf32>
    %447 = vector.shape_cast %446 : vector<8xf32> to vector<1x8xf32>
    %448 = vector.broadcast %444 : vector<1x1xf32> to vector<1x8xf32>
    %449 = arith.mulf %448, %447 : vector<1x8xf32>
    %450 = arith.addf %443, %449 : vector<1x8xf32>
    %451 = vector.extract_strided_slice %442 {offsets = [0, 1], sizes = [1, 1], strides = [1, 1]} : vector<1x8xf32> to vector<1x1xf32>
    %452 = vector.extract_strided_slice %433 {offsets = [1, 0], sizes = [1, 8], strides = [1, 1]} : vector<8x8xf32> to vector<1x8xf32>
    %453 = vector.shape_cast %452 : vector<1x8xf32> to vector<8xf32>
    %454 = vector.shape_cast %453 : vector<8xf32> to vector<1x8xf32>
    %455 = vector.broadcast %451 : vector<1x1xf32> to vector<1x8xf32>
    %456 = arith.mulf %455, %454 : vector<1x8xf32>
    %457 = arith.addf %450, %456 : vector<1x8xf32>
    %458 = vector.extract_strided_slice %442 {offsets = [0, 2], sizes = [1, 1], strides = [1, 1]} : vector<1x8xf32> to vector<1x1xf32>
    %459 = vector.extract_strided_slice %433 {offsets = [2, 0], sizes = [1, 8], strides = [1, 1]} : vector<8x8xf32> to vector<1x8xf32>
    %460 = vector.shape_cast %459 : vector<1x8xf32> to vector<8xf32>
    %461 = vector.shape_cast %460 : vector<8xf32> to vector<1x8xf32>
    %462 = vector.broadcast %458 : vector<1x1xf32> to vector<1x8xf32>
    %463 = arith.mulf %462, %461 : vector<1x8xf32>
    %464 = arith.addf %457, %463 : vector<1x8xf32>
    %465 = vector.extract_strided_slice %442 {offsets = [0, 3], sizes = [1, 1], strides = [1, 1]} : vector<1x8xf32> to vector<1x1xf32>
    %466 = vector.extract_strided_slice %433 {offsets = [3, 0], sizes = [1, 8], strides = [1, 1]} : vector<8x8xf32> to vector<1x8xf32>
    %467 = vector.shape_cast %466 : vector<1x8xf32> to vector<8xf32>
    %468 = vector.shape_cast %467 : vector<8xf32> to vector<1x8xf32>
    %469 = vector.broadcast %465 : vector<1x1xf32> to vector<1x8xf32>
    %470 = arith.mulf %469, %468 : vector<1x8xf32>
    %471 = arith.addf %464, %470 : vector<1x8xf32>
    %472 = vector.extract_strided_slice %442 {offsets = [0, 4], sizes = [1, 1], strides = [1, 1]} : vector<1x8xf32> to vector<1x1xf32>
    %473 = vector.extract_strided_slice %433 {offsets = [4, 0], sizes = [1, 8], strides = [1, 1]} : vector<8x8xf32> to vector<1x8xf32>
    %474 = vector.shape_cast %473 : vector<1x8xf32> to vector<8xf32>
    %475 = vector.shape_cast %474 : vector<8xf32> to vector<1x8xf32>
    %476 = vector.broadcast %472 : vector<1x1xf32> to vector<1x8xf32>
    %477 = arith.mulf %476, %475 : vector<1x8xf32>
    %478 = arith.addf %471, %477 : vector<1x8xf32>
    %479 = vector.extract_strided_slice %442 {offsets = [0, 5], sizes = [1, 1], strides = [1, 1]} : vector<1x8xf32> to vector<1x1xf32>
    %480 = vector.extract_strided_slice %433 {offsets = [5, 0], sizes = [1, 8], strides = [1, 1]} : vector<8x8xf32> to vector<1x8xf32>
    %481 = vector.shape_cast %480 : vector<1x8xf32> to vector<8xf32>
    %482 = vector.shape_cast %481 : vector<8xf32> to vector<1x8xf32>
    %483 = vector.broadcast %479 : vector<1x1xf32> to vector<1x8xf32>
    %484 = arith.mulf %483, %482 : vector<1x8xf32>
    %485 = arith.addf %478, %484 : vector<1x8xf32>
    %486 = vector.extract_strided_slice %442 {offsets = [0, 6], sizes = [1, 1], strides = [1, 1]} : vector<1x8xf32> to vector<1x1xf32>
    %487 = vector.extract_strided_slice %433 {offsets = [6, 0], sizes = [1, 8], strides = [1, 1]} : vector<8x8xf32> to vector<1x8xf32>
    %488 = vector.shape_cast %487 : vector<1x8xf32> to vector<8xf32>
    %489 = vector.shape_cast %488 : vector<8xf32> to vector<1x8xf32>
    %490 = vector.broadcast %486 : vector<1x1xf32> to vector<1x8xf32>
    %491 = arith.mulf %490, %489 : vector<1x8xf32>
    %492 = arith.addf %485, %491 : vector<1x8xf32>
    %493 = vector.extract_strided_slice %442 {offsets = [0, 7], sizes = [1, 1], strides = [1, 1]} : vector<1x8xf32> to vector<1x1xf32>
    %494 = vector.extract_strided_slice %433 {offsets = [7, 0], sizes = [1, 8], strides = [1, 1]} : vector<8x8xf32> to vector<1x8xf32>
    %495 = vector.shape_cast %494 : vector<1x8xf32> to vector<8xf32>
    %496 = vector.shape_cast %495 : vector<8xf32> to vector<1x8xf32>
    %497 = vector.broadcast %493 : vector<1x1xf32> to vector<1x8xf32>
    %498 = arith.mulf %497, %496 : vector<1x8xf32>
    %499 = arith.addf %492, %498 : vector<1x8xf32>
    %500 = arith.addf %499, %434 : vector<1x8xf32>
    %501 = vector.extract_strided_slice %10 {offsets = [7, 0, 0], sizes = [1, 9, 16], strides = [1, 1, 1]} : vector<13x9x16xf32> to vector<1x9x16xf32>
    %502 = vector.shape_cast %501 : vector<1x9x16xf32> to vector<9x16xf32>
    %503 = vector.extract_strided_slice %502 {offsets = [0, 0], sizes = [8, 16], strides = [1, 1]} : vector<9x16xf32> to vector<8x16xf32>
    %504 = vector.extract_strided_slice %502 {offsets = [8, 0], sizes = [1, 16], strides = [1, 1]} : vector<9x16xf32> to vector<1x16xf32>
    %cst_42 = arith.constant 5.000000e-01 : f32
    %505 = vector.broadcast %cst_42 : f32 to vector<1x8xf32>
    %506 = arith.mulf %505, %500 : vector<1x8xf32>
    %cst_43 = arith.constant 0.707106769 : f32
    %507 = vector.broadcast %cst_43 : f32 to vector<1x8xf32>
    %508 = arith.mulf %500, %507 : vector<1x8xf32>
    %509 = math.erf %508 : vector<1x8xf32>
    %cst_44 = arith.constant 1.000000e+00 : f32
    %510 = vector.broadcast %cst_44 : f32 to vector<1x8xf32>
    %511 = arith.addf %510, %509 : vector<1x8xf32>
    %512 = arith.mulf %506, %511 : vector<1x8xf32>
    %cst_45 = arith.constant 0.000000e+00 : f32
    %513 = vector.broadcast %cst_45 : f32 to vector<1x16xf32>
    %514 = vector.extract_strided_slice %512 {offsets = [0, 0], sizes = [1, 1], strides = [1, 1]} : vector<1x8xf32> to vector<1x1xf32>
    %515 = vector.extract_strided_slice %503 {offsets = [0, 0], sizes = [1, 16], strides = [1, 1]} : vector<8x16xf32> to vector<1x16xf32>
    %516 = vector.shape_cast %515 : vector<1x16xf32> to vector<16xf32>
    %517 = vector.shape_cast %516 : vector<16xf32> to vector<1x16xf32>
    %518 = vector.broadcast %514 : vector<1x1xf32> to vector<1x16xf32>
    %519 = arith.mulf %518, %517 : vector<1x16xf32>
    %520 = arith.addf %513, %519 : vector<1x16xf32>
    %521 = vector.extract_strided_slice %512 {offsets = [0, 1], sizes = [1, 1], strides = [1, 1]} : vector<1x8xf32> to vector<1x1xf32>
    %522 = vector.extract_strided_slice %503 {offsets = [1, 0], sizes = [1, 16], strides = [1, 1]} : vector<8x16xf32> to vector<1x16xf32>
    %523 = vector.shape_cast %522 : vector<1x16xf32> to vector<16xf32>
    %524 = vector.shape_cast %523 : vector<16xf32> to vector<1x16xf32>
    %525 = vector.broadcast %521 : vector<1x1xf32> to vector<1x16xf32>
    %526 = arith.mulf %525, %524 : vector<1x16xf32>
    %527 = arith.addf %520, %526 : vector<1x16xf32>
    %528 = vector.extract_strided_slice %512 {offsets = [0, 2], sizes = [1, 1], strides = [1, 1]} : vector<1x8xf32> to vector<1x1xf32>
    %529 = vector.extract_strided_slice %503 {offsets = [2, 0], sizes = [1, 16], strides = [1, 1]} : vector<8x16xf32> to vector<1x16xf32>
    %530 = vector.shape_cast %529 : vector<1x16xf32> to vector<16xf32>
    %531 = vector.shape_cast %530 : vector<16xf32> to vector<1x16xf32>
    %532 = vector.broadcast %528 : vector<1x1xf32> to vector<1x16xf32>
    %533 = arith.mulf %532, %531 : vector<1x16xf32>
    %534 = arith.addf %527, %533 : vector<1x16xf32>
    %535 = vector.extract_strided_slice %512 {offsets = [0, 3], sizes = [1, 1], strides = [1, 1]} : vector<1x8xf32> to vector<1x1xf32>
    %536 = vector.extract_strided_slice %503 {offsets = [3, 0], sizes = [1, 16], strides = [1, 1]} : vector<8x16xf32> to vector<1x16xf32>
    %537 = vector.shape_cast %536 : vector<1x16xf32> to vector<16xf32>
    %538 = vector.shape_cast %537 : vector<16xf32> to vector<1x16xf32>
    %539 = vector.broadcast %535 : vector<1x1xf32> to vector<1x16xf32>
    %540 = arith.mulf %539, %538 : vector<1x16xf32>
    %541 = arith.addf %534, %540 : vector<1x16xf32>
    %542 = vector.extract_strided_slice %512 {offsets = [0, 4], sizes = [1, 1], strides = [1, 1]} : vector<1x8xf32> to vector<1x1xf32>
    %543 = vector.extract_strided_slice %503 {offsets = [4, 0], sizes = [1, 16], strides = [1, 1]} : vector<8x16xf32> to vector<1x16xf32>
    %544 = vector.shape_cast %543 : vector<1x16xf32> to vector<16xf32>
    %545 = vector.shape_cast %544 : vector<16xf32> to vector<1x16xf32>
    %546 = vector.broadcast %542 : vector<1x1xf32> to vector<1x16xf32>
    %547 = arith.mulf %546, %545 : vector<1x16xf32>
    %548 = arith.addf %541, %547 : vector<1x16xf32>
    %549 = vector.extract_strided_slice %512 {offsets = [0, 5], sizes = [1, 1], strides = [1, 1]} : vector<1x8xf32> to vector<1x1xf32>
    %550 = vector.extract_strided_slice %503 {offsets = [5, 0], sizes = [1, 16], strides = [1, 1]} : vector<8x16xf32> to vector<1x16xf32>
    %551 = vector.shape_cast %550 : vector<1x16xf32> to vector<16xf32>
    %552 = vector.shape_cast %551 : vector<16xf32> to vector<1x16xf32>
    %553 = vector.broadcast %549 : vector<1x1xf32> to vector<1x16xf32>
    %554 = arith.mulf %553, %552 : vector<1x16xf32>
    %555 = arith.addf %548, %554 : vector<1x16xf32>
    %556 = vector.extract_strided_slice %512 {offsets = [0, 6], sizes = [1, 1], strides = [1, 1]} : vector<1x8xf32> to vector<1x1xf32>
    %557 = vector.extract_strided_slice %503 {offsets = [6, 0], sizes = [1, 16], strides = [1, 1]} : vector<8x16xf32> to vector<1x16xf32>
    %558 = vector.shape_cast %557 : vector<1x16xf32> to vector<16xf32>
    %559 = vector.shape_cast %558 : vector<16xf32> to vector<1x16xf32>
    %560 = vector.broadcast %556 : vector<1x1xf32> to vector<1x16xf32>
    %561 = arith.mulf %560, %559 : vector<1x16xf32>
    %562 = arith.addf %555, %561 : vector<1x16xf32>
    %563 = vector.extract_strided_slice %512 {offsets = [0, 7], sizes = [1, 1], strides = [1, 1]} : vector<1x8xf32> to vector<1x1xf32>
    %564 = vector.extract_strided_slice %503 {offsets = [7, 0], sizes = [1, 16], strides = [1, 1]} : vector<8x16xf32> to vector<1x16xf32>
    %565 = vector.shape_cast %564 : vector<1x16xf32> to vector<16xf32>
    %566 = vector.shape_cast %565 : vector<16xf32> to vector<1x16xf32>
    %567 = vector.broadcast %563 : vector<1x1xf32> to vector<1x16xf32>
    %568 = arith.mulf %567, %566 : vector<1x16xf32>
    %569 = arith.addf %562, %568 : vector<1x16xf32>
    %570 = arith.addf %569, %504 : vector<1x16xf32>
    %571 = vector.extract_strided_slice %290 {offsets = [0, 0], sizes = [1, 4], strides = [1, 1]} : vector<1x8xf32> to vector<1x4xf32>
    %572 = vector.extract_strided_slice %290 {offsets = [0, 4], sizes = [1, 4], strides = [1, 1]} : vector<1x8xf32> to vector<1x4xf32>
    %573 = vector.extract_strided_slice %570 {offsets = [0, 0], sizes = [1, 4], strides = [1, 1]} : vector<1x16xf32> to vector<1x4xf32>
    %574 = vector.extract_strided_slice %570 {offsets = [0, 4], sizes = [1, 4], strides = [1, 1]} : vector<1x16xf32> to vector<1x4xf32>
    %575 = vector.extract_strided_slice %570 {offsets = [0, 8], sizes = [1, 8], strides = [1, 1]} : vector<1x16xf32> to vector<1x8xf32>
    %576 = math.exp %572 : vector<1x4xf32>
    %577 = arith.mulf %576, %9 : vector<1x4xf32>
    %578 = arith.addf %577, %571 : vector<1x4xf32>
    %579 = vector.extract_strided_slice %10 {offsets = [8, 0, 0], sizes = [1, 9, 16], strides = [1, 1, 1]} : vector<13x9x16xf32> to vector<1x9x16xf32>
    %580 = vector.shape_cast %579 : vector<1x9x16xf32> to vector<9x16xf32>
    %581 = vector.extract_strided_slice %580 {offsets = [0, 0], sizes = [4, 8], strides = [1, 1]} : vector<9x16xf32> to vector<4x8xf32>
    %582 = vector.extract_strided_slice %580 {offsets = [4, 0], sizes = [1, 8], strides = [1, 1]} : vector<9x16xf32> to vector<1x8xf32>
    %cst_46 = arith.constant 0.000000e+00 : f32
    %583 = vector.broadcast %cst_46 : f32 to vector<1x8xf32>
    %584 = vector.extract_strided_slice %578 {offsets = [0, 0], sizes = [1, 1], strides = [1, 1]} : vector<1x4xf32> to vector<1x1xf32>
    %585 = vector.extract_strided_slice %581 {offsets = [0, 0], sizes = [1, 8], strides = [1, 1]} : vector<4x8xf32> to vector<1x8xf32>
    %586 = vector.shape_cast %585 : vector<1x8xf32> to vector<8xf32>
    %587 = vector.shape_cast %586 : vector<8xf32> to vector<1x8xf32>
    %588 = vector.broadcast %584 : vector<1x1xf32> to vector<1x8xf32>
    %589 = arith.mulf %588, %587 : vector<1x8xf32>
    %590 = arith.addf %583, %589 : vector<1x8xf32>
    %591 = vector.extract_strided_slice %578 {offsets = [0, 1], sizes = [1, 1], strides = [1, 1]} : vector<1x4xf32> to vector<1x1xf32>
    %592 = vector.extract_strided_slice %581 {offsets = [1, 0], sizes = [1, 8], strides = [1, 1]} : vector<4x8xf32> to vector<1x8xf32>
    %593 = vector.shape_cast %592 : vector<1x8xf32> to vector<8xf32>
    %594 = vector.shape_cast %593 : vector<8xf32> to vector<1x8xf32>
    %595 = vector.broadcast %591 : vector<1x1xf32> to vector<1x8xf32>
    %596 = arith.mulf %595, %594 : vector<1x8xf32>
    %597 = arith.addf %590, %596 : vector<1x8xf32>
    %598 = vector.extract_strided_slice %578 {offsets = [0, 2], sizes = [1, 1], strides = [1, 1]} : vector<1x4xf32> to vector<1x1xf32>
    %599 = vector.extract_strided_slice %581 {offsets = [2, 0], sizes = [1, 8], strides = [1, 1]} : vector<4x8xf32> to vector<1x8xf32>
    %600 = vector.shape_cast %599 : vector<1x8xf32> to vector<8xf32>
    %601 = vector.shape_cast %600 : vector<8xf32> to vector<1x8xf32>
    %602 = vector.broadcast %598 : vector<1x1xf32> to vector<1x8xf32>
    %603 = arith.mulf %602, %601 : vector<1x8xf32>
    %604 = arith.addf %597, %603 : vector<1x8xf32>
    %605 = vector.extract_strided_slice %578 {offsets = [0, 3], sizes = [1, 1], strides = [1, 1]} : vector<1x4xf32> to vector<1x1xf32>
    %606 = vector.extract_strided_slice %581 {offsets = [3, 0], sizes = [1, 8], strides = [1, 1]} : vector<4x8xf32> to vector<1x8xf32>
    %607 = vector.shape_cast %606 : vector<1x8xf32> to vector<8xf32>
    %608 = vector.shape_cast %607 : vector<8xf32> to vector<1x8xf32>
    %609 = vector.broadcast %605 : vector<1x1xf32> to vector<1x8xf32>
    %610 = arith.mulf %609, %608 : vector<1x8xf32>
    %611 = arith.addf %604, %610 : vector<1x8xf32>
    %612 = arith.addf %611, %582 : vector<1x8xf32>
    %613 = arith.addf %575, %612 : vector<1x8xf32>
    %cst_47 = arith.constant -5.000000e-01 : f32
    %614 = vector.broadcast %cst_47 : f32 to vector<1x4xf32>
    %615 = arith.addf %614, %574 : vector<1x4xf32>
    %616 = arith.subf %615, %572 : vector<1x4xf32>
    %617 = arith.subf %572, %574 : vector<1x4xf32>
    %cst_48 = arith.constant 2.000000e+00 : f32
    %618 = vector.broadcast %cst_48 : f32 to vector<1x4xf32>
    %619 = arith.mulf %618, %617 : vector<1x4xf32>
    %620 = math.exp %619 : vector<1x4xf32>
    %621 = arith.subf %571, %573 : vector<1x4xf32>
    %622 = arith.mulf %621, %621 : vector<1x4xf32>
    %cst_49 = arith.constant -2.000000e+00 : f32
    %623 = vector.broadcast %cst_49 : f32 to vector<1x4xf32>
    %624 = arith.mulf %623, %574 : vector<1x4xf32>
    %625 = math.exp %624 : vector<1x4xf32>
    %626 = arith.mulf %622, %625 : vector<1x4xf32>
    %627 = arith.addf %620, %626 : vector<1x4xf32>
    %cst_50 = arith.constant 5.000000e-01 : f32
    %628 = vector.broadcast %cst_50 : f32 to vector<1x4xf32>
    %629 = arith.mulf %628, %627 : vector<1x4xf32>
    %630 = arith.addf %616, %629 : vector<1x4xf32>
    %cst_51 = arith.constant -5.000000e-01 : f32
    %631 = vector.broadcast %cst_51 : f32 to vector<1x4xf32>
    %632 = arith.subf %631, %572 : vector<1x4xf32>
    %cst_52 = arith.constant 0.000000e+00 : f32
    %633 = vector.broadcast %cst_52 : f32 to vector<1x4xf32>
    %634 = arith.subf %572, %633 : vector<1x4xf32>
    %cst_53 = arith.constant 2.000000e+00 : f32
    %635 = vector.broadcast %cst_53 : f32 to vector<1x4xf32>
    %636 = arith.mulf %635, %634 : vector<1x4xf32>
    %637 = math.exp %636 : vector<1x4xf32>
    %cst_54 = arith.constant 0.000000e+00 : f32
    %638 = vector.broadcast %cst_54 : f32 to vector<1x4xf32>
    %639 = arith.subf %571, %638 : vector<1x4xf32>
    %640 = arith.mulf %639, %639 : vector<1x4xf32>
    %cst_55 = arith.constant -0.000000e+00 : f32
    %641 = math.exp %cst_55 : f32
    %642 = vector.broadcast %641 : f32 to vector<1x4xf32>
    %643 = arith.mulf %640, %642 : vector<1x4xf32>
    %644 = arith.addf %637, %643 : vector<1x4xf32>
    %cst_56 = arith.constant 5.000000e-01 : f32
    %645 = vector.broadcast %cst_56 : f32 to vector<1x4xf32>
    %646 = arith.mulf %645, %644 : vector<1x4xf32>
    %647 = arith.addf %632, %646 : vector<1x4xf32>
    %cst_57 = arith.constant -5.000000e-01 : f32
    %648 = vector.broadcast %cst_57 : f32 to vector<1x4xf32>
    %649 = arith.subf %648, %574 : vector<1x4xf32>
    %cst_58 = arith.constant 0.000000e+00 : f32
    %650 = vector.broadcast %cst_58 : f32 to vector<1x4xf32>
    %651 = arith.subf %574, %650 : vector<1x4xf32>
    %cst_59 = arith.constant 2.000000e+00 : f32
    %652 = vector.broadcast %cst_59 : f32 to vector<1x4xf32>
    %653 = arith.mulf %652, %651 : vector<1x4xf32>
    %654 = math.exp %653 : vector<1x4xf32>
    %cst_60 = arith.constant 0.000000e+00 : f32
    %655 = vector.broadcast %cst_60 : f32 to vector<1x4xf32>
    %656 = arith.subf %573, %655 : vector<1x4xf32>
    %657 = arith.mulf %656, %656 : vector<1x4xf32>
    %cst_61 = arith.constant -0.000000e+00 : f32
    %658 = math.exp %cst_61 : f32
    %659 = vector.broadcast %658 : f32 to vector<1x4xf32>
    %660 = arith.mulf %657, %659 : vector<1x4xf32>
    %661 = arith.addf %654, %660 : vector<1x4xf32>
    %cst_62 = arith.constant 5.000000e-01 : f32
    %662 = vector.broadcast %cst_62 : f32 to vector<1x4xf32>
    %663 = arith.mulf %662, %661 : vector<1x4xf32>
    %664 = arith.addf %649, %663 : vector<1x4xf32>
    %665 = tpu.concatenate %578, %630, %647, %664 in 1 : vector<1x4xf32>, vector<1x4xf32>, vector<1x4xf32>, vector<1x4xf32> -> vector<1x16xf32>
    %666 = vector.shape_cast %665 : vector<1x16xf32> to vector<1x1x16xf32>
    %c0_63 = arith.constant 0 : index
    %c0_64 = arith.constant 0 : index
    %c0_65 = arith.constant 0 : index
    %667 = vector.load %arg6[%c0_63, %c0_64, %c0_65] : memref<1x1x16xf32, #tpu.memory_space<vmem>>, vector<1x1x16xf32>
    tpu.vector_store %arg6[%c0_63, %c0_64, %c0_65], %666 {strides = array<i32>} : memref<1x1x16xf32, #tpu.memory_space<vmem>>, vector<1x1x16xf32>,
    %668 = vector.shape_cast %613 : vector<1x8xf32> to vector<1x8x1xf32>
    %669 = vector.broadcast %668 : vector<1x8x1xf32> to vector<1x8x256xf32>
    %670 = arith.addf %0, %669 : vector<1x8x256xf32>
    %671 = vector.extract_strided_slice %10 {offsets = [9, 0, 0], sizes = [1, 9, 16], strides = [1, 1, 1]} : vector<13x9x16xf32> to vector<1x9x16xf32>
    %672 = vector.shape_cast %671 : vector<1x9x16xf32> to vector<9x16xf32>
    %673 = vector.extract_strided_slice %672 {offsets = [0, 0], sizes = [8, 8], strides = [1, 1]} : vector<9x16xf32> to vector<8x8xf32>
    %674 = vector.extract_strided_slice %672 {offsets = [8, 0], sizes = [1, 8], strides = [1, 1]} : vector<9x16xf32> to vector<1x8xf32>
    %cst_66 = arith.constant 5.000000e-01 : f32
    %675 = vector.broadcast %cst_66 : f32 to vector<1x8x256xf32>
    %676 = arith.mulf %675, %670 : vector<1x8x256xf32>
    %cst_67 = arith.constant 0.707106769 : f32
    %677 = vector.broadcast %cst_67 : f32 to vector<1x8x256xf32>
    %678 = arith.mulf %670, %677 : vector<1x8x256xf32>
    %679 = math.erf %678 : vector<1x8x256xf32>
    %cst_68 = arith.constant 1.000000e+00 : f32
    %680 = vector.broadcast %cst_68 : f32 to vector<1x8x256xf32>
    %681 = arith.addf %680, %679 : vector<1x8x256xf32>
    %682 = arith.mulf %676, %681 : vector<1x8x256xf32>
    %cst_69 = arith.constant 0.000000e+00 : f32
    %683 = vector.broadcast %cst_69 : f32 to vector<1x8x256xf32>
    %684 = vector.extract_strided_slice %682 {offsets = [0, 0, 0], sizes = [1, 1, 256], strides = [1, 1, 1]} : vector<1x8x256xf32> to vector<1x1x256xf32>
    %685 = vector.extract_strided_slice %673 {offsets = [0, 0], sizes = [1, 8], strides = [1, 1]} : vector<8x8xf32> to vector<1x8xf32>
    %686 = vector.shape_cast %685 : vector<1x8xf32> to vector<8xf32>
    %687 = vector.shape_cast %686 : vector<8xf32> to vector<1x8x1xf32>
    %688 = vector.broadcast %684 : vector<1x1x256xf32> to vector<1x8x256xf32>
    %689 = vector.broadcast %687 : vector<1x8x1xf32> to vector<1x8x256xf32>
    %690 = arith.mulf %688, %689 : vector<1x8x256xf32>
    %691 = arith.addf %683, %690 : vector<1x8x256xf32>
    %692 = vector.extract_strided_slice %682 {offsets = [0, 1, 0], sizes = [1, 1, 256], strides = [1, 1, 1]} : vector<1x8x256xf32> to vector<1x1x256xf32>
    %693 = vector.extract_strided_slice %673 {offsets = [1, 0], sizes = [1, 8], strides = [1, 1]} : vector<8x8xf32> to vector<1x8xf32>
    %694 = vector.shape_cast %693 : vector<1x8xf32> to vector<8xf32>
    %695 = vector.shape_cast %694 : vector<8xf32> to vector<1x8x1xf32>
    %696 = vector.broadcast %692 : vector<1x1x256xf32> to vector<1x8x256xf32>
    %697 = vector.broadcast %695 : vector<1x8x1xf32> to vector<1x8x256xf32>
    %698 = arith.mulf %696, %697 : vector<1x8x256xf32>
    %699 = arith.addf %691, %698 : vector<1x8x256xf32>
    %700 = vector.extract_strided_slice %682 {offsets = [0, 2, 0], sizes = [1, 1, 256], strides = [1, 1, 1]} : vector<1x8x256xf32> to vector<1x1x256xf32>
    %701 = vector.extract_strided_slice %673 {offsets = [2, 0], sizes = [1, 8], strides = [1, 1]} : vector<8x8xf32> to vector<1x8xf32>
    %702 = vector.shape_cast %701 : vector<1x8xf32> to vector<8xf32>
    %703 = vector.shape_cast %702 : vector<8xf32> to vector<1x8x1xf32>
    %704 = vector.broadcast %700 : vector<1x1x256xf32> to vector<1x8x256xf32>
    %705 = vector.broadcast %703 : vector<1x8x1xf32> to vector<1x8x256xf32>
    %706 = arith.mulf %704, %705 : vector<1x8x256xf32>
    %707 = arith.addf %699, %706 : vector<1x8x256xf32>
    %708 = vector.extract_strided_slice %682 {offsets = [0, 3, 0], sizes = [1, 1, 256], strides = [1, 1, 1]} : vector<1x8x256xf32> to vector<1x1x256xf32>
    %709 = vector.extract_strided_slice %673 {offsets = [3, 0], sizes = [1, 8], strides = [1, 1]} : vector<8x8xf32> to vector<1x8xf32>
    %710 = vector.shape_cast %709 : vector<1x8xf32> to vector<8xf32>
    %711 = vector.shape_cast %710 : vector<8xf32> to vector<1x8x1xf32>
    %712 = vector.broadcast %708 : vector<1x1x256xf32> to vector<1x8x256xf32>
    %713 = vector.broadcast %711 : vector<1x8x1xf32> to vector<1x8x256xf32>
    %714 = arith.mulf %712, %713 : vector<1x8x256xf32>
    %715 = arith.addf %707, %714 : vector<1x8x256xf32>
    %716 = vector.extract_strided_slice %682 {offsets = [0, 4, 0], sizes = [1, 1, 256], strides = [1, 1, 1]} : vector<1x8x256xf32> to vector<1x1x256xf32>
    %717 = vector.extract_strided_slice %673 {offsets = [4, 0], sizes = [1, 8], strides = [1, 1]} : vector<8x8xf32> to vector<1x8xf32>
    %718 = vector.shape_cast %717 : vector<1x8xf32> to vector<8xf32>
    %719 = vector.shape_cast %718 : vector<8xf32> to vector<1x8x1xf32>
    %720 = vector.broadcast %716 : vector<1x1x256xf32> to vector<1x8x256xf32>
    %721 = vector.broadcast %719 : vector<1x8x1xf32> to vector<1x8x256xf32>
    %722 = arith.mulf %720, %721 : vector<1x8x256xf32>
    %723 = arith.addf %715, %722 : vector<1x8x256xf32>
    %724 = vector.extract_strided_slice %682 {offsets = [0, 5, 0], sizes = [1, 1, 256], strides = [1, 1, 1]} : vector<1x8x256xf32> to vector<1x1x256xf32>
    %725 = vector.extract_strided_slice %673 {offsets = [5, 0], sizes = [1, 8], strides = [1, 1]} : vector<8x8xf32> to vector<1x8xf32>
    %726 = vector.shape_cast %725 : vector<1x8xf32> to vector<8xf32>
    %727 = vector.shape_cast %726 : vector<8xf32> to vector<1x8x1xf32>
    %728 = vector.broadcast %724 : vector<1x1x256xf32> to vector<1x8x256xf32>
    %729 = vector.broadcast %727 : vector<1x8x1xf32> to vector<1x8x256xf32>
    %730 = arith.mulf %728, %729 : vector<1x8x256xf32>
    %731 = arith.addf %723, %730 : vector<1x8x256xf32>
    %732 = vector.extract_strided_slice %682 {offsets = [0, 6, 0], sizes = [1, 1, 256], strides = [1, 1, 1]} : vector<1x8x256xf32> to vector<1x1x256xf32>
    %733 = vector.extract_strided_slice %673 {offsets = [6, 0], sizes = [1, 8], strides = [1, 1]} : vector<8x8xf32> to vector<1x8xf32>
    %734 = vector.shape_cast %733 : vector<1x8xf32> to vector<8xf32>
    %735 = vector.shape_cast %734 : vector<8xf32> to vector<1x8x1xf32>
    %736 = vector.broadcast %732 : vector<1x1x256xf32> to vector<1x8x256xf32>
    %737 = vector.broadcast %735 : vector<1x8x1xf32> to vector<1x8x256xf32>
    %738 = arith.mulf %736, %737 : vector<1x8x256xf32>
    %739 = arith.addf %731, %738 : vector<1x8x256xf32>
    %740 = vector.extract_strided_slice %682 {offsets = [0, 7, 0], sizes = [1, 1, 256], strides = [1, 1, 1]} : vector<1x8x256xf32> to vector<1x1x256xf32>
    %741 = vector.extract_strided_slice %673 {offsets = [7, 0], sizes = [1, 8], strides = [1, 1]} : vector<8x8xf32> to vector<1x8xf32>
    %742 = vector.shape_cast %741 : vector<1x8xf32> to vector<8xf32>
    %743 = vector.shape_cast %742 : vector<8xf32> to vector<1x8x1xf32>
    %744 = vector.broadcast %740 : vector<1x1x256xf32> to vector<1x8x256xf32>
    %745 = vector.broadcast %743 : vector<1x8x1xf32> to vector<1x8x256xf32>
    %746 = arith.mulf %744, %745 : vector<1x8x256xf32>
    %747 = arith.addf %739, %746 : vector<1x8x256xf32>
    %748 = vector.shape_cast %674 : vector<1x8xf32> to vector<1x8x1xf32>
    %749 = vector.broadcast %748 : vector<1x8x1xf32> to vector<1x8x256xf32>
    %750 = arith.addf %747, %749 : vector<1x8x256xf32>
    %751 = vector.extract_strided_slice %10 {offsets = [10, 0, 0], sizes = [1, 9, 16], strides = [1, 1, 1]} : vector<13x9x16xf32> to vector<1x9x16xf32>
    %752 = vector.shape_cast %751 : vector<1x9x16xf32> to vector<9x16xf32>
    %753 = vector.extract_strided_slice %752 {offsets = [0, 0], sizes = [8, 8], strides = [1, 1]} : vector<9x16xf32> to vector<8x8xf32>
    %754 = vector.extract_strided_slice %752 {offsets = [8, 0], sizes = [1, 8], strides = [1, 1]} : vector<9x16xf32> to vector<1x8xf32>
    %cst_70 = arith.constant 5.000000e-01 : f32
    %755 = vector.broadcast %cst_70 : f32 to vector<1x8x256xf32>
    %756 = arith.mulf %755, %750 : vector<1x8x256xf32>
    %cst_71 = arith.constant 0.707106769 : f32
    %757 = vector.broadcast %cst_71 : f32 to vector<1x8x256xf32>
    %758 = arith.mulf %750, %757 : vector<1x8x256xf32>
    %759 = math.erf %758 : vector<1x8x256xf32>
    %cst_72 = arith.constant 1.000000e+00 : f32
    %760 = vector.broadcast %cst_72 : f32 to vector<1x8x256xf32>
    %761 = arith.addf %760, %759 : vector<1x8x256xf32>
    %762 = arith.mulf %756, %761 : vector<1x8x256xf32>
    %cst_73 = arith.constant 0.000000e+00 : f32
    %763 = vector.broadcast %cst_73 : f32 to vector<1x8x256xf32>
    %764 = vector.extract_strided_slice %762 {offsets = [0, 0, 0], sizes = [1, 1, 256], strides = [1, 1, 1]} : vector<1x8x256xf32> to vector<1x1x256xf32>
    %765 = vector.extract_strided_slice %753 {offsets = [0, 0], sizes = [1, 8], strides = [1, 1]} : vector<8x8xf32> to vector<1x8xf32>
    %766 = vector.shape_cast %765 : vector<1x8xf32> to vector<8xf32>
    %767 = vector.shape_cast %766 : vector<8xf32> to vector<1x8x1xf32>
    %768 = vector.broadcast %764 : vector<1x1x256xf32> to vector<1x8x256xf32>
    %769 = vector.broadcast %767 : vector<1x8x1xf32> to vector<1x8x256xf32>
    %770 = arith.mulf %768, %769 : vector<1x8x256xf32>
    %771 = arith.addf %763, %770 : vector<1x8x256xf32>
    %772 = vector.extract_strided_slice %762 {offsets = [0, 1, 0], sizes = [1, 1, 256], strides = [1, 1, 1]} : vector<1x8x256xf32> to vector<1x1x256xf32>
    %773 = vector.extract_strided_slice %753 {offsets = [1, 0], sizes = [1, 8], strides = [1, 1]} : vector<8x8xf32> to vector<1x8xf32>
    %774 = vector.shape_cast %773 : vector<1x8xf32> to vector<8xf32>
    %775 = vector.shape_cast %774 : vector<8xf32> to vector<1x8x1xf32>
    %776 = vector.broadcast %772 : vector<1x1x256xf32> to vector<1x8x256xf32>
    %777 = vector.broadcast %775 : vector<1x8x1xf32> to vector<1x8x256xf32>
    %778 = arith.mulf %776, %777 : vector<1x8x256xf32>
    %779 = arith.addf %771, %778 : vector<1x8x256xf32>
    %780 = vector.extract_strided_slice %762 {offsets = [0, 2, 0], sizes = [1, 1, 256], strides = [1, 1, 1]} : vector<1x8x256xf32> to vector<1x1x256xf32>
    %781 = vector.extract_strided_slice %753 {offsets = [2, 0], sizes = [1, 8], strides = [1, 1]} : vector<8x8xf32> to vector<1x8xf32>
    %782 = vector.shape_cast %781 : vector<1x8xf32> to vector<8xf32>
    %783 = vector.shape_cast %782 : vector<8xf32> to vector<1x8x1xf32>
    %784 = vector.broadcast %780 : vector<1x1x256xf32> to vector<1x8x256xf32>
    %785 = vector.broadcast %783 : vector<1x8x1xf32> to vector<1x8x256xf32>
    %786 = arith.mulf %784, %785 : vector<1x8x256xf32>
    %787 = arith.addf %779, %786 : vector<1x8x256xf32>
    %788 = vector.extract_strided_slice %762 {offsets = [0, 3, 0], sizes = [1, 1, 256], strides = [1, 1, 1]} : vector<1x8x256xf32> to vector<1x1x256xf32>
    %789 = vector.extract_strided_slice %753 {offsets = [3, 0], sizes = [1, 8], strides = [1, 1]} : vector<8x8xf32> to vector<1x8xf32>
    %790 = vector.shape_cast %789 : vector<1x8xf32> to vector<8xf32>
    %791 = vector.shape_cast %790 : vector<8xf32> to vector<1x8x1xf32>
    %792 = vector.broadcast %788 : vector<1x1x256xf32> to vector<1x8x256xf32>
    %793 = vector.broadcast %791 : vector<1x8x1xf32> to vector<1x8x256xf32>
    %794 = arith.mulf %792, %793 : vector<1x8x256xf32>
    %795 = arith.addf %787, %794 : vector<1x8x256xf32>
    %796 = vector.extract_strided_slice %762 {offsets = [0, 4, 0], sizes = [1, 1, 256], strides = [1, 1, 1]} : vector<1x8x256xf32> to vector<1x1x256xf32>
    %797 = vector.extract_strided_slice %753 {offsets = [4, 0], sizes = [1, 8], strides = [1, 1]} : vector<8x8xf32> to vector<1x8xf32>
    %798 = vector.shape_cast %797 : vector<1x8xf32> to vector<8xf32>
    %799 = vector.shape_cast %798 : vector<8xf32> to vector<1x8x1xf32>
    %800 = vector.broadcast %796 : vector<1x1x256xf32> to vector<1x8x256xf32>
    %801 = vector.broadcast %799 : vector<1x8x1xf32> to vector<1x8x256xf32>
    %802 = arith.mulf %800, %801 : vector<1x8x256xf32>
    %803 = arith.addf %795, %802 : vector<1x8x256xf32>
    %804 = vector.extract_strided_slice %762 {offsets = [0, 5, 0], sizes = [1, 1, 256], strides = [1, 1, 1]} : vector<1x8x256xf32> to vector<1x1x256xf32>
    %805 = vector.extract_strided_slice %753 {offsets = [5, 0], sizes = [1, 8], strides = [1, 1]} : vector<8x8xf32> to vector<1x8xf32>
    %806 = vector.shape_cast %805 : vector<1x8xf32> to vector<8xf32>
    %807 = vector.shape_cast %806 : vector<8xf32> to vector<1x8x1xf32>
    %808 = vector.broadcast %804 : vector<1x1x256xf32> to vector<1x8x256xf32>
    %809 = vector.broadcast %807 : vector<1x8x1xf32> to vector<1x8x256xf32>
    %810 = arith.mulf %808, %809 : vector<1x8x256xf32>
    %811 = arith.addf %803, %810 : vector<1x8x256xf32>
    %812 = vector.extract_strided_slice %762 {offsets = [0, 6, 0], sizes = [1, 1, 256], strides = [1, 1, 1]} : vector<1x8x256xf32> to vector<1x1x256xf32>
    %813 = vector.extract_strided_slice %753 {offsets = [6, 0], sizes = [1, 8], strides = [1, 1]} : vector<8x8xf32> to vector<1x8xf32>
    %814 = vector.shape_cast %813 : vector<1x8xf32> to vector<8xf32>
    %815 = vector.shape_cast %814 : vector<8xf32> to vector<1x8x1xf32>
    %816 = vector.broadcast %812 : vector<1x1x256xf32> to vector<1x8x256xf32>
    %817 = vector.broadcast %815 : vector<1x8x1xf32> to vector<1x8x256xf32>
    %818 = arith.mulf %816, %817 : vector<1x8x256xf32>
    %819 = arith.addf %811, %818 : vector<1x8x256xf32>
    %820 = vector.extract_strided_slice %762 {offsets = [0, 7, 0], sizes = [1, 1, 256], strides = [1, 1, 1]} : vector<1x8x256xf32> to vector<1x1x256xf32>
    %821 = vector.extract_strided_slice %753 {offsets = [7, 0], sizes = [1, 8], strides = [1, 1]} : vector<8x8xf32> to vector<1x8xf32>
    %822 = vector.shape_cast %821 : vector<1x8xf32> to vector<8xf32>
    %823 = vector.shape_cast %822 : vector<8xf32> to vector<1x8x1xf32>
    %824 = vector.broadcast %820 : vector<1x1x256xf32> to vector<1x8x256xf32>
    %825 = vector.broadcast %823 : vector<1x8x1xf32> to vector<1x8x256xf32>
    %826 = arith.mulf %824, %825 : vector<1x8x256xf32>
    %827 = arith.addf %819, %826 : vector<1x8x256xf32>
    %828 = vector.shape_cast %754 : vector<1x8xf32> to vector<1x8x1xf32>
    %829 = vector.broadcast %828 : vector<1x8x1xf32> to vector<1x8x256xf32>
    %830 = arith.addf %827, %829 : vector<1x8x256xf32>
    %831 = vector.extract_strided_slice %10 {offsets = [11, 0, 0], sizes = [1, 9, 16], strides = [1, 1, 1]} : vector<13x9x16xf32> to vector<1x9x16xf32>
    %832 = vector.shape_cast %831 : vector<1x9x16xf32> to vector<9x16xf32>
    %833 = vector.extract_strided_slice %832 {offsets = [0, 0], sizes = [8, 8], strides = [1, 1]} : vector<9x16xf32> to vector<8x8xf32>
    %834 = vector.extract_strided_slice %832 {offsets = [8, 0], sizes = [1, 8], strides = [1, 1]} : vector<9x16xf32> to vector<1x8xf32>
    %cst_74 = arith.constant 5.000000e-01 : f32
    %835 = vector.broadcast %cst_74 : f32 to vector<1x8x256xf32>
    %836 = arith.mulf %835, %830 : vector<1x8x256xf32>
    %cst_75 = arith.constant 0.707106769 : f32
    %837 = vector.broadcast %cst_75 : f32 to vector<1x8x256xf32>
    %838 = arith.mulf %830, %837 : vector<1x8x256xf32>
    %839 = math.erf %838 : vector<1x8x256xf32>
    %cst_76 = arith.constant 1.000000e+00 : f32
    %840 = vector.broadcast %cst_76 : f32 to vector<1x8x256xf32>
    %841 = arith.addf %840, %839 : vector<1x8x256xf32>
    %842 = arith.mulf %836, %841 : vector<1x8x256xf32>
    %cst_77 = arith.constant 0.000000e+00 : f32
    %843 = vector.broadcast %cst_77 : f32 to vector<1x8x256xf32>
    %844 = vector.extract_strided_slice %842 {offsets = [0, 0, 0], sizes = [1, 1, 256], strides = [1, 1, 1]} : vector<1x8x256xf32> to vector<1x1x256xf32>
    %845 = vector.extract_strided_slice %833 {offsets = [0, 0], sizes = [1, 8], strides = [1, 1]} : vector<8x8xf32> to vector<1x8xf32>
    %846 = vector.shape_cast %845 : vector<1x8xf32> to vector<8xf32>
    %847 = vector.shape_cast %846 : vector<8xf32> to vector<1x8x1xf32>
    %848 = vector.broadcast %844 : vector<1x1x256xf32> to vector<1x8x256xf32>
    %849 = vector.broadcast %847 : vector<1x8x1xf32> to vector<1x8x256xf32>
    %850 = arith.mulf %848, %849 : vector<1x8x256xf32>
    %851 = arith.addf %843, %850 : vector<1x8x256xf32>
    %852 = vector.extract_strided_slice %842 {offsets = [0, 1, 0], sizes = [1, 1, 256], strides = [1, 1, 1]} : vector<1x8x256xf32> to vector<1x1x256xf32>
    %853 = vector.extract_strided_slice %833 {offsets = [1, 0], sizes = [1, 8], strides = [1, 1]} : vector<8x8xf32> to vector<1x8xf32>
    %854 = vector.shape_cast %853 : vector<1x8xf32> to vector<8xf32>
    %855 = vector.shape_cast %854 : vector<8xf32> to vector<1x8x1xf32>
    %856 = vector.broadcast %852 : vector<1x1x256xf32> to vector<1x8x256xf32>
    %857 = vector.broadcast %855 : vector<1x8x1xf32> to vector<1x8x256xf32>
    %858 = arith.mulf %856, %857 : vector<1x8x256xf32>
    %859 = arith.addf %851, %858 : vector<1x8x256xf32>
    %860 = vector.extract_strided_slice %842 {offsets = [0, 2, 0], sizes = [1, 1, 256], strides = [1, 1, 1]} : vector<1x8x256xf32> to vector<1x1x256xf32>
    %861 = vector.extract_strided_slice %833 {offsets = [2, 0], sizes = [1, 8], strides = [1, 1]} : vector<8x8xf32> to vector<1x8xf32>
    %862 = vector.shape_cast %861 : vector<1x8xf32> to vector<8xf32>
    %863 = vector.shape_cast %862 : vector<8xf32> to vector<1x8x1xf32>
    %864 = vector.broadcast %860 : vector<1x1x256xf32> to vector<1x8x256xf32>
    %865 = vector.broadcast %863 : vector<1x8x1xf32> to vector<1x8x256xf32>
    %866 = arith.mulf %864, %865 : vector<1x8x256xf32>
    %867 = arith.addf %859, %866 : vector<1x8x256xf32>
    %868 = vector.extract_strided_slice %842 {offsets = [0, 3, 0], sizes = [1, 1, 256], strides = [1, 1, 1]} : vector<1x8x256xf32> to vector<1x1x256xf32>
    %869 = vector.extract_strided_slice %833 {offsets = [3, 0], sizes = [1, 8], strides = [1, 1]} : vector<8x8xf32> to vector<1x8xf32>
    %870 = vector.shape_cast %869 : vector<1x8xf32> to vector<8xf32>
    %871 = vector.shape_cast %870 : vector<8xf32> to vector<1x8x1xf32>
    %872 = vector.broadcast %868 : vector<1x1x256xf32> to vector<1x8x256xf32>
    %873 = vector.broadcast %871 : vector<1x8x1xf32> to vector<1x8x256xf32>
    %874 = arith.mulf %872, %873 : vector<1x8x256xf32>
    %875 = arith.addf %867, %874 : vector<1x8x256xf32>
    %876 = vector.extract_strided_slice %842 {offsets = [0, 4, 0], sizes = [1, 1, 256], strides = [1, 1, 1]} : vector<1x8x256xf32> to vector<1x1x256xf32>
    %877 = vector.extract_strided_slice %833 {offsets = [4, 0], sizes = [1, 8], strides = [1, 1]} : vector<8x8xf32> to vector<1x8xf32>
    %878 = vector.shape_cast %877 : vector<1x8xf32> to vector<8xf32>
    %879 = vector.shape_cast %878 : vector<8xf32> to vector<1x8x1xf32>
    %880 = vector.broadcast %876 : vector<1x1x256xf32> to vector<1x8x256xf32>
    %881 = vector.broadcast %879 : vector<1x8x1xf32> to vector<1x8x256xf32>
    %882 = arith.mulf %880, %881 : vector<1x8x256xf32>
    %883 = arith.addf %875, %882 : vector<1x8x256xf32>
    %884 = vector.extract_strided_slice %842 {offsets = [0, 5, 0], sizes = [1, 1, 256], strides = [1, 1, 1]} : vector<1x8x256xf32> to vector<1x1x256xf32>
    %885 = vector.extract_strided_slice %833 {offsets = [5, 0], sizes = [1, 8], strides = [1, 1]} : vector<8x8xf32> to vector<1x8xf32>
    %886 = vector.shape_cast %885 : vector<1x8xf32> to vector<8xf32>
    %887 = vector.shape_cast %886 : vector<8xf32> to vector<1x8x1xf32>
    %888 = vector.broadcast %884 : vector<1x1x256xf32> to vector<1x8x256xf32>
    %889 = vector.broadcast %887 : vector<1x8x1xf32> to vector<1x8x256xf32>
    %890 = arith.mulf %888, %889 : vector<1x8x256xf32>
    %891 = arith.addf %883, %890 : vector<1x8x256xf32>
    %892 = vector.extract_strided_slice %842 {offsets = [0, 6, 0], sizes = [1, 1, 256], strides = [1, 1, 1]} : vector<1x8x256xf32> to vector<1x1x256xf32>
    %893 = vector.extract_strided_slice %833 {offsets = [6, 0], sizes = [1, 8], strides = [1, 1]} : vector<8x8xf32> to vector<1x8xf32>
    %894 = vector.shape_cast %893 : vector<1x8xf32> to vector<8xf32>
    %895 = vector.shape_cast %894 : vector<8xf32> to vector<1x8x1xf32>
    %896 = vector.broadcast %892 : vector<1x1x256xf32> to vector<1x8x256xf32>
    %897 = vector.broadcast %895 : vector<1x8x1xf32> to vector<1x8x256xf32>
    %898 = arith.mulf %896, %897 : vector<1x8x256xf32>
    %899 = arith.addf %891, %898 : vector<1x8x256xf32>
    %900 = vector.extract_strided_slice %842 {offsets = [0, 7, 0], sizes = [1, 1, 256], strides = [1, 1, 1]} : vector<1x8x256xf32> to vector<1x1x256xf32>
    %901 = vector.extract_strided_slice %833 {offsets = [7, 0], sizes = [1, 8], strides = [1, 1]} : vector<8x8xf32> to vector<1x8xf32>
    %902 = vector.shape_cast %901 : vector<1x8xf32> to vector<8xf32>
    %903 = vector.shape_cast %902 : vector<8xf32> to vector<1x8x1xf32>
    %904 = vector.broadcast %900 : vector<1x1x256xf32> to vector<1x8x256xf32>
    %905 = vector.broadcast %903 : vector<1x8x1xf32> to vector<1x8x256xf32>
    %906 = arith.mulf %904, %905 : vector<1x8x256xf32>
    %907 = arith.addf %899, %906 : vector<1x8x256xf32>
    %908 = vector.shape_cast %834 : vector<1x8xf32> to vector<1x8x1xf32>
    %909 = vector.broadcast %908 : vector<1x8x1xf32> to vector<1x8x256xf32>
    %910 = arith.addf %907, %909 : vector<1x8x256xf32>
    %911 = vector.extract_strided_slice %10 {offsets = [12, 0, 0], sizes = [1, 9, 16], strides = [1, 1, 1]} : vector<13x9x16xf32> to vector<1x9x16xf32>
    %912 = vector.shape_cast %911 : vector<1x9x16xf32> to vector<9x16xf32>
    %913 = vector.extract_strided_slice %912 {offsets = [0, 0], sizes = [8, 8], strides = [1, 1]} : vector<9x16xf32> to vector<8x8xf32>
    %914 = vector.extract_strided_slice %912 {offsets = [8, 0], sizes = [1, 8], strides = [1, 1]} : vector<9x16xf32> to vector<1x8xf32>
    %cst_78 = arith.constant 5.000000e-01 : f32
    %915 = vector.broadcast %cst_78 : f32 to vector<1x8x256xf32>
    %916 = arith.mulf %915, %910 : vector<1x8x256xf32>
    %cst_79 = arith.constant 0.707106769 : f32
    %917 = vector.broadcast %cst_79 : f32 to vector<1x8x256xf32>
    %918 = arith.mulf %910, %917 : vector<1x8x256xf32>
    %919 = math.erf %918 : vector<1x8x256xf32>
    %cst_80 = arith.constant 1.000000e+00 : f32
    %920 = vector.broadcast %cst_80 : f32 to vector<1x8x256xf32>
    %921 = arith.addf %920, %919 : vector<1x8x256xf32>
    %922 = arith.mulf %916, %921 : vector<1x8x256xf32>
    %cst_81 = arith.constant 0.000000e+00 : f32
    %923 = vector.broadcast %cst_81 : f32 to vector<1x8x256xf32>
    %924 = vector.extract_strided_slice %922 {offsets = [0, 0, 0], sizes = [1, 1, 256], strides = [1, 1, 1]} : vector<1x8x256xf32> to vector<1x1x256xf32>
    %925 = vector.extract_strided_slice %913 {offsets = [0, 0], sizes = [1, 8], strides = [1, 1]} : vector<8x8xf32> to vector<1x8xf32>
    %926 = vector.shape_cast %925 : vector<1x8xf32> to vector<8xf32>
    %927 = vector.shape_cast %926 : vector<8xf32> to vector<1x8x1xf32>
    %928 = vector.broadcast %924 : vector<1x1x256xf32> to vector<1x8x256xf32>
    %929 = vector.broadcast %927 : vector<1x8x1xf32> to vector<1x8x256xf32>
    %930 = arith.mulf %928, %929 : vector<1x8x256xf32>
    %931 = arith.addf %923, %930 : vector<1x8x256xf32>
    %932 = vector.extract_strided_slice %922 {offsets = [0, 1, 0], sizes = [1, 1, 256], strides = [1, 1, 1]} : vector<1x8x256xf32> to vector<1x1x256xf32>
    %933 = vector.extract_strided_slice %913 {offsets = [1, 0], sizes = [1, 8], strides = [1, 1]} : vector<8x8xf32> to vector<1x8xf32>
    %934 = vector.shape_cast %933 : vector<1x8xf32> to vector<8xf32>
    %935 = vector.shape_cast %934 : vector<8xf32> to vector<1x8x1xf32>
    %936 = vector.broadcast %932 : vector<1x1x256xf32> to vector<1x8x256xf32>
    %937 = vector.broadcast %935 : vector<1x8x1xf32> to vector<1x8x256xf32>
    %938 = arith.mulf %936, %937 : vector<1x8x256xf32>
    %939 = arith.addf %931, %938 : vector<1x8x256xf32>
    %940 = vector.extract_strided_slice %922 {offsets = [0, 2, 0], sizes = [1, 1, 256], strides = [1, 1, 1]} : vector<1x8x256xf32> to vector<1x1x256xf32>
    %941 = vector.extract_strided_slice %913 {offsets = [2, 0], sizes = [1, 8], strides = [1, 1]} : vector<8x8xf32> to vector<1x8xf32>
    %942 = vector.shape_cast %941 : vector<1x8xf32> to vector<8xf32>
    %943 = vector.shape_cast %942 : vector<8xf32> to vector<1x8x1xf32>
    %944 = vector.broadcast %940 : vector<1x1x256xf32> to vector<1x8x256xf32>
    %945 = vector.broadcast %943 : vector<1x8x1xf32> to vector<1x8x256xf32>
    %946 = arith.mulf %944, %945 : vector<1x8x256xf32>
    %947 = arith.addf %939, %946 : vector<1x8x256xf32>
    %948 = vector.extract_strided_slice %922 {offsets = [0, 3, 0], sizes = [1, 1, 256], strides = [1, 1, 1]} : vector<1x8x256xf32> to vector<1x1x256xf32>
    %949 = vector.extract_strided_slice %913 {offsets = [3, 0], sizes = [1, 8], strides = [1, 1]} : vector<8x8xf32> to vector<1x8xf32>
    %950 = vector.shape_cast %949 : vector<1x8xf32> to vector<8xf32>
    %951 = vector.shape_cast %950 : vector<8xf32> to vector<1x8x1xf32>
    %952 = vector.broadcast %948 : vector<1x1x256xf32> to vector<1x8x256xf32>
    %953 = vector.broadcast %951 : vector<1x8x1xf32> to vector<1x8x256xf32>
    %954 = arith.mulf %952, %953 : vector<1x8x256xf32>
    %955 = arith.addf %947, %954 : vector<1x8x256xf32>
    %956 = vector.extract_strided_slice %922 {offsets = [0, 4, 0], sizes = [1, 1, 256], strides = [1, 1, 1]} : vector<1x8x256xf32> to vector<1x1x256xf32>
    %957 = vector.extract_strided_slice %913 {offsets = [4, 0], sizes = [1, 8], strides = [1, 1]} : vector<8x8xf32> to vector<1x8xf32>
    %958 = vector.shape_cast %957 : vector<1x8xf32> to vector<8xf32>
    %959 = vector.shape_cast %958 : vector<8xf32> to vector<1x8x1xf32>
    %960 = vector.broadcast %956 : vector<1x1x256xf32> to vector<1x8x256xf32>
    %961 = vector.broadcast %959 : vector<1x8x1xf32> to vector<1x8x256xf32>
    %962 = arith.mulf %960, %961 : vector<1x8x256xf32>
    %963 = arith.addf %955, %962 : vector<1x8x256xf32>
    %964 = vector.extract_strided_slice %922 {offsets = [0, 5, 0], sizes = [1, 1, 256], strides = [1, 1, 1]} : vector<1x8x256xf32> to vector<1x1x256xf32>
    %965 = vector.extract_strided_slice %913 {offsets = [5, 0], sizes = [1, 8], strides = [1, 1]} : vector<8x8xf32> to vector<1x8xf32>
    %966 = vector.shape_cast %965 : vector<1x8xf32> to vector<8xf32>
    %967 = vector.shape_cast %966 : vector<8xf32> to vector<1x8x1xf32>
    %968 = vector.broadcast %964 : vector<1x1x256xf32> to vector<1x8x256xf32>
    %969 = vector.broadcast %967 : vector<1x8x1xf32> to vector<1x8x256xf32>
    %970 = arith.mulf %968, %969 : vector<1x8x256xf32>
    %971 = arith.addf %963, %970 : vector<1x8x256xf32>
    %972 = vector.extract_strided_slice %922 {offsets = [0, 6, 0], sizes = [1, 1, 256], strides = [1, 1, 1]} : vector<1x8x256xf32> to vector<1x1x256xf32>
    %973 = vector.extract_strided_slice %913 {offsets = [6, 0], sizes = [1, 8], strides = [1, 1]} : vector<8x8xf32> to vector<1x8xf32>
    %974 = vector.shape_cast %973 : vector<1x8xf32> to vector<8xf32>
    %975 = vector.shape_cast %974 : vector<8xf32> to vector<1x8x1xf32>
    %976 = vector.broadcast %972 : vector<1x1x256xf32> to vector<1x8x256xf32>
    %977 = vector.broadcast %975 : vector<1x8x1xf32> to vector<1x8x256xf32>
    %978 = arith.mulf %976, %977 : vector<1x8x256xf32>
    %979 = arith.addf %971, %978 : vector<1x8x256xf32>
    %980 = vector.extract_strided_slice %922 {offsets = [0, 7, 0], sizes = [1, 1, 256], strides = [1, 1, 1]} : vector<1x8x256xf32> to vector<1x1x256xf32>
    %981 = vector.extract_strided_slice %913 {offsets = [7, 0], sizes = [1, 8], strides = [1, 1]} : vector<8x8xf32> to vector<1x8xf32>
    %982 = vector.shape_cast %981 : vector<1x8xf32> to vector<8xf32>
    %983 = vector.shape_cast %982 : vector<8xf32> to vector<1x8x1xf32>
    %984 = vector.broadcast %980 : vector<1x1x256xf32> to vector<1x8x256xf32>
    %985 = vector.broadcast %983 : vector<1x8x1xf32> to vector<1x8x256xf32>
    %986 = arith.mulf %984, %985 : vector<1x8x256xf32>
    %987 = arith.addf %979, %986 : vector<1x8x256xf32>
    %988 = vector.shape_cast %914 : vector<1x8xf32> to vector<1x8x1xf32>
    %989 = vector.broadcast %988 : vector<1x8x1xf32> to vector<1x8x256xf32>
    %990 = arith.addf %987, %989 : vector<1x8x256xf32>
    %991 = arith.addf %670, %990 : vector<1x8x256xf32>
    %c0_82 = arith.constant 0 : index
    %c0_83 = arith.constant 0 : index
    %c0_84 = arith.constant 0 : index
    %992 = vector.load %arg5[%c0_82, %c0_83, %c0_84] : memref<1x8x256xf32, #tpu.memory_space<vmem>>, vector<1x8x256xf32>
    tpu.vector_store %arg5[%c0_82, %c0_83, %c0_84], %991 {strides = array<i32>} : memref<1x8x256xf32, #tpu.memory_space<vmem>>, vector<1x8x256xf32>,
    return
  }
  func.func @transform_0(%arg0: i32) -> (i32, i32, i32) {
    %c0_i32 = arith.constant 0 : i32
    %c0_i32_0 = arith.constant 0 : i32
    %c0_i32_1 = arith.constant 0 : i32
    return %arg0, %c0_i32, %c0_i32_0 : i32, i32, i32
  }
  func.func @transform_1(%arg0: i32) -> (i32, i32, i32) {
    %c0_i32 = arith.constant 0 : i32
    %c0_i32_0 = arith.constant 0 : i32
    %c0_i32_1 = arith.constant 0 : i32
    return %arg0, %c0_i32, %c0_i32_0 : i32, i32, i32
  }
  func.func @transform_2(%arg0: i32) -> (i32, i32, i32) {
    %c0_i32 = arith.constant 0 : i32
    %c0_i32_0 = arith.constant 0 : i32
    %c0_i32_1 = arith.constant 0 : i32
    return %arg0, %c0_i32, %c0_i32_0 : i32, i32, i32
  }
  func.func @transform_3(%arg0: i32) -> (i32, i32, i32) {
    %c0_i32 = arith.constant 0 : i32
    %c0_i32_0 = arith.constant 0 : i32
    %c0_i32_1 = arith.constant 0 : i32
    %c0_i32_2 = arith.constant 0 : i32
    return %c0_i32, %c0_i32_0, %c0_i32_1 : i32, i32, i32
  }
  func.func @transform_4(%arg0: i32) -> (i32, i32, i32) {
    %c0_i32 = arith.constant 0 : i32
    %c0_i32_0 = arith.constant 0 : i32
    %c0_i32_1 = arith.constant 0 : i32
    return %arg0, %c0_i32, %c0_i32_0 : i32, i32, i32
  }
  func.func @transform_5(%arg0: i32) -> (i32, i32, i32) {
    %c0_i32 = arith.constant 0 : i32
    %c0_i32_0 = arith.constant 0 : i32
    %c0_i32_1 = arith.constant 0 : i32
    return %arg0, %c0_i32, %c0_i32_0 : i32, i32, i32
  }
}

</mosaic_0001>

<llo_original>
// kernel: tpu_custom_call.1
$region0: #{tpu_custom_call.1}
  #allocation0 [shape = 'u32[]', space=smem, size = 0x4, offset = 0x4, fixed_abs, tag = 'smem constant byte address 0x4 - core index']
  #allocation1 [shape = 'u32[144,128]{1,0:T(1,128)}', space=vmem, size = 0x12000, scoped, tag = 'internal scratch']
  %s0 = inlined_call_operand.vmem [shape: f32[2,8,256], index: 0, kind: input, shape index: {}]
  %s1 = inlined_call_operand.vmem [shape: f32[2,8,256], index: 1, kind: input, shape index: {}]
  %s2 = inlined_call_operand.vmem [shape: f32[2,1,4], index: 2, kind: input, shape index: {}]
  %s3 = inlined_call_operand.vmem [shape: f32[13,9,16], index: 3, kind: input, shape index: {}]
  %s4 = inlined_call_operand.hbm [shape: f32[2,8,256], index: 4, kind: output, shape index: {0}]
  %s5 = inlined_call_operand.hbm [shape: f32[2,1,16], index: 5, kind: output, shape index: {1}]
  %6 = xla_tuple %s4, %s5
  %s7 = sld [smem:[#allocation0]]
  $region57: #{tpu_custom_call.1} parent=0
    _
  %s9 = ssub.s32 1, %s7
  %s10 = scalar_select 0, %s9, %s7
  $region1: #{tpu_custom_call.1} parent=0
    #allocation2 [shape = 'u8[16384]{0}', space=vmem, size = 0x4000, scoped, tag = 'output window, operand 0']
    #allocation3 [shape = 's32[2]{0}', space=sflag, size = 0x8, scoped, tag = 'scoped memory for tpu_custom_call.1']
    #allocation4 [shape = 'u8[1024]{0}', space=vmem, size = 0x400, scoped, tag = 'output window, operand 1']
    #allocation5 [shape = 's32[2]{0}', space=sflag, size = 0x8, scoped, tag = 'scoped memory for tpu_custom_call.1']
    %11 = vsyncpa [#allocation3], 0
    %s12 = scalar_lea.sflag [#allocation3], 1
    %13 = vsyncpa %s12, 0
    %14 = vsyncpa [#allocation5], 0
    %s15 = scalar_lea.sflag [#allocation5], 1
    %16 = vsyncpa %s15, 0
    loop: start=0, step=1, limit=4
    $region2: #{tpu_custom_call.1} parent=1 // loop_pre_header
      _
    $region3: #{tpu_custom_call.1} parent=1 // loop_header
      %s18 = sphi 0, %s22
      %p19 = scmp.ge.s32.totalorder %s18, 4
      %s28 = sphi 0, %s30
      %s31 = sphi 0, %s28
      %s32 = sphi 0, %s31
      %s48 = sphi 0, %s32
      %s54 = sphi 0, %s56
      %s57 = sphi 0, %s54
      %s58 = sphi 0, %s57
      %s74 = sphi 0, %s58
      %s80 = sphi 0, %s82
      %s83 = sphi 0, %s80
      %s84 = sphi 0, %s83
      %s100 = sphi 0, %s84
      %s104 = sphi 0, %s104
      %s106 = sphi 0, %s104
      %s107 = sphi 0, %s106
      %s121 = sphi 0, %s107
      %s127 = sphi 0, %s129
      %s130 = sphi 0, %s127
      %s131 = sphi 0, %s130
      %s147 = sphi 0, %s131
      %s153 = sphi 0, %s155
      %s156 = sphi 0, %s153
      %s157 = sphi 0, %s156
      %s173 = sphi 0, %s157
    $region4: #{tpu_custom_call.1} parent=1 // loop_header_branch
      %21 = sbr.rel (%p19) target = $region8
    $region5: #{tpu_custom_call.1} parent=1 // loop_body
      %s23 = ssub.s32 %s18, 1
      %s24 = ssub.s32 %s18, 2
      %s25 = sadd.s32 %s18, 1
      %s26 = ssub.s32 %s18, %s25
      %p27 = scmp.eq.s32.totalorder %s26, 0
      %s29 = sadd.s32 %s28, 1
      %s30 = scalar_select %p27, %s28, %s29
      %p33 = pneg %p27
      %p34 = scmp.eq.s32.totalorder %s18, 1
      %p35 = por %p33, %p34
      %p36 = scmp.ne.s32.totalorder %s28, %s31
      %p37 = scmp.eq.s32.totalorder %s18, 0
      %p38 = por %p36, %p37
      %p39 = scmp.ne.s32.totalorder %s28, %s31
      %p40 = scmp.eq.s32.totalorder %s23, 1
      %p41 = por %p39, %p40
      %p42 = scmp.ne.s32.totalorder %s31, %s32
      %p43 = scmp.eq.s32.totalorder %s23, 0
      %p44 = por %p42, %p43
      %p45 = scmp.ne.s32.totalorder %s31, %s32
      %p46 = scmp.eq.s32.totalorder %s24, 1
      %p47 = por %p45, %p46
      %p49 = scmp.ne.s32.totalorder %s32, %s48
      %p50 = scmp.eq.s32.totalorder %s24, 0
      %p51 = por %p49, %p50
      %s52 = ssub.s32 %s18, %s25
      %p53 = scmp.eq.s32.totalorder %s52, 0
      %s55 = sadd.s32 %s54, 1
      %s56 = scalar_select %p53, %s54, %s55
      %p59 = pneg %p53
      %p60 = scmp.eq.s32.totalorder %s18, 1
      %p61 = por %p59, %p60
      %p62 = scmp.ne.s32.totalorder %s54, %s57
      %p63 = scmp.eq.s32.totalorder %s18, 0
      %p64 = por %p62, %p63
      %p65 = scmp.ne.s32.totalorder %s54, %s57
      %p66 = scmp.eq.s32.totalorder %s23, 1
      %p67 = por %p65, %p66
      %p68 = scmp.ne.s32.totalorder %s57, %s58
      %p69 = scmp.eq.s32.totalorder %s23, 0
      %p70 = por %p68, %p69
      %p71 = scmp.ne.s32.totalorder %s57, %s58
      %p72 = scmp.eq.s32.totalorder %s24, 1
      %p73 = por %p71, %p72
      %p75 = scmp.ne.s32.totalorder %s58, %s74
      %p76 = scmp.eq.s32.totalorder %s24, 0
      %p77 = por %p75, %p76
      %s78 = ssub.s32 %s18, %s25
      %p79 = scmp.eq.s32.totalorder %s78, 0
      %s81 = sadd.s32 %s80, 1
      %s82 = scalar_select %p79, %s80, %s81
      %p85 = pneg %p79
      %p86 = scmp.eq.s32.totalorder %s18, 1
      %p87 = por %p85, %p86
      %p88 = scmp.ne.s32.totalorder %s80, %s83
      %p89 = scmp.eq.s32.totalorder %s18, 0
      %p90 = por %p88, %p89
      %p91 = scmp.ne.s32.totalorder %s80, %s83
      %p92 = scmp.eq.s32.totalorder %s23, 1
      %p93 = por %p91, %p92
      %p94 = scmp.ne.s32.totalorder %s83, %s84
      %p95 = scmp.eq.s32.totalorder %s23, 0
      %p96 = por %p94, %p95
      %p97 = scmp.ne.s32.totalorder %s83, %s84
      %p98 = scmp.eq.s32.totalorder %s24, 1
      %p99 = por %p97, %p98
      %p101 = scmp.ne.s32.totalorder %s84, %s100
      %p102 = scmp.eq.s32.totalorder %s24, 0
      %p103 = por %p101, %p102
      %s105 = sadd.s32 %s104, 1
      %p108 = scmp.eq.s32.totalorder %s18, 1
      %p109 = scmp.ne.s32.totalorder %s104, %s106
      %p110 = scmp.eq.s32.totalorder %s18, 0
      %p111 = por %p109, %p110
      %p112 = scmp.ne.s32.totalorder %s104, %s106
      %p113 = scmp.eq.s32.totalorder %s23, 1
      %p114 = por %p112, %p113
      %p115 = scmp.ne.s32.totalorder %s106, %s107
      %p116 = scmp.eq.s32.totalorder %s23, 0
      %p117 = por %p115, %p116
      %p118 = scmp.ne.s32.totalorder %s106, %s107
      %p119 = scmp.eq.s32.totalorder %s24, 1
      %p120 = por %p118, %p119
      %p122 = scmp.ne.s32.totalorder %s107, %s121
      %p123 = scmp.eq.s32.totalorder %s24, 0
      %p124 = por %p122, %p123
      %s125 = ssub.s32 %s18, %s25
      %p126 = scmp.eq.s32.totalorder %s125, 0
      %s128 = sadd.s32 %s127, 1
      %s129 = scalar_select %p126, %s127, %s128
      %p132 = pneg %p126
      %p133 = scmp.eq.s32.totalorder %s18, 1
      %p134 = por %p132, %p133
      %p135 = scmp.ne.s32.totalorder %s127, %s130
      %p136 = scmp.eq.s32.totalorder %s18, 0
      %p137 = por %p135, %p136
      %p138 = scmp.ne.s32.totalorder %s127, %s130
      %p139 = scmp.eq.s32.totalorder %s23, 1
      %p140 = por %p138, %p139
      %p141 = scmp.ne.s32.totalorder %s130, %s131
      %p142 = scmp.eq.s32.totalorder %s23, 0
      %p143 = por %p141, %p142
      %p144 = scmp.ne.s32.totalorder %s130, %s131
      %p145 = scmp.eq.s32.totalorder %s24, 1
      %p146 = por %p144, %p145
      %p148 = scmp.ne.s32.totalorder %s131, %s147
      %p149 = scmp.eq.s32.totalorder %s24, 0
      %p150 = por %p148, %p149
      %s151 = ssub.s32 %s18, %s25
      %p152 = scmp.eq.s32.totalorder %s151, 0
      %s154 = sadd.s32 %s153, 1
      %s155 = scalar_select %p152, %s153, %s154
      %p158 = pneg %p152
      %p159 = scmp.eq.s32.totalorder %s18, 1
      %p160 = por %p158, %p159
      %p161 = scmp.ne.s32.totalorder %s153, %s156
      %p162 = scmp.eq.s32.totalorder %s18, 0
      %p163 = por %p161, %p162
      %p164 = scmp.ne.s32.totalorder %s153, %s156
      %p165 = scmp.eq.s32.totalorder %s23, 1
      %p166 = por %p164, %p165
      %p167 = scmp.ne.s32.totalorder %s156, %s157
      %p168 = scmp.eq.s32.totalorder %s23, 0
      %p169 = por %p167, %p168
      %p170 = scmp.ne.s32.totalorder %s156, %s157
      %p171 = scmp.eq.s32.totalorder %s24, 1
      %p172 = por %p170, %p171
      %p174 = scmp.ne.s32.totalorder %s157, %s173
      %p175 = scmp.eq.s32.totalorder %s24, 0
      %p176 = por %p174, %p175
      %p177 = scmp.le.s32.totalorder 1, %s18
      %p178 = scmp.lt.s32.totalorder %s18, 3
      %p179 = pnand %p177, %p178
      %p180 = pneg %p179
      // Predicated region
      $region9: #{tpu_custom_call.1} parent=5 // pred_check
        _
      $region10: #{tpu_custom_call.1} parent=5 // pred_check_branch
        %182 = sbr.rel (%p179) target = $region12
      $region11: #{tpu_custom_call.1} parent=5 // pred_region
        %s183 = ssub.s32 %s18, 1
        // Predicated region
        $region13: #{tpu_custom_call.1} parent=11 // pred_check
          %p184 = pneg %p117
        $region14: #{tpu_custom_call.1} parent=11 // pred_check_branch
          %186 = sbr.rel (%p184) target = $region16
        $region15: #{tpu_custom_call.1} parent=11 // pred_region
          _
        $region16: #{tpu_custom_call.1} parent=11 // pred_fallthru
          _
      $region12: #{tpu_custom_call.1} parent=5 // pred_fallthru
        _
      %p187 = scmp.lt.s32.totalorder %s18, 2
      // Predicated region
      $region17: #{tpu_custom_call.1} parent=5 // pred_check
        %p188 = pneg %p187
      $region18: #{tpu_custom_call.1} parent=5 // pred_check_branch
        %190 = sbr.rel (%p188) target = $region20
      $region19: #{tpu_custom_call.1} parent=5 // pred_region
        // Predicated region
        $region21: #{tpu_custom_call.1} parent=19 // pred_check
          %p191 = pneg %p38
        $region22: #{tpu_custom_call.1} parent=19 // pred_check_branch
          %193 = sbr.rel (%p191) target = $region24
        $region23: #{tpu_custom_call.1} parent=19 // pred_region
          %p194 = scmp.lt.s32.totalorder %s18, 1
          %s195 = scalar_select %p194, %s18, 1
          %s196 = smul.addr %s195, 2
          %s197 = smul.addr %s196, 8
          %s198 = scalar_lea.vmem %s0, %s197
        $region24: #{tpu_custom_call.1} parent=19 // pred_fallthru
          _
        // Predicated region
        $region25: #{tpu_custom_call.1} parent=19 // pred_check
          %p199 = pneg %p64
        $region26: #{tpu_custom_call.1} parent=19 // pred_check_branch
          %201 = sbr.rel (%p199) target = $region28
        $region27: #{tpu_custom_call.1} parent=19 // pred_region
          %p202 = scmp.lt.s32.totalorder %s18, 1
          %s203 = scalar_select %p202, %s18, 1
          %s204 = smul.addr %s203, 2
          %s205 = smul.addr %s204, 8
          %s206 = scalar_lea.vmem %s1, %s205
        $region28: #{tpu_custom_call.1} parent=19 // pred_fallthru
          _
        // Predicated region
        $region29: #{tpu_custom_call.1} parent=19 // pred_check
          %p207 = pneg %p90
        $region30: #{tpu_custom_call.1} parent=19 // pred_check_branch
          %209 = sbr.rel (%p207) target = $region32
        $region31: #{tpu_custom_call.1} parent=19 // pred_region
          %p210 = scmp.lt.s32.totalorder %s18, 1
          %s211 = scalar_select %p210, %s18, 1
          %s212 = scalar_lea.vmem %s2, %s211
        $region32: #{tpu_custom_call.1} parent=19 // pred_fallthru
          _
      $region20: #{tpu_custom_call.1} parent=5 // pred_fallthru
        _
      %p213 = scmp.le.s32.totalorder 1, %s18
      %p214 = scmp.lt.s32.totalorder %s18, 3
      %p215 = pnand %p213, %p214
      %p216 = pneg %p215
      // Predicated region
      $region33: #{tpu_custom_call.1} parent=5 // pred_check
        _
      $region34: #{tpu_custom_call.1} parent=5 // pred_check_branch
        %218 = sbr.rel (%p215) target = $region36
      $region35: #{tpu_custom_call.1} parent=5 // pred_region
        %s219 = ssub.s32 %s18, 1
        %p220 = scmp.lt.s32.totalorder %s23, 1
        %s221 = scalar_select %p220, %s23, 1
        %s222 = smul.addr %s221, 2
        %s223 = smul.addr %s222, 8
        %s224 = scalar_lea.vmem %s0, %s223
        %p225 = pneg %p44
        %p226 = pneg %p41
        %p227 = scmp.lt.s32.totalorder %s23, 1
        %s228 = scalar_select %p227, %s23, 1
        %s229 = smul.addr %s228, 2
        %s230 = smul.addr %s229, 8
        %s231 = scalar_lea.vmem %s1, %s230
        %p232 = pneg %p70
        %p233 = pneg %p67
        %p234 = scmp.lt.s32.totalorder %s23, 1
        %s235 = scalar_select %p234, %s23, 1
        %s236 = scalar_lea.vmem %s2, %s235
        %p237 = pneg %p96
        %p238 = pneg %p93
        %p239 = pneg %p117
        %p240 = pneg %p114
        %p241 = pneg %p143
        %p242 = pneg %p140
        %s243 = sand.u32 %s130, 1
        %s244 = scalar_lea.sflag [#allocation3], %s243
        %s245 = sand.u32 %s130, 1
        %s246 = smul.addr %s245, 16
        %s247 = scalar_lea.vmem [#allocation2], %s246
        %p248 = pneg %p169
        %p249 = pneg %p166
        %s250 = sand.u32 %s156, 1
        %s251 = scalar_lea.sflag [#allocation5], %s250
        %s252 = sand.u32 %s156, 1
        %s253 = scalar_lea.vmem [#allocation4], %s252
        %p254 = scmp.lt.s32.totalorder %s23, 1
        %s255 = scalar_select %p254, %s23, 1
        %s256 = smul.addr %s255, 2
        %s257 = smul.addr %s256, 8
        %s258 = scalar_lea.vmem %s0, %s257
        %p259 = scmp.lt.s32.totalorder %s23, 1
        %s260 = scalar_select %p259, %s23, 1
        %s261 = smul.addr %s260, 2
        %s262 = smul.addr %s261, 8
        %s263 = scalar_lea.vmem %s1, %s262
        %p264 = scmp.lt.s32.totalorder %s23, 1
        %s265 = scalar_select %p264, %s23, 1
        %s266 = scalar_lea.vmem %s2, %s265
        %v267 = vld [vmem:[%s258] sm:$0xff]
        %v268 = vld [vmem:[%s258 + $0x8] sm:$0xff]
        %v269 = vadd.f32 %v267, %v268
        %270 = vadd.xlane.f32.xlu0 %v269
        %v271 = vpop.xlane.xlu0 %270
        %v272 = vrcp.pop 256.0
        %v273 = vmul.f32 %v271, %v272
        %v274 = vld [vmem:[%s263] sm:$0xff]
        %v275 = vld [vmem:[%s263 + $0x8] sm:$0xff]
        %v276 = vadd.f32 %v274, %v275
        %277 = vadd.xlane.f32.xlu0 %v276
        %v278 = vpop.xlane.xlu0 %277
        %v279 = vmul.f32 %v278, %v272
        %v280 = vld [vmem:[%s266] sm:$0x1]
        %v281 = vld [vmem:[%s3] sm:$0xff]
        %v282 = vld [vmem:[%s3 + $0x8] sm:$0x1]
        %v283 = vld [vmem:[%s3 + $0x10] sm:$0xff]
        %v284 = vld [vmem:[%s3 + $0x18] sm:$0x1]
        %v285 = vld [vmem:[%s3 + $0x20] sm:$0xff]
        %v286 = vld [vmem:[%s3 + $0x28] sm:$0x1]
        %v287 = vld [vmem:[%s3 + $0x30] sm:$0xff]
        %v288 = vld [vmem:[%s3 + $0x38] sm:$0x1]
        %v289 = vld [vmem:[%s3 + $0x40] sm:$0xff]
        %v290 = vld [vmem:[%s3 + $0x48] sm:$0x1]
        %v291 = vld [vmem:[%s3 + $0x50] sm:$0xff]
        %v292 = vld [vmem:[%s3 + $0x58] sm:$0x1]
        %v293 = vld [vmem:[%s3 + $0x60] sm:$0xff]
        %v294 = vld [vmem:[%s3 + $0x68] sm:$0x1]
        %v295 = vld [vmem:[%s3 + $0x70] sm:$0xff]
        %v296 = vld [vmem:[%s3 + $0x78] sm:$0x1]
        %v297 = vld [vmem:[%s3 + $0x80] sm:$0xff]
        %v298 = vld [vmem:[%s3 + $0x90] sm:$0xff]
        %v299 = vld [vmem:[%s3 + $0x98] sm:$0x1]
        %v300 = vld [vmem:[%s3 + $0xa0] sm:$0xff]
        %v301 = vld [vmem:[%s3 + $0xa8] sm:$0x1]
        %v302 = vld [vmem:[%s3 + $0xb0] sm:$0xff]
        %v303 = vld [vmem:[%s3 + $0xb8] sm:$0x1]
        %v304 = vld [vmem:[%s3 + $0xc0] sm:$0xff]
        %v305 = vld [vmem:[%s3 + $0xc8] sm:$0x1]
        %v306 = vmul.f32 %v273, 0.5
        %v307 = vmul.f32 %v273, 0.70710677
        %v308 = verf.f32.pop %v307
        %v309 = vadd.f32 %v308, 1.0
        %v310 = vmul.f32 %v306, %v309
        %v311 = vmul.f32 %v310, %v281
        %v312 = vadd.f32 %v311, 0.0
        %v314 = vrot.slane %v311, 1
        %v316 = vadd.f32 %v312, %v314
        %v317 = vrot.slane %v311, 2
        %v319 = vadd.f32 %v316, %v317
        %v320 = vrot.slane %v311, 3
        %v322 = vadd.f32 %v319, %v320
        %v323 = vrot.slane %v311, 4
        %v325 = vadd.f32 %v322, %v323
        %v326 = vrot.slane %v311, 5
        %v328 = vadd.f32 %v325, %v326
        %v329 = vrot.slane %v311, 6
        %v331 = vadd.f32 %v328, %v329
        %v332 = vrot.slane %v311, 7
        %v334 = vadd.f32 %v331, %v332
        %v335 = vadd.f32 %v334, %v282
        %v336 = vmul.f32 %v335, 0.5
        %v337 = vmul.f32 %v335, 0.70710677
        %v338 = verf.f32.pop %v337
        %v339 = vadd.f32 %v338, 1.0
        %v340 = vmul.f32 %v336, %v339
        %342 = vset.pattern.permute.xlu0 0
        %343 = vperm.xlu0 %342, %v340
        %v344 = vpop.permute.xlu0 %343
        %v346 = vmul.f32 %v344, %v283
        %v347 = vadd.f32 %v346, 0.0
        %348 = vset.pattern.permute.xlu0 1
        %349 = vperm.xlu0 %348, %v340
        %v350 = vpop.permute.xlu0 %349
        %v353 = vrot.slane %v283, 1
        %v355 = vmul.f32 %v350, %v353
        %v356 = vadd.f32 %v347, %v355
        %357 = vset.pattern.permute.xlu0 2
        %358 = vperm.xlu0 %357, %v340
        %v359 = vpop.permute.xlu0 %358
        %v361 = vrot.slane %v283, 2
        %v363 = vmul.f32 %v359, %v361
        %v364 = vadd.f32 %v356, %v363
        %365 = vset.pattern.permute.xlu0 3
        %366 = vperm.xlu0 %365, %v340
        %v367 = vpop.permute.xlu0 %366
        %v369 = vrot.slane %v283, 3
        %v371 = vmul.f32 %v367, %v369
        %v372 = vadd.f32 %v364, %v371
        %373 = vset.pattern.permute.xlu0 4
        %374 = vperm.xlu0 %373, %v340
        %v375 = vpop.permute.xlu0 %374
        %v377 = vrot.slane %v283, 4
        %v379 = vmul.f32 %v375, %v377
        %v380 = vadd.f32 %v372, %v379
        %381 = vset.pattern.permute.xlu0 5
        %382 = vperm.xlu0 %381, %v340
        %v383 = vpop.permute.xlu0 %382
        %v385 = vrot.slane %v283, 5
        %v387 = vmul.f32 %v383, %v385
        %v388 = vadd.f32 %v380, %v387
        %389 = vset.pattern.permute.xlu0 6
        %390 = vperm.xlu0 %389, %v340
        %v391 = vpop.permute.xlu0 %390
        %v393 = vrot.slane %v283, 6
        %v395 = vmul.f32 %v391, %v393
        %v396 = vadd.f32 %v388, %v395
        %397 = vset.pattern.permute.xlu0 7
        %398 = vperm.xlu0 %397, %v340
        %v399 = vpop.permute.xlu0 %398
        %v401 = vrot.slane %v283, 7
        %v403 = vmul.f32 %v399, %v401
        %v404 = vadd.f32 %v396, %v403
        %v405 = vadd.f32 %v404, %v284
        %v406 = vmul.f32 %v405, 0.5
        %v407 = vmul.f32 %v405, 0.70710677
        %v408 = verf.f32.pop %v407
        %v409 = vadd.f32 %v408, 1.0
        %v410 = vmul.f32 %v406, %v409
        %412 = vset.pattern.permute.xlu0 0
        %413 = vperm.xlu0 %412, %v410
        %v414 = vpop.permute.xlu0 %413
        %v416 = vmul.f32 %v414, %v285
        %v417 = vadd.f32 %v416, 0.0
        %418 = vset.pattern.permute.xlu0 1
        %419 = vperm.xlu0 %418, %v410
        %v420 = vpop.permute.xlu0 %419
        %v423 = vrot.slane %v285, 1
        %v425 = vmul.f32 %v420, %v423
        %v426 = vadd.f32 %v417, %v425
        %427 = vset.pattern.permute.xlu0 2
        %428 = vperm.xlu0 %427, %v410
        %v429 = vpop.permute.xlu0 %428
        %v431 = vrot.slane %v285, 2
        %v433 = vmul.f32 %v429, %v431
        %v434 = vadd.f32 %v426, %v433
        %435 = vset.pattern.permute.xlu0 3
        %436 = vperm.xlu0 %435, %v410
        %v437 = vpop.permute.xlu0 %436
        %v439 = vrot.slane %v285, 3
        %v441 = vmul.f32 %v437, %v439
        %v442 = vadd.f32 %v434, %v441
        %443 = vset.pattern.permute.xlu0 4
        %444 = vperm.xlu0 %443, %v410
        %v445 = vpop.permute.xlu0 %444
        %v447 = vrot.slane %v285, 4
        %v449 = vmul.f32 %v445, %v447
        %v450 = vadd.f32 %v442, %v449
        %451 = vset.pattern.permute.xlu0 5
        %452 = vperm.xlu0 %451, %v410
        %v453 = vpop.permute.xlu0 %452
        %v455 = vrot.slane %v285, 5
        %v457 = vmul.f32 %v453, %v455
        %v458 = vadd.f32 %v450, %v457
        %459 = vset.pattern.permute.xlu0 6
        %460 = vperm.xlu0 %459, %v410
        %v461 = vpop.permute.xlu0 %460
        %v463 = vrot.slane %v285, 6
        %v465 = vmul.f32 %v461, %v463
        %v466 = vadd.f32 %v458, %v465
        %467 = vset.pattern.permute.xlu0 7
        %468 = vperm.xlu0 %467, %v410
        %v469 = vpop.permute.xlu0 %468
        %v471 = vrot.slane %v285, 7
        %v473 = vmul.f32 %v469, %v471
        %v474 = vadd.f32 %v466, %v473
        %v475 = vadd.f32 %v474, %v286
        %v476 = vmul.f32 %v475, 0.5
        %v477 = vmul.f32 %v475, 0.70710677
        %v478 = verf.f32.pop %v477
        %v479 = vadd.f32 %v478, 1.0
        %v480 = vmul.f32 %v476, %v479
        %482 = vset.pattern.permute.xlu0 0
        %483 = vperm.xlu0 %482, %v480
        %v484 = vpop.permute.xlu0 %483
        %v486 = vmul.f32 %v484, %v287
        %v487 = vadd.f32 %v486, 0.0
        %488 = vset.pattern.permute.xlu0 1
        %489 = vperm.xlu0 %488, %v480
        %v490 = vpop.permute.xlu0 %489
        %v493 = vrot.slane %v287, 1
        %v495 = vmul.f32 %v490, %v493
        %v496 = vadd.f32 %v487, %v495
        %497 = vset.pattern.permute.xlu0 2
        %498 = vperm.xlu0 %497, %v480
        %v499 = vpop.permute.xlu0 %498
        %v501 = vrot.slane %v287, 2
        %v503 = vmul.f32 %v499, %v501
        %v504 = vadd.f32 %v496, %v503
        %505 = vset.pattern.permute.xlu0 3
        %506 = vperm.xlu0 %505, %v480
        %v507 = vpop.permute.xlu0 %506
        %v509 = vrot.slane %v287, 3
        %v511 = vmul.f32 %v507, %v509
        %v512 = vadd.f32 %v504, %v511
        %513 = vset.pattern.permute.xlu0 4
        %514 = vperm.xlu0 %513, %v480
        %v515 = vpop.permute.xlu0 %514
        %v517 = vrot.slane %v287, 4
        %v519 = vmul.f32 %v515, %v517
        %v520 = vadd.f32 %v512, %v519
        %521 = vset.pattern.permute.xlu0 5
        %522 = vperm.xlu0 %521, %v480
        %v523 = vpop.permute.xlu0 %522
        %v525 = vrot.slane %v287, 5
        %v527 = vmul.f32 %v523, %v525
        %v528 = vadd.f32 %v520, %v527
        %529 = vset.pattern.permute.xlu0 6
        %530 = vperm.xlu0 %529, %v480
        %v531 = vpop.permute.xlu0 %530
        %v533 = vrot.slane %v287, 6
        %v535 = vmul.f32 %v531, %v533
        %v536 = vadd.f32 %v528, %v535
        %537 = vset.pattern.permute.xlu0 7
        %538 = vperm.xlu0 %537, %v480
        %v539 = vpop.permute.xlu0 %538
        %v541 = vrot.slane %v287, 7
        %v543 = vmul.f32 %v539, %v541
        %v544 = vadd.f32 %v536, %v543
        %v545 = vadd.f32 %v544, %v288
        %v546 = vmul.f32 %v279, 0.5
        %v547 = vmul.f32 %v279, 0.70710677
        %v548 = verf.f32.pop %v547
        %v549 = vadd.f32 %v548, 1.0
        %v550 = vmul.f32 %v546, %v549
        %v551 = vmul.f32 %v550, %v289
        %v552 = vadd.f32 %v551, 0.0
        %v554 = vrot.slane %v551, 1
        %v556 = vadd.f32 %v552, %v554
        %v557 = vrot.slane %v551, 2
        %v559 = vadd.f32 %v556, %v557
        %v560 = vrot.slane %v551, 3
        %v562 = vadd.f32 %v559, %v560
        %v563 = vrot.slane %v551, 4
        %v565 = vadd.f32 %v562, %v563
        %v566 = vrot.slane %v551, 5
        %v568 = vadd.f32 %v565, %v566
        %v569 = vrot.slane %v551, 6
        %v571 = vadd.f32 %v568, %v569
        %v572 = vrot.slane %v551, 7
        %v574 = vadd.f32 %v571, %v572
        %v575 = vadd.f32 %v574, %v290
        %v576 = vmul.f32 %v575, 0.5
        %v577 = vmul.f32 %v575, 0.70710677
        %v578 = verf.f32.pop %v577
        %v579 = vadd.f32 %v578, 1.0
        %v580 = vmul.f32 %v576, %v579
        %582 = vset.pattern.permute.xlu0 0
        %583 = vperm.xlu0 %582, %v580
        %v584 = vpop.permute.xlu0 %583
        %v586 = vmul.f32 %v584, %v291
        %v587 = vadd.f32 %v586, 0.0
        %588 = vset.pattern.permute.xlu0 1
        %589 = vperm.xlu0 %588, %v580
        %v590 = vpop.permute.xlu0 %589
        %v593 = vrot.slane %v291, 1
        %v595 = vmul.f32 %v590, %v593
        %v596 = vadd.f32 %v587, %v595
        %597 = vset.pattern.permute.xlu0 2
        %598 = vperm.xlu0 %597, %v580
        %v599 = vpop.permute.xlu0 %598
        %v601 = vrot.slane %v291, 2
        %v603 = vmul.f32 %v599, %v601
        %v604 = vadd.f32 %v596, %v603
        %605 = vset.pattern.permute.xlu0 3
        %606 = vperm.xlu0 %605, %v580
        %v607 = vpop.permute.xlu0 %606
        %v609 = vrot.slane %v291, 3
        %v611 = vmul.f32 %v607, %v609
        %v612 = vadd.f32 %v604, %v611
        %613 = vset.pattern.permute.xlu0 4
        %614 = vperm.xlu0 %613, %v580
        %v615 = vpop.permute.xlu0 %614
        %v617 = vrot.slane %v291, 4
        %v619 = vmul.f32 %v615, %v617
        %v620 = vadd.f32 %v612, %v619
        %621 = vset.pattern.permute.xlu0 5
        %622 = vperm.xlu0 %621, %v580
        %v623 = vpop.permute.xlu0 %622
        %v625 = vrot.slane %v291, 5
        %v627 = vmul.f32 %v623, %v625
        %v628 = vadd.f32 %v620, %v627
        %629 = vset.pattern.permute.xlu0 6
        %630 = vperm.xlu0 %629, %v580
        %v631 = vpop.permute.xlu0 %630
        %v633 = vrot.slane %v291, 6
        %v635 = vmul.f32 %v631, %v633
        %v636 = vadd.f32 %v628, %v635
        %637 = vset.pattern.permute.xlu0 7
        %638 = vperm.xlu0 %637, %v580
        %v639 = vpop.permute.xlu0 %638
        %v641 = vrot.slane %v291, 7
        %v643 = vmul.f32 %v639, %v641
        %v644 = vadd.f32 %v636, %v643
        %v645 = vadd.f32 %v644, %v292
        %v646 = vmul.f32 %v645, 0.5
        %v647 = vmul.f32 %v645, 0.70710677
        %v648 = verf.f32.pop %v647
        %v649 = vadd.f32 %v648, 1.0
        %v650 = vmul.f32 %v646, %v649
        %652 = vset.pattern.permute.xlu0 0
        %653 = vperm.xlu0 %652, %v650
        %v654 = vpop.permute.xlu0 %653
        %v656 = vmul.f32 %v654, %v293
        %v657 = vadd.f32 %v656, 0.0
        %658 = vset.pattern.permute.xlu0 1
        %659 = vperm.xlu0 %658, %v650
        %v660 = vpop.permute.xlu0 %659
        %v663 = vrot.slane %v293, 1
        %v665 = vmul.f32 %v660, %v663
        %v666 = vadd.f32 %v657, %v665
        %667 = vset.pattern.permute.xlu0 2
        %668 = vperm.xlu0 %667, %v650
        %v669 = vpop.permute.xlu0 %668
        %v671 = vrot.slane %v293, 2
        %v673 = vmul.f32 %v669, %v671
        %v674 = vadd.f32 %v666, %v673
        %675 = vset.pattern.permute.xlu0 3
        %676 = vperm.xlu0 %675, %v650
        %v677 = vpop.permute.xlu0 %676
        %v679 = vrot.slane %v293, 3
        %v681 = vmul.f32 %v677, %v679
        %v682 = vadd.f32 %v674, %v681
        %683 = vset.pattern.permute.xlu0 4
        %684 = vperm.xlu0 %683, %v650
        %v685 = vpop.permute.xlu0 %684
        %v687 = vrot.slane %v293, 4
        %v689 = vmul.f32 %v685, %v687
        %v690 = vadd.f32 %v682, %v689
        %691 = vset.pattern.permute.xlu0 5
        %692 = vperm.xlu0 %691, %v650
        %v693 = vpop.permute.xlu0 %692
        %v695 = vrot.slane %v293, 5
        %v697 = vmul.f32 %v693, %v695
        %v698 = vadd.f32 %v690, %v697
        %699 = vset.pattern.permute.xlu0 6
        %700 = vperm.xlu0 %699, %v650
        %v701 = vpop.permute.xlu0 %700
        %v703 = vrot.slane %v293, 6
        %v705 = vmul.f32 %v701, %v703
        %v706 = vadd.f32 %v698, %v705
        %707 = vset.pattern.permute.xlu0 7
        %708 = vperm.xlu0 %707, %v650
        %v709 = vpop.permute.xlu0 %708
        %v711 = vrot.slane %v293, 7
        %v713 = vmul.f32 %v709, %v711
        %v714 = vadd.f32 %v706, %v713
        %v715 = vadd.f32 %v714, %v294
        %v716 = vmul.f32 %v715, 0.5
        %v717 = vmul.f32 %v715, 0.70710677
        %v718 = verf.f32.pop %v717
        %v719 = vadd.f32 %v718, 1.0
        %v720 = vmul.f32 %v716, %v719
        %722 = vset.pattern.permute.xlu0 0
        %723 = vperm.xlu0 %722, %v720
        %v724 = vpop.permute.xlu0 %723
        %v726 = vmul.f32 %v724, %v295
        %v727 = vadd.f32 %v726, 0.0
        %728 = vset.pattern.permute.xlu0 1
        %729 = vperm.xlu0 %728, %v720
        %v730 = vpop.permute.xlu0 %729
        %v733 = vrot.slane %v295, 1
        %v735 = vmul.f32 %v730, %v733
        %v736 = vadd.f32 %v727, %v735
        %737 = vset.pattern.permute.xlu0 2
        %738 = vperm.xlu0 %737, %v720
        %v739 = vpop.permute.xlu0 %738
        %v741 = vrot.slane %v295, 2
        %v743 = vmul.f32 %v739, %v741
        %v744 = vadd.f32 %v736, %v743
        %745 = vset.pattern.permute.xlu0 3
        %746 = vperm.xlu0 %745, %v720
        %v747 = vpop.permute.xlu0 %746
        %v749 = vrot.slane %v295, 3
        %v751 = vmul.f32 %v747, %v749
        %v752 = vadd.f32 %v744, %v751
        %753 = vset.pattern.permute.xlu0 4
        %754 = vperm.xlu0 %753, %v720
        %v755 = vpop.permute.xlu0 %754
        %v757 = vrot.slane %v295, 4
        %v759 = vmul.f32 %v755, %v757
        %v760 = vadd.f32 %v752, %v759
        %761 = vset.pattern.permute.xlu0 5
        %762 = vperm.xlu0 %761, %v720
        %v763 = vpop.permute.xlu0 %762
        %v765 = vrot.slane %v295, 5
        %v767 = vmul.f32 %v763, %v765
        %v768 = vadd.f32 %v760, %v767
        %769 = vset.pattern.permute.xlu0 6
        %770 = vperm.xlu0 %769, %v720
        %v771 = vpop.permute.xlu0 %770
        %v773 = vrot.slane %v295, 6
        %v775 = vmul.f32 %v771, %v773
        %v776 = vadd.f32 %v768, %v775
        %777 = vset.pattern.permute.xlu0 7
        %778 = vperm.xlu0 %777, %v720
        %v779 = vpop.permute.xlu0 %778
        %v781 = vrot.slane %v295, 7
        %v783 = vmul.f32 %v779, %v781
        %v784 = vadd.f32 %v776, %v783
        %v785 = vadd.f32 %v784, %v296
        %v786 = vmul.f32 %v545, 1.442695
        %v787 = vpow.pop %v786
        %v789 = vlaneseq
        %v790 = vshrl.u32 %v789, 7
        %v791 = vsub.s32 0, %v790
        %v792 = vrot.slane %v280, %v791
        %793 = vrot.lane.b32.xlu0 %v792, 4
        %v794 = vpop.permute.xlu0 %793
        %v796 = vmul.f32 %v787, %v794
        %798 = vrot.lane.b32.xlu0 %v545, 4
        %v799 = vpop.permute.xlu0 %798
        %v801 = vadd.f32 %v796, %v799
        %803 = vset.pattern.permute.xlu0 4
        %804 = vperm.xlu0 %803, %v801
        %v805 = vpop.permute.xlu0 %804
        %v807 = vmul.f32 %v805, %v297
        %v808 = vadd.f32 %v807, 0.0
        %809 = vset.pattern.permute.xlu0 5
        %810 = vperm.xlu0 %809, %v801
        %v811 = vpop.permute.xlu0 %810
        %v814 = vrot.slane %v297, 1
        %v816 = vmul.f32 %v811, %v814
        %v817 = vadd.f32 %v808, %v816
        %818 = vset.pattern.permute.xlu0 6
        %819 = vperm.xlu0 %818, %v801
        %v820 = vpop.permute.xlu0 %819
        %v822 = vrot.slane %v297, 2
        %v824 = vmul.f32 %v820, %v822
        %v825 = vadd.f32 %v817, %v824
        %826 = vset.pattern.permute.xlu0 7
        %827 = vperm.xlu0 %826, %v801
        %v828 = vpop.permute.xlu0 %827
        %v830 = vrot.slane %v297, 3
        %v832 = vmul.f32 %v828, %v830
        %v833 = vadd.f32 %v825, %v832
        %v834 = vrot.slane %v297, 4
        %v836 = vadd.f32 %v833, %v834
        %838 = vrot.lane.b32.xlu0 %v836, 8
        %v839 = vpop.permute.xlu0 %838
        %v841 = vadd.f32 %v785, %v839
        %v842 = vadd.f32 %v785, -0.5
        %v843 = vsub.f32 %v842, %v545
        %v844 = vsub.f32 %v545, %v785
        %v845 = vmul.f32 %v844, 2.0
        %v846 = vmul.f32 %v845, 1.442695
        %v847 = vpow.pop %v846
        %v848 = vmul.f32 %v844, %v844
        %v849 = vmul.f32 %v785, -2.0
        %v850 = vmul.f32 %v849, 1.442695
        %v851 = vpow.pop %v850
        %853 = vrot.lane.b32.xlu0 %v851, 124
        %v854 = vpop.permute.xlu0 %853
        %v856 = vmul.f32 %v848, %v854
        %858 = vrot.lane.b32.xlu0 %v856, 4
        %v859 = vpop.permute.xlu0 %858
        %v861 = vadd.f32 %v847, %v859
        %v862 = vmul.f32 %v861, 0.5
        %v863 = vadd.f32 %v843, %v862
        %v864 = vsub.f32 -0.5, %v545
        %v865 = vmul.f32 %v545, 2.0
        %v866 = vmul.f32 %v865, 1.442695
        %v867 = vpow.pop %v866
        %v868 = vmul.f32 %v545, %v545
        %870 = vrot.lane.b32.xlu0 %v868, 4
        %v871 = vpop.permute.xlu0 %870
        %v873 = vadd.f32 %v867, %v871
        %v874 = vmul.f32 %v873, 0.5
        %v875 = vadd.f32 %v864, %v874
        %v876 = vsub.f32 -0.5, %v785
        %v877 = vmul.f32 %v785, 2.0
        %v878 = vmul.f32 %v877, 1.442695
        %v879 = vpow.pop %v878
        %v880 = vmul.f32 %v785, %v785
        %882 = vrot.lane.b32.xlu0 %v880, 4
        %v883 = vpop.permute.xlu0 %882
        %v885 = vadd.f32 %v879, %v883
        %v886 = vmul.f32 %v885, 0.5
        %v887 = vadd.f32 %v876, %v886
        %888 = vrot.lane.b32.xlu0 %v801, 124
        %v889 = vpop.permute.xlu0 %888
        %892 = vrot.lane.b32.xlu0 %v875, 4
        %v893 = vpop.permute.xlu0 %892
        %896 = vrot.lane.b32.xlu0 %v887, 8
        %v897 = vpop.permute.xlu0 %896
        %vm899 = vcmask 31744
        %v900 = vsel %vm899, %v889, %v863
        %vm901 = vcmask 64512
        %v902 = vsel %vm901, %v900, %v893
        %vm903 = vcmask 97280
        %v904 = vsel %vm903, %v902, %v897
        %vm905 = vcmask 122880
        %906 = vst.msk [vmem:[%s253] sm:$0x1] %vm905, %v904
        %v907 = vlaneseq
        %v908 = vshrl.u32 %v907, 7
        %v909 = vsub.s32 0, %v908
        %v910 = vrot.slane %v841, %v909
        %s912 = sor.u32 256, 8
        %913 = vbcast.lane.b32.xlu0 %v910, %s912
        %v914 = vpop.permute.xlu0 %913
        %v915 = vadd.f32 %v267, %v914
        %v916 = vadd.f32 %v268, %v914
        %v917 = vmul.f32 %v915, 0.5
        %v918 = vmul.f32 %v916, 0.5
        %v919 = vmul.f32 %v915, 0.70710677
        %v920 = vmul.f32 %v916, 0.70710677
        %v921 = verf.f32.pop %v919
        %v922 = verf.f32.pop %v920
        %v923 = vadd.f32 %v921, 1.0
        %v924 = vadd.f32 %v922, 1.0
        %v925 = vmul.f32 %v917, %v923
        %v926 = vmul.f32 %v918, %v924
        %v927 = vlaneseq
        %v928 = vshrl.u32 %v927, 7
        %v929 = vsub.s32 0, %v928
        %v930 = vrot.slane %v298, %v929
        %932 = vbcast.lane.b32.xlu0 %v930, 256
        %v933 = vpop.permute.xlu0 %932
        %v934 = vlaneseq
        %v935 = vshrl.u32 %v934, 7
        %v936 = vsub.s32 0, %v935
        %v937 = vrot.slane %v925, %v936
        %v938 = vlaneseq
        %v939 = vshrl.u32 %v938, 7
        %v940 = vsub.s32 0, %v939
        %v941 = vrot.slane %v926, %v940
        %v942 = vmul.f32 %v937, %v933
        %v943 = vmul.f32 %v941, %v933
        %v944 = vadd.f32 %v942, 0.0
        %v945 = vadd.f32 %v943, 0.0
        %v946 = vlaneseq
        %v947 = vshrl.u32 %v946, 7
        %v948 = vsub.s32 1, %v947
        %v949 = vrot.slane %v298, %v948
        %951 = vbcast.lane.b32.xlu0 %v949, 256
        %v952 = vpop.permute.xlu0 %951
        %v953 = vlaneseq
        %v954 = vshrl.u32 %v953, 7
        %v955 = vsub.s32 1, %v954
        %v956 = vrot.slane %v925, %v955
        %v957 = vlaneseq
        %v958 = vshrl.u32 %v957, 7
        %v959 = vsub.s32 1, %v958
        %v960 = vrot.slane %v926, %v959
        %v961 = vmul.f32 %v956, %v952
        %v962 = vmul.f32 %v960, %v952
        %v963 = vadd.f32 %v944, %v961
        %v964 = vadd.f32 %v945, %v962
        %v965 = vlaneseq
        %v966 = vshrl.u32 %v965, 7
        %v967 = vsub.s32 2, %v966
        %v968 = vrot.slane %v298, %v967
        %970 = vbcast.lane.b32.xlu0 %v968, 256
        %v971 = vpop.permute.xlu0 %970
        %v972 = vlaneseq
        %v973 = vshrl.u32 %v972, 7
        %v974 = vsub.s32 2, %v973
        %v975 = vrot.slane %v925, %v974
        %v976 = vlaneseq
        %v977 = vshrl.u32 %v976, 7
        %v978 = vsub.s32 2, %v977
        %v979 = vrot.slane %v926, %v978
        %v980 = vmul.f32 %v975, %v971
        %v981 = vmul.f32 %v979, %v971
        %v982 = vadd.f32 %v963, %v980
        %v983 = vadd.f32 %v964, %v981
        %v984 = vlaneseq
        %v985 = vshrl.u32 %v984, 7
        %v986 = vsub.s32 3, %v985
        %v987 = vrot.slane %v298, %v986
        %989 = vbcast.lane.b32.xlu0 %v987, 256
        %v990 = vpop.permute.xlu0 %989
        %v991 = vlaneseq
        %v992 = vshrl.u32 %v991, 7
        %v993 = vsub.s32 3, %v992
        %v994 = vrot.slane %v925, %v993
        %v995 = vlaneseq
        %v996 = vshrl.u32 %v995, 7
        %v997 = vsub.s32 3, %v996
        %v998 = vrot.slane %v926, %v997
        %v999 = vmul.f32 %v994, %v990
        %v1000 = vmul.f32 %v998, %v990
        %v1001 = vadd.f32 %v982, %v999
        %v1002 = vadd.f32 %v983, %v1000
        %v1003 = vlaneseq
        %v1004 = vshrl.u32 %v1003, 7
        %v1005 = vsub.s32 4, %v1004
        %v1006 = vrot.slane %v298, %v1005
        %1008 = vbcast.lane.b32.xlu0 %v1006, 256
        %v1009 = vpop.permute.xlu0 %1008
        %v1010 = vlaneseq
        %v1011 = vshrl.u32 %v1010, 7
        %v1012 = vsub.s32 4, %v1011
        %v1013 = vrot.slane %v925, %v1012
        %v1014 = vlaneseq
        %v1015 = vshrl.u32 %v1014, 7
        %v1016 = vsub.s32 4, %v1015
        %v1017 = vrot.slane %v926, %v1016
        %v1018 = vmul.f32 %v1013, %v1009
        %v1019 = vmul.f32 %v1017, %v1009
        %v1020 = vadd.f32 %v1001, %v1018
        %v1021 = vadd.f32 %v1002, %v1019
        %v1022 = vlaneseq
        %v1023 = vshrl.u32 %v1022, 7
        %v1024 = vsub.s32 5, %v1023
        %v1025 = vrot.slane %v298, %v1024
        %1027 = vbcast.lane.b32.xlu0 %v1025, 256
        %v1028 = vpop.permute.xlu0 %1027
        %v1029 = vlaneseq
        %v1030 = vshrl.u32 %v1029, 7
        %v1031 = vsub.s32 5, %v1030
        %v1032 = vrot.slane %v925, %v1031
        %v1033 = vlaneseq
        %v1034 = vshrl.u32 %v1033, 7
        %v1035 = vsub.s32 5, %v1034
        %v1036 = vrot.slane %v926, %v1035
        %v1037 = vmul.f32 %v1032, %v1028
        %v1038 = vmul.f32 %v1036, %v1028
        %v1039 = vadd.f32 %v1020, %v1037
        %v1040 = vadd.f32 %v1021, %v1038
        %v1041 = vlaneseq
        %v1042 = vshrl.u32 %v1041, 7
        %v1043 = vsub.s32 6, %v1042
        %v1044 = vrot.slane %v298, %v1043
        %1046 = vbcast.lane.b32.xlu0 %v1044, 256
        %v1047 = vpop.permute.xlu0 %1046
        %v1048 = vlaneseq
        %v1049 = vshrl.u32 %v1048, 7
        %v1050 = vsub.s32 6, %v1049
        %v1051 = vrot.slane %v925, %v1050
        %v1052 = vlaneseq
        %v1053 = vshrl.u32 %v1052, 7
        %v1054 = vsub.s32 6, %v1053
        %v1055 = vrot.slane %v926, %v1054
        %v1056 = vmul.f32 %v1051, %v1047
        %v1057 = vmul.f32 %v1055, %v1047
        %v1058 = vadd.f32 %v1039, %v1056
        %v1059 = vadd.f32 %v1040, %v1057
        %v1060 = vlaneseq
        %v1061 = vshrl.u32 %v1060, 7
        %v1062 = vsub.s32 7, %v1061
        %v1063 = vrot.slane %v298, %v1062
        %1065 = vbcast.lane.b32.xlu0 %v1063, 256
        %v1066 = vpop.permute.xlu0 %1065
        %v1067 = vlaneseq
        %v1068 = vshrl.u32 %v1067, 7
        %v1069 = vsub.s32 7, %v1068
        %v1070 = vrot.slane %v925, %v1069
        %v1071 = vlaneseq
        %v1072 = vshrl.u32 %v1071, 7
        %v1073 = vsub.s32 7, %v1072
        %v1074 = vrot.slane %v926, %v1073
        %v1075 = vmul.f32 %v1070, %v1066
        %v1076 = vmul.f32 %v1074, %v1066
        %v1077 = vadd.f32 %v1058, %v1075
        %v1078 = vadd.f32 %v1059, %v1076
        %v1079 = vlaneseq
        %v1080 = vshrl.u32 %v1079, 7
        %v1081 = vsub.s32 0, %v1080
        %v1082 = vrot.slane %v299, %v1081
        %1084 = vbcast.lane.b32.xlu0 %v1082, 256
        %v1085 = vpop.permute.xlu0 %1084
        %v1086 = vadd.f32 %v1077, %v1085
        %v1087 = vadd.f32 %v1078, %v1085
        %v1088 = vmul.f32 %v1086, 0.5
        %v1089 = vmul.f32 %v1087, 0.5
        %v1090 = vmul.f32 %v1086, 0.70710677
        %v1091 = vmul.f32 %v1087, 0.70710677
        %v1092 = verf.f32.pop %v1090
        %v1093 = verf.f32.pop %v1091
        %v1094 = vadd.f32 %v1092, 1.0
        %v1095 = vadd.f32 %v1093, 1.0
        %v1096 = vmul.f32 %v1088, %v1094
        %v1097 = vmul.f32 %v1089, %v1095
        %v1098 = vlaneseq
        %v1099 = vshrl.u32 %v1098, 7
        %v1100 = vsub.s32 0, %v1099
        %v1101 = vrot.slane %v300, %v1100
        %1103 = vbcast.lane.b32.xlu0 %v1101, 256
        %v1104 = vpop.permute.xlu0 %1103
        %v1105 = vlaneseq
        %v1106 = vshrl.u32 %v1105, 7
        %v1107 = vsub.s32 0, %v1106
        %v1108 = vrot.slane %v1096, %v1107
        %v1109 = vlaneseq
        %v1110 = vshrl.u32 %v1109, 7
        %v1111 = vsub.s32 0, %v1110
        %v1112 = vrot.slane %v1097, %v1111
        %v1113 = vmul.f32 %v1108, %v1104
        %v1114 = vmul.f32 %v1112, %v1104
        %v1115 = vadd.f32 %v1113, 0.0
        %v1116 = vadd.f32 %v1114, 0.0
        %v1117 = vlaneseq
        %v1118 = vshrl.u32 %v1117, 7
        %v1119 = vsub.s32 1, %v1118
        %v1120 = vrot.slane %v300, %v1119
        %1122 = vbcast.lane.b32.xlu0 %v1120, 256
        %v1123 = vpop.permute.xlu0 %1122
        %v1124 = vlaneseq
        %v1125 = vshrl.u32 %v1124, 7
        %v1126 = vsub.s32 1, %v1125
        %v1127 = vrot.slane %v1096, %v1126
        %v1128 = vlaneseq
        %v1129 = vshrl.u32 %v1128, 7
        %v1130 = vsub.s32 1, %v1129
        %v1131 = vrot.slane %v1097, %v1130
        %v1132 = vmul.f32 %v1127, %v1123
        %v1133 = vmul.f32 %v1131, %v1123
        %v1134 = vadd.f32 %v1115, %v1132
        %v1135 = vadd.f32 %v1116, %v1133
        %v1136 = vlaneseq
        %v1137 = vshrl.u32 %v1136, 7
        %v1138 = vsub.s32 2, %v1137
        %v1139 = vrot.slane %v300, %v1138
        %1141 = vbcast.lane.b32.xlu0 %v1139, 256
        %v1142 = vpop.permute.xlu0 %1141
        %v1143 = vlaneseq
        %v1144 = vshrl.u32 %v1143, 7
        %v1145 = vsub.s32 2, %v1144
        %v1146 = vrot.slane %v1096, %v1145
        %v1147 = vlaneseq
        %v1148 = vshrl.u32 %v1147, 7
        %v1149 = vsub.s32 2, %v1148
        %v1150 = vrot.slane %v1097, %v1149
        %v1151 = vmul.f32 %v1146, %v1142
        %v1152 = vmul.f32 %v1150, %v1142
        %v1153 = vadd.f32 %v1134, %v1151
        %v1154 = vadd.f32 %v1135, %v1152
        %v1155 = vlaneseq
        %v1156 = vshrl.u32 %v1155, 7
        %v1157 = vsub.s32 3, %v1156
        %v1158 = vrot.slane %v300, %v1157
        %1160 = vbcast.lane.b32.xlu0 %v1158, 256
        %v1161 = vpop.permute.xlu0 %1160
        %v1162 = vlaneseq
        %v1163 = vshrl.u32 %v1162, 7
        %v1164 = vsub.s32 3, %v1163
        %v1165 = vrot.slane %v1096, %v1164
        %v1166 = vlaneseq
        %v1167 = vshrl.u32 %v1166, 7
        %v1168 = vsub.s32 3, %v1167
        %v1169 = vrot.slane %v1097, %v1168
        %v1170 = vmul.f32 %v1165, %v1161
        %v1171 = vmul.f32 %v1169, %v1161
        %v1172 = vadd.f32 %v1153, %v1170
        %v1173 = vadd.f32 %v1154, %v1171
        %v1174 = vlaneseq
        %v1175 = vshrl.u32 %v1174, 7
        %v1176 = vsub.s32 4, %v1175
        %v1177 = vrot.slane %v300, %v1176
        %1179 = vbcast.lane.b32.xlu0 %v1177, 256
        %v1180 = vpop.permute.xlu0 %1179
        %v1181 = vlaneseq
        %v1182 = vshrl.u32 %v1181, 7
        %v1183 = vsub.s32 4, %v1182
        %v1184 = vrot.slane %v1096, %v1183
        %v1185 = vlaneseq
        %v1186 = vshrl.u32 %v1185, 7
        %v1187 = vsub.s32 4, %v1186
        %v1188 = vrot.slane %v1097, %v1187
        %v1189 = vmul.f32 %v1184, %v1180
        %v1190 = vmul.f32 %v1188, %v1180
        %v1191 = vadd.f32 %v1172, %v1189
        %v1192 = vadd.f32 %v1173, %v1190
        %v1193 = vlaneseq
        %v1194 = vshrl.u32 %v1193, 7
        %v1195 = vsub.s32 5, %v1194
        %v1196 = vrot.slane %v300, %v1195
        %1198 = vbcast.lane.b32.xlu0 %v1196, 256
        %v1199 = vpop.permute.xlu0 %1198
        %v1200 = vlaneseq
        %v1201 = vshrl.u32 %v1200, 7
        %v1202 = vsub.s32 5, %v1201
        %v1203 = vrot.slane %v1096, %v1202
        %v1204 = vlaneseq
        %v1205 = vshrl.u32 %v1204, 7
        %v1206 = vsub.s32 5, %v1205
        %v1207 = vrot.slane %v1097, %v1206
        %v1208 = vmul.f32 %v1203, %v1199
        %v1209 = vmul.f32 %v1207, %v1199
        %v1210 = vadd.f32 %v1191, %v1208
        %v1211 = vadd.f32 %v1192, %v1209
        %v1212 = vlaneseq
        %v1213 = vshrl.u32 %v1212, 7
        %v1214 = vsub.s32 6, %v1213
        %v1215 = vrot.slane %v300, %v1214
        %1217 = vbcast.lane.b32.xlu0 %v1215, 256
        %v1218 = vpop.permute.xlu0 %1217
        %v1219 = vlaneseq
        %v1220 = vshrl.u32 %v1219, 7
        %v1221 = vsub.s32 6, %v1220
        %v1222 = vrot.slane %v1096, %v1221
        %v1223 = vlaneseq
        %v1224 = vshrl.u32 %v1223, 7
        %v1225 = vsub.s32 6, %v1224
        %v1226 = vrot.slane %v1097, %v1225
        %v1227 = vmul.f32 %v1222, %v1218
        %v1228 = vmul.f32 %v1226, %v1218
        %v1229 = vadd.f32 %v1210, %v1227
        %v1230 = vadd.f32 %v1211, %v1228
        %v1231 = vlaneseq
        %v1232 = vshrl.u32 %v1231, 7
        %v1233 = vsub.s32 7, %v1232
        %v1234 = vrot.slane %v300, %v1233
        %1236 = vbcast.lane.b32.xlu0 %v1234, 256
        %v1237 = vpop.permute.xlu0 %1236
        %v1238 = vlaneseq
        %v1239 = vshrl.u32 %v1238, 7
        %v1240 = vsub.s32 7, %v1239
        %v1241 = vrot.slane %v1096, %v1240
        %v1242 = vlaneseq
        %v1243 = vshrl.u32 %v1242, 7
        %v1244 = vsub.s32 7, %v1243
        %v1245 = vrot.slane %v1097, %v1244
        %v1246 = vmul.f32 %v1241, %v1237
        %v1247 = vmul.f32 %v1245, %v1237
        %v1248 = vadd.f32 %v1229, %v1246
        %v1249 = vadd.f32 %v1230, %v1247
        %v1250 = vlaneseq
        %v1251 = vshrl.u32 %v1250, 7
        %v1252 = vsub.s32 0, %v1251
        %v1253 = vrot.slane %v301, %v1252
        %1255 = vbcast.lane.b32.xlu0 %v1253, 256
        %v1256 = vpop.permute.xlu0 %1255
        %v1257 = vadd.f32 %v1248, %v1256
        %v1258 = vadd.f32 %v1249, %v1256
        %v1259 = vmul.f32 %v1257, 0.5
        %v1260 = vmul.f32 %v1258, 0.5
        %v1261 = vmul.f32 %v1257, 0.70710677
        %v1262 = vmul.f32 %v1258, 0.70710677
        %v1263 = verf.f32.pop %v1261
        %v1264 = verf.f32.pop %v1262
        %v1265 = vadd.f32 %v1263, 1.0
        %v1266 = vadd.f32 %v1264, 1.0
        %v1267 = vmul.f32 %v1259, %v1265
        %v1268 = vmul.f32 %v1260, %v1266
        %v1269 = vlaneseq
        %v1270 = vshrl.u32 %v1269, 7
        %v1271 = vsub.s32 0, %v1270
        %v1272 = vrot.slane %v302, %v1271
        %1274 = vbcast.lane.b32.xlu0 %v1272, 256
        %v1275 = vpop.permute.xlu0 %1274
        %v1276 = vlaneseq
        %v1277 = vshrl.u32 %v1276, 7
        %v1278 = vsub.s32 0, %v1277
        %v1279 = vrot.slane %v1267, %v1278
        %v1280 = vlaneseq
        %v1281 = vshrl.u32 %v1280, 7
        %v1282 = vsub.s32 0, %v1281
        %v1283 = vrot.slane %v1268, %v1282
        %v1284 = vmul.f32 %v1279, %v1275
        %v1285 = vmul.f32 %v1283, %v1275
        %v1286 = vadd.f32 %v1284, 0.0
        %v1287 = vadd.f32 %v1285, 0.0
        %v1288 = vlaneseq
        %v1289 = vshrl.u32 %v1288, 7
        %v1290 = vsub.s32 1, %v1289
        %v1291 = vrot.slane %v302, %v1290
        %1293 = vbcast.lane.b32.xlu0 %v1291, 256
        %v1294 = vpop.permute.xlu0 %1293
        %v1295 = vlaneseq
        %v1296 = vshrl.u32 %v1295, 7
        %v1297 = vsub.s32 1, %v1296
        %v1298 = vrot.slane %v1267, %v1297
        %v1299 = vlaneseq
        %v1300 = vshrl.u32 %v1299, 7
        %v1301 = vsub.s32 1, %v1300
        %v1302 = vrot.slane %v1268, %v1301
        %v1303 = vmul.f32 %v1298, %v1294
        %v1304 = vmul.f32 %v1302, %v1294
        %v1305 = vadd.f32 %v1286, %v1303
        %v1306 = vadd.f32 %v1287, %v1304
        %v1307 = vlaneseq
        %v1308 = vshrl.u32 %v1307, 7
        %v1309 = vsub.s32 2, %v1308
        %v1310 = vrot.slane %v302, %v1309
        %1312 = vbcast.lane.b32.xlu0 %v1310, 256
        %v1313 = vpop.permute.xlu0 %1312
        %v1314 = vlaneseq
        %v1315 = vshrl.u32 %v1314, 7
        %v1316 = vsub.s32 2, %v1315
        %v1317 = vrot.slane %v1267, %v1316
        %v1318 = vlaneseq
        %v1319 = vshrl.u32 %v1318, 7
        %v1320 = vsub.s32 2, %v1319
        %v1321 = vrot.slane %v1268, %v1320
        %v1322 = vmul.f32 %v1317, %v1313
        %v1323 = vmul.f32 %v1321, %v1313
        %v1324 = vadd.f32 %v1305, %v1322
        %v1325 = vadd.f32 %v1306, %v1323
        %v1326 = vlaneseq
        %v1327 = vshrl.u32 %v1326, 7
        %v1328 = vsub.s32 3, %v1327
        %v1329 = vrot.slane %v302, %v1328
        %1331 = vbcast.lane.b32.xlu0 %v1329, 256
        %v1332 = vpop.permute.xlu0 %1331
        %v1333 = vlaneseq
        %v1334 = vshrl.u32 %v1333, 7
        %v1335 = vsub.s32 3, %v1334
        %v1336 = vrot.slane %v1267, %v1335
        %v1337 = vlaneseq
        %v1338 = vshrl.u32 %v1337, 7
        %v1339 = vsub.s32 3, %v1338
        %v1340 = vrot.slane %v1268, %v1339
        %v1341 = vmul.f32 %v1336, %v1332
        %v1342 = vmul.f32 %v1340, %v1332
        %v1343 = vadd.f32 %v1324, %v1341
        %v1344 = vadd.f32 %v1325, %v1342
        %v1345 = vlaneseq
        %v1346 = vshrl.u32 %v1345, 7
        %v1347 = vsub.s32 4, %v1346
        %v1348 = vrot.slane %v302, %v1347
        %1350 = vbcast.lane.b32.xlu0 %v1348, 256
        %v1351 = vpop.permute.xlu0 %1350
        %v1352 = vlaneseq
        %v1353 = vshrl.u32 %v1352, 7
        %v1354 = vsub.s32 4, %v1353
        %v1355 = vrot.slane %v1267, %v1354
        %v1356 = vlaneseq
        %v1357 = vshrl.u32 %v1356, 7
        %v1358 = vsub.s32 4, %v1357
        %v1359 = vrot.slane %v1268, %v1358
        %v1360 = vmul.f32 %v1355, %v1351
        %v1361 = vmul.f32 %v1359, %v1351
        %v1362 = vadd.f32 %v1343, %v1360
        %v1363 = vadd.f32 %v1344, %v1361
        %v1364 = vlaneseq
        %v1365 = vshrl.u32 %v1364, 7
        %v1366 = vsub.s32 5, %v1365
        %v1367 = vrot.slane %v302, %v1366
        %1369 = vbcast.lane.b32.xlu0 %v1367, 256
        %v1370 = vpop.permute.xlu0 %1369
        %v1371 = vlaneseq
        %v1372 = vshrl.u32 %v1371, 7
        %v1373 = vsub.s32 5, %v1372
        %v1374 = vrot.slane %v1267, %v1373
        %v1375 = vlaneseq
        %v1376 = vshrl.u32 %v1375, 7
        %v1377 = vsub.s32 5, %v1376
        %v1378 = vrot.slane %v1268, %v1377
        %v1379 = vmul.f32 %v1374, %v1370
        %v1380 = vmul.f32 %v1378, %v1370
        %v1381 = vadd.f32 %v1362, %v1379
        %v1382 = vadd.f32 %v1363, %v1380
        %v1383 = vlaneseq
        %v1384 = vshrl.u32 %v1383, 7
        %v1385 = vsub.s32 6, %v1384
        %v1386 = vrot.slane %v302, %v1385
        %1388 = vbcast.lane.b32.xlu0 %v1386, 256
        %v1389 = vpop.permute.xlu0 %1388
        %v1390 = vlaneseq
        %v1391 = vshrl.u32 %v1390, 7
        %v1392 = vsub.s32 6, %v1391
        %v1393 = vrot.slane %v1267, %v1392
        %v1394 = vlaneseq
        %v1395 = vshrl.u32 %v1394, 7
        %v1396 = vsub.s32 6, %v1395
        %v1397 = vrot.slane %v1268, %v1396
        %v1398 = vmul.f32 %v1393, %v1389
        %v1399 = vmul.f32 %v1397, %v1389
        %v1400 = vadd.f32 %v1381, %v1398
        %v1401 = vadd.f32 %v1382, %v1399
        %v1402 = vlaneseq
        %v1403 = vshrl.u32 %v1402, 7
        %v1404 = vsub.s32 7, %v1403
        %v1405 = vrot.slane %v302, %v1404
        %1407 = vbcast.lane.b32.xlu0 %v1405, 256
        %v1408 = vpop.permute.xlu0 %1407
        %v1409 = vlaneseq
        %v1410 = vshrl.u32 %v1409, 7
        %v1411 = vsub.s32 7, %v1410
        %v1412 = vrot.slane %v1267, %v1411
        %v1413 = vlaneseq
        %v1414 = vshrl.u32 %v1413, 7
        %v1415 = vsub.s32 7, %v1414
        %v1416 = vrot.slane %v1268, %v1415
        %v1417 = vmul.f32 %v1412, %v1408
        %v1418 = vmul.f32 %v1416, %v1408
        %v1419 = vadd.f32 %v1400, %v1417
        %v1420 = vadd.f32 %v1401, %v1418
        %v1421 = vlaneseq
        %v1422 = vshrl.u32 %v1421, 7
        %v1423 = vsub.s32 0, %v1422
        %v1424 = vrot.slane %v303, %v1423
        %1426 = vbcast.lane.b32.xlu0 %v1424, 256
        %v1427 = vpop.permute.xlu0 %1426
        %v1428 = vadd.f32 %v1419, %v1427
        %v1429 = vadd.f32 %v1420, %v1427
        %v1430 = vmul.f32 %v1428, 0.5
        %v1431 = vmul.f32 %v1429, 0.5
        %v1432 = vmul.f32 %v1428, 0.70710677
        %v1433 = vmul.f32 %v1429, 0.70710677
        %v1434 = verf.f32.pop %v1432
        %v1435 = verf.f32.pop %v1433
        %v1436 = vadd.f32 %v1434, 1.0
        %v1437 = vadd.f32 %v1435, 1.0
        %v1438 = vmul.f32 %v1430, %v1436
        %v1439 = vmul.f32 %v1431, %v1437
        %v1440 = vlaneseq
        %v1441 = vshrl.u32 %v1440, 7
        %v1442 = vsub.s32 0, %v1441
        %v1443 = vrot.slane %v304, %v1442
        %1445 = vbcast.lane.b32.xlu0 %v1443, 256
        %v1446 = vpop.permute.xlu0 %1445
        %v1447 = vlaneseq
        %v1448 = vshrl.u32 %v1447, 7
        %v1449 = vsub.s32 0, %v1448
        %v1450 = vrot.slane %v1438, %v1449
        %v1451 = vlaneseq
        %v1452 = vshrl.u32 %v1451, 7
        %v1453 = vsub.s32 0, %v1452
        %v1454 = vrot.slane %v1439, %v1453
        %v1455 = vmul.f32 %v1450, %v1446
        %v1456 = vmul.f32 %v1454, %v1446
        %v1457 = vadd.f32 %v1455, 0.0
        %v1458 = vadd.f32 %v1456, 0.0
        %v1459 = vlaneseq
        %v1460 = vshrl.u32 %v1459, 7
        %v1461 = vsub.s32 1, %v1460
        %v1462 = vrot.slane %v304, %v1461
        %1464 = vbcast.lane.b32.xlu0 %v1462, 256
        %v1465 = vpop.permute.xlu0 %1464
        %v1466 = vlaneseq
        %v1467 = vshrl.u32 %v1466, 7
        %v1468 = vsub.s32 1, %v1467
        %v1469 = vrot.slane %v1438, %v1468
        %v1470 = vlaneseq
        %v1471 = vshrl.u32 %v1470, 7
        %v1472 = vsub.s32 1, %v1471
        %v1473 = vrot.slane %v1439, %v1472
        %v1474 = vmul.f32 %v1469, %v1465
        %v1475 = vmul.f32 %v1473, %v1465
        %v1476 = vadd.f32 %v1457, %v1474
        %v1477 = vadd.f32 %v1458, %v1475
        %v1478 = vlaneseq
        %v1479 = vshrl.u32 %v1478, 7
        %v1480 = vsub.s32 2, %v1479
        %v1481 = vrot.slane %v304, %v1480
        %1483 = vbcast.lane.b32.xlu0 %v1481, 256
        %v1484 = vpop.permute.xlu0 %1483
        %v1485 = vlaneseq
        %v1486 = vshrl.u32 %v1485, 7
        %v1487 = vsub.s32 2, %v1486
        %v1488 = vrot.slane %v1438, %v1487
        %v1489 = vlaneseq
        %v1490 = vshrl.u32 %v1489, 7
        %v1491 = vsub.s32 2, %v1490
        %v1492 = vrot.slane %v1439, %v1491
        %v1493 = vmul.f32 %v1488, %v1484
        %v1494 = vmul.f32 %v1492, %v1484
        %v1495 = vadd.f32 %v1476, %v1493
        %v1496 = vadd.f32 %v1477, %v1494
        %v1497 = vlaneseq
        %v1498 = vshrl.u32 %v1497, 7
        %v1499 = vsub.s32 3, %v1498
        %v1500 = vrot.slane %v304, %v1499
        %1502 = vbcast.lane.b32.xlu0 %v1500, 256
        %v1503 = vpop.permute.xlu0 %1502
        %v1504 = vlaneseq
        %v1505 = vshrl.u32 %v1504, 7
        %v1506 = vsub.s32 3, %v1505
        %v1507 = vrot.slane %v1438, %v1506
        %v1508 = vlaneseq
        %v1509 = vshrl.u32 %v1508, 7
        %v1510 = vsub.s32 3, %v1509
        %v1511 = vrot.slane %v1439, %v1510
        %v1512 = vmul.f32 %v1507, %v1503
        %v1513 = vmul.f32 %v1511, %v1503
        %v1514 = vadd.f32 %v1495, %v1512
        %v1515 = vadd.f32 %v1496, %v1513
        %v1516 = vlaneseq
        %v1517 = vshrl.u32 %v1516, 7
        %v1518 = vsub.s32 4, %v1517
        %v1519 = vrot.slane %v304, %v1518
        %1521 = vbcast.lane.b32.xlu0 %v1519, 256
        %v1522 = vpop.permute.xlu0 %1521
        %v1523 = vlaneseq
        %v1524 = vshrl.u32 %v1523, 7
        %v1525 = vsub.s32 4, %v1524
        %v1526 = vrot.slane %v1438, %v1525
        %v1527 = vlaneseq
        %v1528 = vshrl.u32 %v1527, 7
        %v1529 = vsub.s32 4, %v1528
        %v1530 = vrot.slane %v1439, %v1529
        %v1531 = vmul.f32 %v1526, %v1522
        %v1532 = vmul.f32 %v1530, %v1522
        %v1533 = vadd.f32 %v1514, %v1531
        %v1534 = vadd.f32 %v1515, %v1532
        %v1535 = vlaneseq
        %v1536 = vshrl.u32 %v1535, 7
        %v1537 = vsub.s32 5, %v1536
        %v1538 = vrot.slane %v304, %v1537
        %1540 = vbcast.lane.b32.xlu0 %v1538, 256
        %v1541 = vpop.permute.xlu0 %1540
        %v1542 = vlaneseq
        %v1543 = vshrl.u32 %v1542, 7
        %v1544 = vsub.s32 5, %v1543
        %v1545 = vrot.slane %v1438, %v1544
        %v1546 = vlaneseq
        %v1547 = vshrl.u32 %v1546, 7
        %v1548 = vsub.s32 5, %v1547
        %v1549 = vrot.slane %v1439, %v1548
        %v1550 = vmul.f32 %v1545, %v1541
        %v1551 = vmul.f32 %v1549, %v1541
        %v1552 = vadd.f32 %v1533, %v1550
        %v1553 = vadd.f32 %v1534, %v1551
        %v1554 = vlaneseq
        %v1555 = vshrl.u32 %v1554, 7
        %v1556 = vsub.s32 6, %v1555
        %v1557 = vrot.slane %v304, %v1556
        %1559 = vbcast.lane.b32.xlu0 %v1557, 256
        %v1560 = vpop.permute.xlu0 %1559
        %v1561 = vlaneseq
        %v1562 = vshrl.u32 %v1561, 7
        %v1563 = vsub.s32 6, %v1562
        %v1564 = vrot.slane %v1438, %v1563
        %v1565 = vlaneseq
        %v1566 = vshrl.u32 %v1565, 7
        %v1567 = vsub.s32 6, %v1566
        %v1568 = vrot.slane %v1439, %v1567
        %v1569 = vmul.f32 %v1564, %v1560
        %v1570 = vmul.f32 %v1568, %v1560
        %v1571 = vadd.f32 %v1552, %v1569
        %v1572 = vadd.f32 %v1553, %v1570
        %v1573 = vlaneseq
        %v1574 = vshrl.u32 %v1573, 7
        %v1575 = vsub.s32 7, %v1574
        %v1576 = vrot.slane %v304, %v1575
        %1578 = vbcast.lane.b32.xlu0 %v1576, 256
        %v1579 = vpop.permute.xlu0 %1578
        %v1580 = vlaneseq
        %v1581 = vshrl.u32 %v1580, 7
        %v1582 = vsub.s32 7, %v1581
        %v1583 = vrot.slane %v1438, %v1582
        %v1584 = vlaneseq
        %v1585 = vshrl.u32 %v1584, 7
        %v1586 = vsub.s32 7, %v1585
        %v1587 = vrot.slane %v1439, %v1586
        %v1588 = vmul.f32 %v1583, %v1579
        %v1589 = vmul.f32 %v1587, %v1579
        %v1590 = vadd.f32 %v1571, %v1588
        %v1591 = vadd.f32 %v1572, %v1589
        %v1592 = vlaneseq
        %v1593 = vshrl.u32 %v1592, 7
        %v1594 = vsub.s32 0, %v1593
        %v1595 = vrot.slane %v305, %v1594
        %1597 = vbcast.lane.b32.xlu0 %v1595, 256
        %v1598 = vpop.permute.xlu0 %1597
        %v1599 = vadd.f32 %v1590, %v1598
        %v1600 = vadd.f32 %v1591, %v1598
        %v1601 = vadd.f32 %v915, %v1599
        %v1602 = vadd.f32 %v916, %v1600
        %1603 = vst [vmem:[%s247] sm:$0xff] %v1601
        %1604 = vst [vmem:[%s247 + $0x8] sm:$0xff] %v1602
        %s1605 = sand.u32 %s130, 1
        %s1606 = scalar_lea.sflag [#allocation3], %s1605
        %s1607 = sand.u32 %s130, 1
        %s1608 = smul.addr %s1607, 16
        %s1609 = scalar_lea.vmem [#allocation2], %s1608
        %s1610 = sand.u32 %s156, 1
        %s1611 = scalar_lea.sflag [#allocation5], %s1610
        %s1612 = sand.u32 %s156, 1
        %s1613 = scalar_lea.vmem [#allocation4], %s1612
        // Predicated region
        $region37: #{tpu_custom_call.1} parent=35 // pred_check
          %p1614 = pneg %p140
        $region38: #{tpu_custom_call.1} parent=35 // pred_check_branch
          %1616 = sbr.rel (%p1614) target = $region40
        $region39: #{tpu_custom_call.1} parent=35 // pred_region
          %s1618 = ssub.s32 256, 256
          %1619 = vsyncadd %s1606, %s1618
          %s1620 = smul.addr %s23, 2
          %s1621 = smul.addr %s1620, 128
          %s1622 = scalar_lea.hbm %s4, %s1621
          %s1624 = sshll.u32 %s1609, 4
          %s1625 = int_to_ptr.vmem [resolvable:$true] %s1624
          %1627 = dma.vmem_to_hbm [thread:$0]  %s1625, 256, %s1622, %s1606
        $region40: #{tpu_custom_call.1} parent=35 // pred_fallthru
          _
        // Predicated region
        $region41: #{tpu_custom_call.1} parent=35 // pred_check
          %p1628 = pneg %p166
        $region42: #{tpu_custom_call.1} parent=35 // pred_check_branch
          %1630 = sbr.rel (%p1628) target = $region44
        $region43: #{tpu_custom_call.1} parent=35 // pred_region
          %s1632 = ssub.s32 16, 16
          %1633 = vsyncadd %s1611, %s1632
          %s1634 = smul.addr %s23, 16
          %s1635 = scalar_lea.hbm %s5, %s1634
          %s1637 = sshll.u32 %s1613, 4
          %s1638 = int_to_ptr.vmem [resolvable:$true] %s1637
          %1640 = dma.vmem_to_hbm [thread:$0]  %s1638, 16, %s1635, %s1611
        $region44: #{tpu_custom_call.1} parent=35 // pred_fallthru
          _
      $region36: #{tpu_custom_call.1} parent=5 // pred_fallthru
        _
      %p1641 = scmp.le.s32.totalorder 2, %s18
      // Predicated region
      $region45: #{tpu_custom_call.1} parent=5 // pred_check
        %p1642 = pneg %p1641
      $region46: #{tpu_custom_call.1} parent=5 // pred_check_branch
        %1644 = sbr.rel (%p1642) target = $region48
      $region47: #{tpu_custom_call.1} parent=5 // pred_region
        %s1645 = ssub.s32 %s18, 2
        // Predicated region
        $region49: #{tpu_custom_call.1} parent=47 // pred_check
          %p1646 = pneg %p146
        $region50: #{tpu_custom_call.1} parent=47 // pred_check_branch
          %1648 = sbr.rel (%p1646) target = $region52
        $region51: #{tpu_custom_call.1} parent=47 // pred_region
          %s1649 = sand.u32 %s131, 1
          %s1650 = scalar_lea.sflag [#allocation3], %s1649
          %s1651 = sand.u32 %s131, 1
          %s1652 = smul.addr %s1651, 16
          %s1653 = scalar_lea.vmem [#allocation2], %s1652
          %1654 = dma.done %s1650, 256
        $region52: #{tpu_custom_call.1} parent=47 // pred_fallthru
          _
        // Predicated region
        $region53: #{tpu_custom_call.1} parent=47 // pred_check
          %p1655 = pneg %p172
        $region54: #{tpu_custom_call.1} parent=47 // pred_check_branch
          %1657 = sbr.rel (%p1655) target = $region56
        $region55: #{tpu_custom_call.1} parent=47 // pred_region
          %s1658 = sand.u32 %s157, 1
          %s1659 = scalar_lea.sflag [#allocation5], %s1658
          %s1660 = sand.u32 %s157, 1
          %s1661 = scalar_lea.vmem [#allocation4], %s1660
          %1662 = dma.done %s1659, 16
        $region56: #{tpu_custom_call.1} parent=47 // pred_fallthru
          _
      $region48: #{tpu_custom_call.1} parent=5 // pred_fallthru
        _
    $region6: #{tpu_custom_call.1} parent=1 // loop_footer
      %s22 = sadd.s32 1, %s18
    $region7: #{tpu_custom_call.1} parent=1 // loop_footer_branch
      %17 = sbr.rel target = $region3
    $region8: #{tpu_custom_call.1} parent=1 // loop_exit
      _
    %1663 = vsyncpa [#allocation3], 1
    %s1664 = scalar_lea.sflag [#allocation3], 1
    %1665 = vsyncpa %s1664, 1
    %1666 = vsyncpa [#allocation5], 1
    %s1667 = scalar_lea.sflag [#allocation5], 1
    %1668 = vsyncpa %s1667, 1

</llo_original>
